<compile_context>
chip_gen: v7x
topology: tpu7x:2x2x1
jax: 0.10.0
libtpu: 0.0.40
codegen_flags: <defaults>
</compile_context>

<pallas_src>
from functools import partial

import jax
import jax.numpy as jnp
from jax import lax
from jax.experimental import pallas as pl
from jax.experimental.pallas import tpu as pltpu


# ----------------------------------------------------------------------------
# Fused Bottleneck kernel: one (batch, row-tile) step
# ----------------------------------------------------------------------------
def _bottleneck_kernel(x_ref, x_hbm, w1_ref, b1_ref, w2_ref, b2_ref,
                       w3_ref, b3_ref, o_ref, xhalo, y1pad, acc2, sem):
    """
    x_ref  : (1, TH, W, Cin)     f32   auto-pipelined row strip (also residual)
    x_hbm  : (N, H, W, Cin)      f32   raw HBM ref, only used for 2 halo rows
    w*_ref : folded conv weights bf16  (VMEM resident, constant index maps)
    b*_ref : folded BN biases    f32
    o_ref  : (1, TH, W, Cout)    f32
    xhalo  : (2, W, Cin)         f32   scratch: halo rows of x
    y1pad  : (TH+2, W+2, width)  f32   scratch: conv1 output with zero padding
    acc2   : (TH*W, width)       f32   scratch: conv2 accumulator
    sem    : DMA semaphores (2,)
    """
    n = pl.program_id(0)
    r = pl.program_id(1)
    n_rt = pl.num_programs(1)

    TH, W, Cout = o_ref.shape[1], o_ref.shape[2], o_ref.shape[3]
    Cin = x_ref.shape[3]
    width = y1pad.shape[2]
    H = x_hbm.shape[1]
    r0 = r * TH

    # ---- kick off the two tiny halo-row DMAs (sources clamped at the image
    #      border; those rows are overwritten with zeros below -> pad=1). -----
    top_src = jnp.maximum(r0 - 1, 0)
    bot_src = jnp.minimum(r0 + TH, H - 1)
    top_cp = pltpu.make_async_copy(x_hbm.at[n, pl.ds(top_src, 1)],
                                   xhalo.at[pl.ds(0, 1)], sem.at[0])
    bot_cp = pltpu.make_async_copy(x_hbm.at[n, pl.ds(bot_src, 1)],
                                   xhalo.at[pl.ds(1, 1)], sem.at[1])
    top_cp.start()
    bot_cp.start()

    # ---- conv1 (1x1) + BN + ReLU on the core rows (bf16 matmul, f32 epilogue)
    y1pad[...] = jnp.zeros(y1pad.shape, y1pad.dtype)   # zero pad cols / stale data
    xc = x_ref[...].reshape(TH * W, Cin)               # f32, reused for residual
    y1c = jnp.dot(xc.astype(jnp.bfloat16), w1_ref[...],
                  preferred_element_type=jnp.float32)
    y1c = jnp.maximum(y1c + b1_ref[...], 0.0)
    y1pad[1:TH + 1, 1:W + 1, :] = y1c.reshape(TH, W, width)

    # ---- conv1 on the two halo rows (overlapped with the core matmul above) -
    top_cp.wait()
    bot_cp.wait()
    xh = xhalo[...].reshape(2 * W, Cin)
    y1h = jnp.dot(xh.astype(jnp.bfloat16), w1_ref[...],
                  preferred_element_type=jnp.float32)
    y1h = jnp.maximum(y1h + b1_ref[...], 0.0).reshape(2, W, width)
    y1pad[0:1, 1:W + 1, :] = y1h[0:1]
    y1pad[TH + 1:TH + 2, 1:W + 1, :] = y1h[1:2]

    # conv2 zero-pads y1 at the image borders -> zero the halo rows there.
    @pl.when(r == 0)
    def _():
        y1pad[0:1, :, :] = jnp.zeros((1, W + 2, width), y1pad.dtype)

    @pl.when(r == n_rt - 1)
    def _():
        y1pad[TH + 1:TH + 2, :, :] = jnp.zeros((1, W + 2, width), y1pad.dtype)

    # ---- conv2 (3x3, pad=1) + BN + ReLU: 9 shifted channel matmuls ----------
    acc2[...] = jnp.zeros(acc2.shape, acc2.dtype)
    for kh in range(3):
        for kw in range(3):
            patch = y1pad[kh:kh + TH, kw:kw + W, :].reshape(TH * W, width)
            acc2[...] += jnp.dot(patch.astype(jnp.bfloat16), w2_ref[kh, kw],
                                 preferred_element_type=jnp.float32)
    y2 = jnp.maximum(acc2[...] + b2_ref[...], 0.0)

    # ---- conv3 (1x1) + BN + residual + ReLU (f32 epilogue) -------------------
    y3 = jnp.dot(y2.astype(jnp.bfloat16), w3_ref[...],
                 preferred_element_type=jnp.float32)
    out = jnp.maximum(y3 + b3_ref[...] + xc, 0.0)       # xc == identity (Cin==Cout)
    o_ref[...] = out.reshape(1, TH, W, Cout).astype(o_ref.dtype)


# ----------------------------------------------------------------------------
# Parameter setup (deterministic, synthetic) + BN folding
# ----------------------------------------------------------------------------
def init_bottleneck_params(key, in_planes, planes, base_width=64, groups=1):
    expansion = 4
    width = int(planes * (base_width / 64.0)) * groups
    out_planes = planes * expansion
    ks = jax.random.split(key, 15)

    def bn(k0, k1, k2, k3, c):
        gamma = 1.0 + 0.1 * jax.random.normal(k0, (c,), jnp.float32)
        beta = 0.1 * jax.random.normal(k1, (c,), jnp.float32)
        mean = 0.1 * jax.random.normal(k2, (c,), jnp.float32)
        var = jax.random.uniform(k3, (c,), jnp.float32, 0.5, 1.5)
        return gamma, beta, mean, var

    return {
        "w1": 0.1 * jax.random.normal(ks[0], (1, 1, in_planes, width), jnp.float32),
        "bn1": bn(ks[1], ks[2], ks[3], ks[4], width),
        "w2": 0.1 * jax.random.normal(ks[5], (3, 3, width, width), jnp.float32),
        "bn2": bn(ks[6], ks[7], ks[8], ks[9], width),
        "w3": 0.1 * jax.random.normal(ks[10], (1, 1, width, out_planes), jnp.float32),
        "bn3": bn(ks[11], ks[12], ks[13], ks[14], out_planes),
    }


def _fold_bn(w_hwio, bn, eps=1e-5):
    gamma, beta, mean, var = bn
    scale = gamma / jnp.sqrt(var + eps)
    return w_hwio * scale, beta - mean * scale     # scale along output channels


# ----------------------------------------------------------------------------
# Wrapper: the Bottleneck forward
# ----------------------------------------------------------------------------
def bottleneck_forward(x_nchw, params, *, row_tile=8):
    # NCHW -> NHWC (channels on the lane axis); back to NCHW at the end.
    x = jnp.transpose(x_nchw, (0, 2, 3, 1)).astype(jnp.float32)
    N, H, W, Cin = x.shape
    width = params["w1"].shape[-1]
    Cout = params["w3"].shape[-1]
    assert Cin == Cout, "Downsample=None path requires InPlanes == Planes * 4"
    # TODO(synk): Downsample branch / Stride>1 / Groups>1 / Dilation>1 not
    # implemented (module instance under test uses the identity shortcut).

    # Largest row tile <= row_tile that divides H.
    TH = min(row_tile, H)
    while H % TH:
        TH -= 1
    RT = H // TH

    w1f, b1 = _fold_bn(params["w1"], params["bn1"])
    w2f, b2 = _fold_bn(params["w2"], params["bn2"])
    w3f, b3 = _fold_bn(params["w3"], params["bn3"])
    # bf16 matmul operands (MXU fast path); biases stay f32 for the epilogues.
    w1b = w1f.reshape(Cin, width).astype(jnp.bfloat16)
    w2b = w2f.astype(jnp.bfloat16)
    w3b = w3f.reshape(width, Cout).astype(jnp.bfloat16)
    b1 = b1.reshape(1, width)
    b2 = b2.reshape(1, width)
    b3 = b3.reshape(1, Cout)

    const2 = lambda n, r: (0, 0)
    out = pl.pallas_call(
        _bottleneck_kernel,
        out_shape=jax.ShapeDtypeStruct((N, H, W, Cout), jnp.float32),
        grid=(N, RT),
        in_specs=[
            pl.BlockSpec((1, TH, W, Cin), lambda n, r: (n, r, 0, 0)),
            pl.BlockSpec(memory_space=pl.ANY),            # raw HBM ref (halo DMA)
            pl.BlockSpec((Cin, width), const2),           # w1 (VMEM resident)
            pl.BlockSpec((1, width), const2),             # b1
            pl.BlockSpec((3, 3, width, width), lambda n, r: (0, 0, 0, 0)),  # w2
            pl.BlockSpec((1, width), const2),             # b2
            pl.BlockSpec((width, Cout), const2),          # w3
            pl.BlockSpec((1, Cout), const2),              # b3
        ],
        out_specs=pl.BlockSpec((1, TH, W, Cout), lambda n, r: (n, r, 0, 0)),
        scratch_shapes=[
            pltpu.VMEM((2, W, Cin), jnp.float32),             # halo rows of x
            pltpu.VMEM((TH + 2, W + 2, width), jnp.float32),  # padded conv1 out
            pltpu.VMEM((TH * W, width), jnp.float32),         # conv2 accumulator
            pltpu.SemaphoreType.DMA((2,)),
        ],
        compiler_params=pltpu.CompilerParams(
            dimension_semantics=("parallel", "parallel"),
            vmem_limit_bytes=32 * 1024 * 1024,
        ),
    )(x, x, w1b, b1, w2b, b2, w3b, b3)

    return jnp.transpose(out, (0, 3, 1, 2))


# ----------------------------------------------------------------------------
# Pure-JAX reference (mirrors the kernel's bf16 matmul operands, f32 epilogue)
# ----------------------------------------------------------------------------
def bottleneck_reference(x_nchw, params):
    x = jnp.transpose(x_nchw, (0, 2, 3, 1)).astype(jnp.float32)

    def conv(a, w, pad):
        return lax.conv_general_dilated(
            a.astype(jnp.bfloat16), w.astype(jnp.bfloat16), (1, 1), pad,
            dimension_numbers=("NHWC", "HWIO", "NHWC"),
            preferred_element_type=jnp.float32)

    w1f, b1 = _fold_bn(params["w1"], params["bn1"])
    w2f, b2 = _fold_bn(params["w2"], params["bn2"])
    w3f, b3 = _fold_bn(params["w3"], params["bn3"])

    y = jnp.maximum(conv(x, w1f, "VALID") + b1, 0.0)
    y = jnp.maximum(conv(y, w2f, ((1, 1), (1, 1))) + b2, 0.0)
    y = conv(y, w3f, "VALID") + b3
    y = jnp.maximum(y + x, 0.0)
    return jnp.transpose(y, (0, 3, 1, 2))


# ----------------------------------------------------------------------------
if __name__ == "__main__":
    key = jax.random.PRNGKey(0)
    kx, kp = jax.random.split(key)

    # Bottleneck(InPlanes=16, Planes=4): width=4, out=16, identity shortcut.
    N, InPlanes, Planes, H, W = 2, 16, 4, 16, 16
    x = jax.random.normal(kx, (N, InPlanes, H, W), jnp.float32)
    params = init_bottleneck_params(kp, InPlanes, Planes)

    fwd = jax.jit(bottleneck_forward)
    out = jax.block_until_ready(fwd(x, params))

    ref = bottleneck_reference(x, params)
    assert out.shape == (N, Planes * 4, H, W)
    err = float(jnp.max(jnp.abs(out - ref)))
    assert jnp.allclose(out, ref, atol=2e-3, rtol=2e-3), f"max abs err {err}"

    print("KERNEL_OK")
</pallas_src>

<mosaic_0001>
module attributes {stable_mosaic.version = 11 : i64} {
  func.func @_bottleneck_kernel(%arg0: i32, %arg1: i32, %arg2: memref<1x8x16x16xf32, #tpu.memory_space<vmem>>, %arg3: memref<2x16x16x16xf32, #tpu.memory_space<any>>, %arg4: memref<16x4xbf16, #tpu.memory_space<vmem>>, %arg5: memref<1x4xf32, #tpu.memory_space<vmem>>, %arg6: memref<3x3x4x4xbf16, #tpu.memory_space<vmem>>, %arg7: memref<1x4xf32, #tpu.memory_space<vmem>>, %arg8: memref<4x16xbf16, #tpu.memory_space<vmem>>, %arg9: memref<1x16xf32, #tpu.memory_space<vmem>>, %arg10: memref<1x8x16x16xf32, #tpu.memory_space<vmem>>, %arg11: memref<2x16x16xf32, #tpu.memory_space<vmem>>, %arg12: memref<10x18x4xf32, #tpu.memory_space<vmem>>, %arg13: memref<128x4xf32, #tpu.memory_space<vmem>>, %arg14: memref<2x!tpu.dma_semaphore, #tpu.memory_space<semaphore_mem>>) attributes {dimension_semantics = [#tpu.dimension_semantics<parallel>, #tpu.dimension_semantics<parallel>], iteration_bounds = array<i64: 2, 2>, scalar_prefetch = 0 : i64, scratch_operands = 4 : i64, tpu.core_type = #tpu.core_type<tc>, window_params = [{transform_indices = @transform_0, window_bounds = array<i64: 1, 8, 16, 16>}, {}, {pipeline_mode = #tpu.pipeline_mode<synchronous>, transform_indices = @transform_2, window_bounds = array<i64: 16, 4>}, {pipeline_mode = #tpu.pipeline_mode<synchronous>, transform_indices = @transform_3, window_bounds = array<i64: 1, 4>}, {pipeline_mode = #tpu.pipeline_mode<synchronous>, transform_indices = @transform_4, window_bounds = array<i64: 3, 3, 4, 4>}, {pipeline_mode = #tpu.pipeline_mode<synchronous>, transform_indices = @transform_5, window_bounds = array<i64: 1, 4>}, {pipeline_mode = #tpu.pipeline_mode<synchronous>, transform_indices = @transform_6, window_bounds = array<i64: 4, 16>}, {pipeline_mode = #tpu.pipeline_mode<synchronous>, transform_indices = @transform_7, window_bounds = array<i64: 1, 16>}, {transform_indices = @transform_8, window_bounds = array<i64: 1, 8, 16, 16>}]} {
    %c8_i32 = arith.constant 8 : i32
    %0 = arith.muli %arg1, %c8_i32 : i32
    %c1_i32 = arith.constant 1 : i32
    %1 = arith.subi %0, %c1_i32 : i32
    %c0_i32 = arith.constant 0 : i32
    %2 = arith.maxsi %1, %c0_i32 : i32
    %c8_i32_0 = arith.constant 8 : i32
    %3 = arith.addi %0, %c8_i32_0 : i32
    %c15_i32 = arith.constant 15 : i32
    %4 = arith.minsi %3, %c15_i32 : i32
    %c0_i32_1 = arith.constant 0 : i32
    %c0_i32_2 = arith.constant 0 : i32
    %c0_i32_3 = arith.constant 0 : i32
    %5 = tpu.memref_slice %arg3[%arg0, %2, %c0_i32_2, %c0_i32_3] : memref<2x16x16x16xf32, #tpu.memory_space<any>> -> memref<1x1x16x16xf32, #tpu.memory_space<any>>
    %6 = tpu.memref_squeeze %5 : memref<1x1x16x16xf32, #tpu.memory_space<any>> -> memref<1x16x16xf32, #tpu.memory_space<any>>
    %c0_i32_4 = arith.constant 0 : i32
    %c0_i32_5 = arith.constant 0 : i32
    %c0_i32_6 = arith.constant 0 : i32
    %7 = tpu.memref_slice %arg11[%c0_i32_4, %c0_i32_5, %c0_i32_6] : memref<2x16x16xf32, #tpu.memory_space<vmem>> -> memref<1x16x16xf32, #tpu.memory_space<vmem>>
    %8 = tpu.memref_slice %arg14[%c0_i32_1] : memref<2x!tpu.dma_semaphore, #tpu.memory_space<semaphore_mem>> -> memref<1x!tpu.dma_semaphore, #tpu.memory_space<semaphore_mem>>
    %9 = tpu.memref_squeeze %8 : memref<1x!tpu.dma_semaphore, #tpu.memory_space<semaphore_mem>> -> memref<!tpu.dma_semaphore, #tpu.memory_space<semaphore_mem>>
    tpu.enqueue_dma source(%6 : memref<1x16x16xf32, #tpu.memory_space<any>>) target(%7 : memref<1x16x16xf32, #tpu.memory_space<vmem>>) target_semaphore(%9 : memref<!tpu.dma_semaphore, #tpu.memory_space<semaphore_mem>>)
    %c1_i32_7 = arith.constant 1 : i32
    %c0_i32_8 = arith.constant 0 : i32
    %c0_i32_9 = arith.constant 0 : i32
    %10 = tpu.memref_slice %arg3[%arg0, %4, %c0_i32_8, %c0_i32_9] : memref<2x16x16x16xf32, #tpu.memory_space<any>> -> memref<1x1x16x16xf32, #tpu.memory_space<any>>
    %11 = tpu.memref_squeeze %10 : memref<1x1x16x16xf32, #tpu.memory_space<any>> -> memref<1x16x16xf32, #tpu.memory_space<any>>
    %c1_i32_10 = arith.constant 1 : i32
    %c0_i32_11 = arith.constant 0 : i32
    %c0_i32_12 = arith.constant 0 : i32
    %12 = tpu.memref_slice %arg11[%c1_i32_10, %c0_i32_11, %c0_i32_12] : memref<2x16x16xf32, #tpu.memory_space<vmem>> -> memref<1x16x16xf32, #tpu.memory_space<vmem>>
    %13 = tpu.memref_slice %arg14[%c1_i32_7] : memref<2x!tpu.dma_semaphore, #tpu.memory_space<semaphore_mem>> -> memref<1x!tpu.dma_semaphore, #tpu.memory_space<semaphore_mem>>
    %14 = tpu.memref_squeeze %13 : memref<1x!tpu.dma_semaphore, #tpu.memory_space<semaphore_mem>> -> memref<!tpu.dma_semaphore, #tpu.memory_space<semaphore_mem>>
    tpu.enqueue_dma source(%11 : memref<1x16x16xf32, #tpu.memory_space<any>>) target(%12 : memref<1x16x16xf32, #tpu.memory_space<vmem>>) target_semaphore(%14 : memref<!tpu.dma_semaphore, #tpu.memory_space<semaphore_mem>>)
    %cst = arith.constant 0.000000e+00 : f32
    %15 = vector.broadcast %cst : f32 to vector<10x18x4xf32>
    %c0 = arith.constant 0 : index
    %c0_13 = arith.constant 0 : index
    %c0_14 = arith.constant 0 : index
    %16 = vector.load %arg12[%c0, %c0_13, %c0_14] : memref<10x18x4xf32, #tpu.memory_space<vmem>>, vector<10x18x4xf32>
    tpu.vector_store %arg12[%c0, %c0_13, %c0_14], %15 {strides = array<i32>} : memref<10x18x4xf32, #tpu.memory_space<vmem>>, vector<10x18x4xf32>,
    %c0_15 = arith.constant 0 : index
    %c0_16 = arith.constant 0 : index
    %c0_17 = arith.constant 0 : index
    %c0_18 = arith.constant 0 : index
    %17 = vector.load %arg2[%c0_15, %c0_16, %c0_17, %c0_18] : memref<1x8x16x16xf32, #tpu.memory_space<vmem>>, vector<1x8x16x16xf32>
    %18 = vector.shape_cast %17 : vector<1x8x16x16xf32> to vector<128x16xf32>
    %19 = arith.truncf %18 : vector<128x16xf32> to vector<128x16xbf16>
    %c0_19 = arith.constant 0 : index
    %c0_20 = arith.constant 0 : index
    %20 = vector.load %arg4[%c0_19, %c0_20] : memref<16x4xbf16, #tpu.memory_space<vmem>>, vector<16x4xbf16>
    %cst_21 = arith.constant dense<0.000000e+00> : vector<128x4xf32>
    %21 = tpu.matmul %19, %20, %cst_21 {dimension_numbers = #tpu.dot_dimension_numbers<[1], [0], [0], [1], [0, 0, 1, 1], [], []>} : vector<128x16xbf16>, vector<16x4xbf16>, vector<128x4xf32> -> vector<128x4xf32>
    %c0_22 = arith.constant 0 : index
    %c0_23 = arith.constant 0 : index
    %22 = vector.load %arg5[%c0_22, %c0_23] : memref<1x4xf32, #tpu.memory_space<vmem>>, vector<1x4xf32>
    %23 = vector.broadcast %22 : vector<1x4xf32> to vector<128x4xf32>
    %24 = arith.addf %21, %23 : vector<128x4xf32>
    %cst_24 = arith.constant 0.000000e+00 : f32
    %25 = vector.broadcast %cst_24 : f32 to vector<128x4xf32>
    %26 = arith.maximumf %24, %25 : vector<128x4xf32>
    %27 = vector.shape_cast %26 : vector<128x4xf32> to vector<8x16x4xf32>
    %c1 = arith.constant 1 : index
    %c1_25 = arith.constant 1 : index
    %c0_26 = arith.constant 0 : index
    %28 = vector.load %arg12[%c1, %c1_25, %c0_26] : memref<10x18x4xf32, #tpu.memory_space<vmem>>, vector<8x16x4xf32>
    tpu.vector_store %arg12[%c1, %c1_25, %c0_26], %27 {strides = array<i32>} : memref<10x18x4xf32, #tpu.memory_space<vmem>>, vector<8x16x4xf32>,
    %c0_i32_27 = arith.constant 0 : i32
    %c0_i32_28 = arith.constant 0 : i32
    %c0_i32_29 = arith.constant 0 : i32
    %29 = tpu.memref_slice %arg3[%arg0, %2, %c0_i32_28, %c0_i32_29] : memref<2x16x16x16xf32, #tpu.memory_space<any>> -> memref<1x1x16x16xf32, #tpu.memory_space<any>>
    %30 = tpu.memref_squeeze %29 : memref<1x1x16x16xf32, #tpu.memory_space<any>> -> memref<1x16x16xf32, #tpu.memory_space<any>>
    %c0_i32_30 = arith.constant 0 : i32
    %c0_i32_31 = arith.constant 0 : i32
    %c0_i32_32 = arith.constant 0 : i32
    %31 = tpu.memref_slice %arg11[%c0_i32_30, %c0_i32_31, %c0_i32_32] : memref<2x16x16xf32, #tpu.memory_space<vmem>> -> memref<1x16x16xf32, #tpu.memory_space<vmem>>
    %32 = tpu.memref_slice %arg14[%c0_i32_27] : memref<2x!tpu.dma_semaphore, #tpu.memory_space<semaphore_mem>> -> memref<1x!tpu.dma_semaphore, #tpu.memory_space<semaphore_mem>>
    %33 = tpu.memref_squeeze %32 : memref<1x!tpu.dma_semaphore, #tpu.memory_space<semaphore_mem>> -> memref<!tpu.dma_semaphore, #tpu.memory_space<semaphore_mem>>
    tpu.wait_dma2 semaphore(%33 : memref<!tpu.dma_semaphore, #tpu.memory_space<semaphore_mem>>) src(%30 : memref<1x16x16xf32, #tpu.memory_space<any>>) dst(%31 : memref<1x16x16xf32, #tpu.memory_space<vmem>>)
    %c1_i32_33 = arith.constant 1 : i32
    %c0_i32_34 = arith.constant 0 : i32
    %c0_i32_35 = arith.constant 0 : i32
    %34 = tpu.memref_slice %arg3[%arg0, %4, %c0_i32_34, %c0_i32_35] : memref<2x16x16x16xf32, #tpu.memory_space<any>> -> memref<1x1x16x16xf32, #tpu.memory_space<any>>
    %35 = tpu.memref_squeeze %34 : memref<1x1x16x16xf32, #tpu.memory_space<any>> -> memref<1x16x16xf32, #tpu.memory_space<any>>
    %c1_i32_36 = arith.constant 1 : i32
    %c0_i32_37 = arith.constant 0 : i32
    %c0_i32_38 = arith.constant 0 : i32
    %36 = tpu.memref_slice %arg11[%c1_i32_36, %c0_i32_37, %c0_i32_38] : memref<2x16x16xf32, #tpu.memory_space<vmem>> -> memref<1x16x16xf32, #tpu.memory_space<vmem>>
    %37 = tpu.memref_slice %arg14[%c1_i32_33] : memref<2x!tpu.dma_semaphore, #tpu.memory_space<semaphore_mem>> -> memref<1x!tpu.dma_semaphore, #tpu.memory_space<semaphore_mem>>
    %38 = tpu.memref_squeeze %37 : memref<1x!tpu.dma_semaphore, #tpu.memory_space<semaphore_mem>> -> memref<!tpu.dma_semaphore, #tpu.memory_space<semaphore_mem>>
    tpu.wait_dma2 semaphore(%38 : memref<!tpu.dma_semaphore, #tpu.memory_space<semaphore_mem>>) src(%35 : memref<1x16x16xf32, #tpu.memory_space<any>>) dst(%36 : memref<1x16x16xf32, #tpu.memory_space<vmem>>)
    %c0_39 = arith.constant 0 : index
    %c0_40 = arith.constant 0 : index
    %c0_41 = arith.constant 0 : index
    %39 = vector.load %arg11[%c0_39, %c0_40, %c0_41] : memref<2x16x16xf32, #tpu.memory_space<vmem>>, vector<2x16x16xf32>
    %40 = vector.shape_cast %39 : vector<2x16x16xf32> to vector<32x16xf32>
    %41 = arith.truncf %40 : vector<32x16xf32> to vector<32x16xbf16>
    %c0_42 = arith.constant 0 : index
    %c0_43 = arith.constant 0 : index
    %42 = vector.load %arg4[%c0_42, %c0_43] : memref<16x4xbf16, #tpu.memory_space<vmem>>, vector<16x4xbf16>
    %cst_44 = arith.constant dense<0.000000e+00> : vector<32x4xf32>
    %43 = tpu.matmul %41, %42, %cst_44 {dimension_numbers = #tpu.dot_dimension_numbers<[1], [0], [0], [1], [0, 0, 1, 1], [], []>} : vector<32x16xbf16>, vector<16x4xbf16>, vector<32x4xf32> -> vector<32x4xf32>
    %c0_45 = arith.constant 0 : index
    %c0_46 = arith.constant 0 : index
    %44 = vector.load %arg5[%c0_45, %c0_46] : memref<1x4xf32, #tpu.memory_space<vmem>>, vector<1x4xf32>
    %45 = vector.broadcast %44 : vector<1x4xf32> to vector<32x4xf32>
    %46 = arith.addf %43, %45 : vector<32x4xf32>
    %cst_47 = arith.constant 0.000000e+00 : f32
    %47 = vector.broadcast %cst_47 : f32 to vector<32x4xf32>
    %48 = arith.maximumf %46, %47 : vector<32x4xf32>
    %49 = vector.shape_cast %48 : vector<32x4xf32> to vector<2x16x4xf32>
    %50 = vector.extract_strided_slice %49 {offsets = [0, 0, 0], sizes = [1, 16, 4], strides = [1, 1, 1]} : vector<2x16x4xf32> to vector<1x16x4xf32>
    %c0_48 = arith.constant 0 : index
    %c1_49 = arith.constant 1 : index
    %c0_50 = arith.constant 0 : index
    %51 = vector.load %arg12[%c0_48, %c1_49, %c0_50] : memref<10x18x4xf32, #tpu.memory_space<vmem>>, vector<1x16x4xf32>
    tpu.vector_store %arg12[%c0_48, %c1_49, %c0_50], %50 {strides = array<i32>} : memref<10x18x4xf32, #tpu.memory_space<vmem>>, vector<1x16x4xf32>,
    %52 = vector.extract_strided_slice %49 {offsets = [1, 0, 0], sizes = [1, 16, 4], strides = [1, 1, 1]} : vector<2x16x4xf32> to vector<1x16x4xf32>
    %c9 = arith.constant 9 : index
    %c1_51 = arith.constant 1 : index
    %c0_52 = arith.constant 0 : index
    %53 = vector.load %arg12[%c9, %c1_51, %c0_52] : memref<10x18x4xf32, #tpu.memory_space<vmem>>, vector<1x16x4xf32>
    tpu.vector_store %arg12[%c9, %c1_51, %c0_52], %52 {strides = array<i32>} : memref<10x18x4xf32, #tpu.memory_space<vmem>>, vector<1x16x4xf32>,
    %c0_i32_53 = arith.constant 0 : i32
    %54 = arith.cmpi eq, %arg1, %c0_i32_53 : i32
    %55 = arith.extui %54 : i1 to i32
    %c0_i32_54 = arith.constant 0 : i32
    %56 = arith.cmpi ne, %55, %c0_i32_54 : i32
    scf.if %56 {
      %cst_182 = arith.constant 0.000000e+00 : f32
      %160 = vector.broadcast %cst_182 : f32 to vector<1x18x4xf32>
      %c0_183 = arith.constant 0 : index
      %c0_184 = arith.constant 0 : index
      %c0_185 = arith.constant 0 : index
      %161 = vector.load %arg12[%c0_183, %c0_184, %c0_185] : memref<10x18x4xf32, #tpu.memory_space<vmem>>, vector<1x18x4xf32>
      tpu.vector_store %arg12[%c0_183, %c0_184, %c0_185], %160 {strides = array<i32>} : memref<10x18x4xf32, #tpu.memory_space<vmem>>, vector<1x18x4xf32>,
    } else {
    }
    %c1_i32_55 = arith.constant 1 : i32
    %57 = arith.cmpi eq, %arg1, %c1_i32_55 : i32
    %58 = arith.extui %57 : i1 to i32
    %c0_i32_56 = arith.constant 0 : i32
    %59 = arith.cmpi ne, %58, %c0_i32_56 : i32
    scf.if %59 {
      %cst_182 = arith.constant 0.000000e+00 : f32
      %160 = vector.broadcast %cst_182 : f32 to vector<1x18x4xf32>
      %c9_183 = arith.constant 9 : index
      %c0_184 = arith.constant 0 : index
      %c0_185 = arith.constant 0 : index
      %161 = vector.load %arg12[%c9_183, %c0_184, %c0_185] : memref<10x18x4xf32, #tpu.memory_space<vmem>>, vector<1x18x4xf32>
      tpu.vector_store %arg12[%c9_183, %c0_184, %c0_185], %160 {strides = array<i32>} : memref<10x18x4xf32, #tpu.memory_space<vmem>>, vector<1x18x4xf32>,
    } else {
    }
    %cst_57 = arith.constant 0.000000e+00 : f32
    %60 = vector.broadcast %cst_57 : f32 to vector<128x4xf32>
    %c0_58 = arith.constant 0 : index
    %c0_59 = arith.constant 0 : index
    %61 = vector.load %arg13[%c0_58, %c0_59] : memref<128x4xf32, #tpu.memory_space<vmem>>, vector<128x4xf32>
    tpu.vector_store %arg13[%c0_58, %c0_59], %60 {strides = array<i32>} : memref<128x4xf32, #tpu.memory_space<vmem>>, vector<128x4xf32>,
    %c0_60 = arith.constant 0 : index
    %c0_61 = arith.constant 0 : index
    %c0_62 = arith.constant 0 : index
    %62 = vector.load %arg12[%c0_60, %c0_61, %c0_62] : memref<10x18x4xf32, #tpu.memory_space<vmem>>, vector<8x16x4xf32>
    %63 = vector.shape_cast %62 : vector<8x16x4xf32> to vector<128x4xf32>
    %c0_63 = arith.constant 0 : index
    %c0_64 = arith.constant 0 : index
    %64 = vector.load %arg13[%c0_63, %c0_64] : memref<128x4xf32, #tpu.memory_space<vmem>>, vector<128x4xf32>
    %65 = arith.truncf %63 : vector<128x4xf32> to vector<128x4xbf16>
    %c0_65 = arith.constant 0 : index
    %c0_66 = arith.constant 0 : index
    %c0_67 = arith.constant 0 : index
    %c0_68 = arith.constant 0 : index
    %66 = vector.load %arg6[%c0_65, %c0_66, %c0_67, %c0_68] : memref<3x3x4x4xbf16, #tpu.memory_space<vmem>>, vector<1x1x4x4xbf16>
    %67 = vector.shape_cast %66 : vector<1x1x4x4xbf16> to vector<4x4xbf16>
    %cst_69 = arith.constant dense<0.000000e+00> : vector<128x4xf32>
    %68 = tpu.matmul %65, %67, %cst_69 {dimension_numbers = #tpu.dot_dimension_numbers<[1], [0], [0], [1], [0, 0, 1, 1], [], []>} : vector<128x4xbf16>, vector<4x4xbf16>, vector<128x4xf32> -> vector<128x4xf32>
    %69 = arith.addf %64, %68 : vector<128x4xf32>
    %c0_70 = arith.constant 0 : index
    %c0_71 = arith.constant 0 : index
    %70 = vector.load %arg13[%c0_70, %c0_71] : memref<128x4xf32, #tpu.memory_space<vmem>>, vector<128x4xf32>
    tpu.vector_store %arg13[%c0_70, %c0_71], %69 {strides = array<i32>} : memref<128x4xf32, #tpu.memory_space<vmem>>, vector<128x4xf32>,
    %c0_72 = arith.constant 0 : index
    %c1_73 = arith.constant 1 : index
    %c0_74 = arith.constant 0 : index
    %71 = vector.load %arg12[%c0_72, %c1_73, %c0_74] : memref<10x18x4xf32, #tpu.memory_space<vmem>>, vector<8x16x4xf32>
    %72 = vector.shape_cast %71 : vector<8x16x4xf32> to vector<128x4xf32>
    %c0_75 = arith.constant 0 : index
    %c0_76 = arith.constant 0 : index
    %73 = vector.load %arg13[%c0_75, %c0_76] : memref<128x4xf32, #tpu.memory_space<vmem>>, vector<128x4xf32>
    %74 = arith.truncf %72 : vector<128x4xf32> to vector<128x4xbf16>
    %c0_77 = arith.constant 0 : index
    %c1_78 = arith.constant 1 : index
    %c0_79 = arith.constant 0 : index
    %c0_80 = arith.constant 0 : index
    %75 = vector.load %arg6[%c0_77, %c1_78, %c0_79, %c0_80] : memref<3x3x4x4xbf16, #tpu.memory_space<vmem>>, vector<1x1x4x4xbf16>
    %76 = vector.shape_cast %75 : vector<1x1x4x4xbf16> to vector<4x4xbf16>
    %cst_81 = arith.constant dense<0.000000e+00> : vector<128x4xf32>
    %77 = tpu.matmul %74, %76, %cst_81 {dimension_numbers = #tpu.dot_dimension_numbers<[1], [0], [0], [1], [0, 0, 1, 1], [], []>} : vector<128x4xbf16>, vector<4x4xbf16>, vector<128x4xf32> -> vector<128x4xf32>
    %78 = arith.addf %73, %77 : vector<128x4xf32>
    %c0_82 = arith.constant 0 : index
    %c0_83 = arith.constant 0 : index
    %79 = vector.load %arg13[%c0_82, %c0_83] : memref<128x4xf32, #tpu.memory_space<vmem>>, vector<128x4xf32>
    tpu.vector_store %arg13[%c0_82, %c0_83], %78 {strides = array<i32>} : memref<128x4xf32, #tpu.memory_space<vmem>>, vector<128x4xf32>,
    %c0_84 = arith.constant 0 : index
    %c2 = arith.constant 2 : index
    %c0_85 = arith.constant 0 : index
    %80 = vector.load %arg12[%c0_84, %c2, %c0_85] : memref<10x18x4xf32, #tpu.memory_space<vmem>>, vector<8x16x4xf32>
    %81 = vector.shape_cast %80 : vector<8x16x4xf32> to vector<128x4xf32>
    %c0_86 = arith.constant 0 : index
    %c0_87 = arith.constant 0 : index
    %82 = vector.load %arg13[%c0_86, %c0_87] : memref<128x4xf32, #tpu.memory_space<vmem>>, vector<128x4xf32>
    %83 = arith.truncf %81 : vector<128x4xf32> to vector<128x4xbf16>
    %c0_88 = arith.constant 0 : index
    %c2_89 = arith.constant 2 : index
    %c0_90 = arith.constant 0 : index
    %c0_91 = arith.constant 0 : index
    %84 = vector.load %arg6[%c0_88, %c2_89, %c0_90, %c0_91] : memref<3x3x4x4xbf16, #tpu.memory_space<vmem>>, vector<1x1x4x4xbf16>
    %85 = vector.shape_cast %84 : vector<1x1x4x4xbf16> to vector<4x4xbf16>
    %cst_92 = arith.constant dense<0.000000e+00> : vector<128x4xf32>
    %86 = tpu.matmul %83, %85, %cst_92 {dimension_numbers = #tpu.dot_dimension_numbers<[1], [0], [0], [1], [0, 0, 1, 1], [], []>} : vector<128x4xbf16>, vector<4x4xbf16>, vector<128x4xf32> -> vector<128x4xf32>
    %87 = arith.addf %82, %86 : vector<128x4xf32>
    %c0_93 = arith.constant 0 : index
    %c0_94 = arith.constant 0 : index
    %88 = vector.load %arg13[%c0_93, %c0_94] : memref<128x4xf32, #tpu.memory_space<vmem>>, vector<128x4xf32>
    tpu.vector_store %arg13[%c0_93, %c0_94], %87 {strides = array<i32>} : memref<128x4xf32, #tpu.memory_space<vmem>>, vector<128x4xf32>,
    %c1_95 = arith.constant 1 : index
    %c0_96 = arith.constant 0 : index
    %c0_97 = arith.constant 0 : index
    %89 = vector.load %arg12[%c1_95, %c0_96, %c0_97] : memref<10x18x4xf32, #tpu.memory_space<vmem>>, vector<8x16x4xf32>
    %90 = vector.shape_cast %89 : vector<8x16x4xf32> to vector<128x4xf32>
    %c0_98 = arith.constant 0 : index
    %c0_99 = arith.constant 0 : index
    %91 = vector.load %arg13[%c0_98, %c0_99] : memref<128x4xf32, #tpu.memory_space<vmem>>, vector<128x4xf32>
    %92 = arith.truncf %90 : vector<128x4xf32> to vector<128x4xbf16>
    %c1_100 = arith.constant 1 : index
    %c0_101 = arith.constant 0 : index
    %c0_102 = arith.constant 0 : index
    %c0_103 = arith.constant 0 : index
    %93 = vector.load %arg6[%c1_100, %c0_101, %c0_102, %c0_103] : memref<3x3x4x4xbf16, #tpu.memory_space<vmem>>, vector<1x1x4x4xbf16>
    %94 = vector.shape_cast %93 : vector<1x1x4x4xbf16> to vector<4x4xbf16>
    %cst_104 = arith.constant dense<0.000000e+00> : vector<128x4xf32>
    %95 = tpu.matmul %92, %94, %cst_104 {dimension_numbers = #tpu.dot_dimension_numbers<[1], [0], [0], [1], [0, 0, 1, 1], [], []>} : vector<128x4xbf16>, vector<4x4xbf16>, vector<128x4xf32> -> vector<128x4xf32>
    %96 = arith.addf %91, %95 : vector<128x4xf32>
    %c0_105 = arith.constant 0 : index
    %c0_106 = arith.constant 0 : index
    %97 = vector.load %arg13[%c0_105, %c0_106] : memref<128x4xf32, #tpu.memory_space<vmem>>, vector<128x4xf32>
    tpu.vector_store %arg13[%c0_105, %c0_106], %96 {strides = array<i32>} : memref<128x4xf32, #tpu.memory_space<vmem>>, vector<128x4xf32>,
    %c1_107 = arith.constant 1 : index
    %c1_108 = arith.constant 1 : index
    %c0_109 = arith.constant 0 : index
    %98 = vector.load %arg12[%c1_107, %c1_108, %c0_109] : memref<10x18x4xf32, #tpu.memory_space<vmem>>, vector<8x16x4xf32>
    %99 = vector.shape_cast %98 : vector<8x16x4xf32> to vector<128x4xf32>
    %c0_110 = arith.constant 0 : index
    %c0_111 = arith.constant 0 : index
    %100 = vector.load %arg13[%c0_110, %c0_111] : memref<128x4xf32, #tpu.memory_space<vmem>>, vector<128x4xf32>
    %101 = arith.truncf %99 : vector<128x4xf32> to vector<128x4xbf16>
    %c1_112 = arith.constant 1 : index
    %c1_113 = arith.constant 1 : index
    %c0_114 = arith.constant 0 : index
    %c0_115 = arith.constant 0 : index
    %102 = vector.load %arg6[%c1_112, %c1_113, %c0_114, %c0_115] : memref<3x3x4x4xbf16, #tpu.memory_space<vmem>>, vector<1x1x4x4xbf16>
    %103 = vector.shape_cast %102 : vector<1x1x4x4xbf16> to vector<4x4xbf16>
    %cst_116 = arith.constant dense<0.000000e+00> : vector<128x4xf32>
    %104 = tpu.matmul %101, %103, %cst_116 {dimension_numbers = #tpu.dot_dimension_numbers<[1], [0], [0], [1], [0, 0, 1, 1], [], []>} : vector<128x4xbf16>, vector<4x4xbf16>, vector<128x4xf32> -> vector<128x4xf32>
    %105 = arith.addf %100, %104 : vector<128x4xf32>
    %c0_117 = arith.constant 0 : index
    %c0_118 = arith.constant 0 : index
    %106 = vector.load %arg13[%c0_117, %c0_118] : memref<128x4xf32, #tpu.memory_space<vmem>>, vector<128x4xf32>
    tpu.vector_store %arg13[%c0_117, %c0_118], %105 {strides = array<i32>} : memref<128x4xf32, #tpu.memory_space<vmem>>, vector<128x4xf32>,
    %c1_119 = arith.constant 1 : index
    %c2_120 = arith.constant 2 : index
    %c0_121 = arith.constant 0 : index
    %107 = vector.load %arg12[%c1_119, %c2_120, %c0_121] : memref<10x18x4xf32, #tpu.memory_space<vmem>>, vector<8x16x4xf32>
    %108 = vector.shape_cast %107 : vector<8x16x4xf32> to vector<128x4xf32>
    %c0_122 = arith.constant 0 : index
    %c0_123 = arith.constant 0 : index
    %109 = vector.load %arg13[%c0_122, %c0_123] : memref<128x4xf32, #tpu.memory_space<vmem>>, vector<128x4xf32>
    %110 = arith.truncf %108 : vector<128x4xf32> to vector<128x4xbf16>
    %c1_124 = arith.constant 1 : index
    %c2_125 = arith.constant 2 : index
    %c0_126 = arith.constant 0 : index
    %c0_127 = arith.constant 0 : index
    %111 = vector.load %arg6[%c1_124, %c2_125, %c0_126, %c0_127] : memref<3x3x4x4xbf16, #tpu.memory_space<vmem>>, vector<1x1x4x4xbf16>
    %112 = vector.shape_cast %111 : vector<1x1x4x4xbf16> to vector<4x4xbf16>
    %cst_128 = arith.constant dense<0.000000e+00> : vector<128x4xf32>
    %113 = tpu.matmul %110, %112, %cst_128 {dimension_numbers = #tpu.dot_dimension_numbers<[1], [0], [0], [1], [0, 0, 1, 1], [], []>} : vector<128x4xbf16>, vector<4x4xbf16>, vector<128x4xf32> -> vector<128x4xf32>
    %114 = arith.addf %109, %113 : vector<128x4xf32>
    %c0_129 = arith.constant 0 : index
    %c0_130 = arith.constant 0 : index
    %115 = vector.load %arg13[%c0_129, %c0_130] : memref<128x4xf32, #tpu.memory_space<vmem>>, vector<128x4xf32>
    tpu.vector_store %arg13[%c0_129, %c0_130], %114 {strides = array<i32>} : memref<128x4xf32, #tpu.memory_space<vmem>>, vector<128x4xf32>,
    %c2_131 = arith.constant 2 : index
    %c0_132 = arith.constant 0 : index
    %c0_133 = arith.constant 0 : index
    %116 = vector.load %arg12[%c2_131, %c0_132, %c0_133] : memref<10x18x4xf32, #tpu.memory_space<vmem>>, vector<8x16x4xf32>
    %117 = vector.shape_cast %116 : vector<8x16x4xf32> to vector<128x4xf32>
    %c0_134 = arith.constant 0 : index
    %c0_135 = arith.constant 0 : index
    %118 = vector.load %arg13[%c0_134, %c0_135] : memref<128x4xf32, #tpu.memory_space<vmem>>, vector<128x4xf32>
    %119 = arith.truncf %117 : vector<128x4xf32> to vector<128x4xbf16>
    %c2_136 = arith.constant 2 : index
    %c0_137 = arith.constant 0 : index
    %c0_138 = arith.constant 0 : index
    %c0_139 = arith.constant 0 : index
    %120 = vector.load %arg6[%c2_136, %c0_137, %c0_138, %c0_139] : memref<3x3x4x4xbf16, #tpu.memory_space<vmem>>, vector<1x1x4x4xbf16>
    %121 = vector.shape_cast %120 : vector<1x1x4x4xbf16> to vector<4x4xbf16>
    %cst_140 = arith.constant dense<0.000000e+00> : vector<128x4xf32>
    %122 = tpu.matmul %119, %121, %cst_140 {dimension_numbers = #tpu.dot_dimension_numbers<[1], [0], [0], [1], [0, 0, 1, 1], [], []>} : vector<128x4xbf16>, vector<4x4xbf16>, vector<128x4xf32> -> vector<128x4xf32>
    %123 = arith.addf %118, %122 : vector<128x4xf32>
    %c0_141 = arith.constant 0 : index
    %c0_142 = arith.constant 0 : index
    %124 = vector.load %arg13[%c0_141, %c0_142] : memref<128x4xf32, #tpu.memory_space<vmem>>, vector<128x4xf32>
    tpu.vector_store %arg13[%c0_141, %c0_142], %123 {strides = array<i32>} : memref<128x4xf32, #tpu.memory_space<vmem>>, vector<128x4xf32>,
    %c2_143 = arith.constant 2 : index
    %c1_144 = arith.constant 1 : index
    %c0_145 = arith.constant 0 : index
    %125 = vector.load %arg12[%c2_143, %c1_144, %c0_145] : memref<10x18x4xf32, #tpu.memory_space<vmem>>, vector<8x16x4xf32>
    %126 = vector.shape_cast %125 : vector<8x16x4xf32> to vector<128x4xf32>
    %c0_146 = arith.constant 0 : index
    %c0_147 = arith.constant 0 : index
    %127 = vector.load %arg13[%c0_146, %c0_147] : memref<128x4xf32, #tpu.memory_space<vmem>>, vector<128x4xf32>
    %128 = arith.truncf %126 : vector<128x4xf32> to vector<128x4xbf16>
    %c2_148 = arith.constant 2 : index
    %c1_149 = arith.constant 1 : index
    %c0_150 = arith.constant 0 : index
    %c0_151 = arith.constant 0 : index
    %129 = vector.load %arg6[%c2_148, %c1_149, %c0_150, %c0_151] : memref<3x3x4x4xbf16, #tpu.memory_space<vmem>>, vector<1x1x4x4xbf16>
    %130 = vector.shape_cast %129 : vector<1x1x4x4xbf16> to vector<4x4xbf16>
    %cst_152 = arith.constant dense<0.000000e+00> : vector<128x4xf32>
    %131 = tpu.matmul %128, %130, %cst_152 {dimension_numbers = #tpu.dot_dimension_numbers<[1], [0], [0], [1], [0, 0, 1, 1], [], []>} : vector<128x4xbf16>, vector<4x4xbf16>, vector<128x4xf32> -> vector<128x4xf32>
    %132 = arith.addf %127, %131 : vector<128x4xf32>
    %c0_153 = arith.constant 0 : index
    %c0_154 = arith.constant 0 : index
    %133 = vector.load %arg13[%c0_153, %c0_154] : memref<128x4xf32, #tpu.memory_space<vmem>>, vector<128x4xf32>
    tpu.vector_store %arg13[%c0_153, %c0_154], %132 {strides = array<i32>} : memref<128x4xf32, #tpu.memory_space<vmem>>, vector<128x4xf32>,
    %c2_155 = arith.constant 2 : index
    %c2_156 = arith.constant 2 : index
    %c0_157 = arith.constant 0 : index
    %134 = vector.load %arg12[%c2_155, %c2_156, %c0_157] : memref<10x18x4xf32, #tpu.memory_space<vmem>>, vector<8x16x4xf32>
    %135 = vector.shape_cast %134 : vector<8x16x4xf32> to vector<128x4xf32>
    %c0_158 = arith.constant 0 : index
    %c0_159 = arith.constant 0 : index
    %136 = vector.load %arg13[%c0_158, %c0_159] : memref<128x4xf32, #tpu.memory_space<vmem>>, vector<128x4xf32>
    %137 = arith.truncf %135 : vector<128x4xf32> to vector<128x4xbf16>
    %c2_160 = arith.constant 2 : index
    %c2_161 = arith.constant 2 : index
    %c0_162 = arith.constant 0 : index
    %c0_163 = arith.constant 0 : index
    %138 = vector.load %arg6[%c2_160, %c2_161, %c0_162, %c0_163] : memref<3x3x4x4xbf16, #tpu.memory_space<vmem>>, vector<1x1x4x4xbf16>
    %139 = vector.shape_cast %138 : vector<1x1x4x4xbf16> to vector<4x4xbf16>
    %cst_164 = arith.constant dense<0.000000e+00> : vector<128x4xf32>
    %140 = tpu.matmul %137, %139, %cst_164 {dimension_numbers = #tpu.dot_dimension_numbers<[1], [0], [0], [1], [0, 0, 1, 1], [], []>} : vector<128x4xbf16>, vector<4x4xbf16>, vector<128x4xf32> -> vector<128x4xf32>
    %141 = arith.addf %136, %140 : vector<128x4xf32>
    %c0_165 = arith.constant 0 : index
    %c0_166 = arith.constant 0 : index
    %142 = vector.load %arg13[%c0_165, %c0_166] : memref<128x4xf32, #tpu.memory_space<vmem>>, vector<128x4xf32>
    tpu.vector_store %arg13[%c0_165, %c0_166], %141 {strides = array<i32>} : memref<128x4xf32, #tpu.memory_space<vmem>>, vector<128x4xf32>,
    %c0_167 = arith.constant 0 : index
    %c0_168 = arith.constant 0 : index
    %143 = vector.load %arg13[%c0_167, %c0_168] : memref<128x4xf32, #tpu.memory_space<vmem>>, vector<128x4xf32>
    %c0_169 = arith.constant 0 : index
    %c0_170 = arith.constant 0 : index
    %144 = vector.load %arg7[%c0_169, %c0_170] : memref<1x4xf32, #tpu.memory_space<vmem>>, vector<1x4xf32>
    %145 = vector.broadcast %144 : vector<1x4xf32> to vector<128x4xf32>
    %146 = arith.addf %143, %145 : vector<128x4xf32>
    %cst_171 = arith.constant 0.000000e+00 : f32
    %147 = vector.broadcast %cst_171 : f32 to vector<128x4xf32>
    %148 = arith.maximumf %146, %147 : vector<128x4xf32>
    %149 = arith.truncf %148 : vector<128x4xf32> to vector<128x4xbf16>
    %c0_172 = arith.constant 0 : index
    %c0_173 = arith.constant 0 : index
    %150 = vector.load %arg8[%c0_172, %c0_173] : memref<4x16xbf16, #tpu.memory_space<vmem>>, vector<4x16xbf16>
    %cst_174 = arith.constant dense<0.000000e+00> : vector<128x16xf32>
    %151 = tpu.matmul %149, %150, %cst_174 {dimension_numbers = #tpu.dot_dimension_numbers<[1], [0], [0], [1], [0, 0, 1, 1], [], []>} : vector<128x4xbf16>, vector<4x16xbf16>, vector<128x16xf32> -> vector<128x16xf32>
    %c0_175 = arith.constant 0 : index
    %c0_176 = arith.constant 0 : index
    %152 = vector.load %arg9[%c0_175, %c0_176] : memref<1x16xf32, #tpu.memory_space<vmem>>, vector<1x16xf32>
    %153 = vector.broadcast %152 : vector<1x16xf32> to vector<128x16xf32>
    %154 = arith.addf %151, %153 : vector<128x16xf32>
    %155 = arith.addf %154, %18 : vector<128x16xf32>
    %cst_177 = arith.constant 0.000000e+00 : f32
    %156 = vector.broadcast %cst_177 : f32 to vector<128x16xf32>
    %157 = arith.maximumf %155, %156 : vector<128x16xf32>
    %158 = vector.shape_cast %157 : vector<128x16xf32> to vector<1x8x16x16xf32>
    %c0_178 = arith.constant 0 : index
    %c0_179 = arith.constant 0 : index
    %c0_180 = arith.constant 0 : index
    %c0_181 = arith.constant 0 : index
    %159 = vector.load %arg10[%c0_178, %c0_179, %c0_180, %c0_181] : memref<1x8x16x16xf32, #tpu.memory_space<vmem>>, vector<1x8x16x16xf32>
    tpu.vector_store %arg10[%c0_178, %c0_179, %c0_180, %c0_181], %158 {strides = array<i32>} : memref<1x8x16x16xf32, #tpu.memory_space<vmem>>, vector<1x8x16x16xf32>,
    return
  }
  func.func @transform_0(%arg0: i32, %arg1: i32) -> (i32, i32, i32, i32) {
    %c0_i32 = arith.constant 0 : i32
    %c0_i32_0 = arith.constant 0 : i32
    %c0_i32_1 = arith.constant 0 : i32
    return %arg0, %arg1, %c0_i32, %c0_i32_0 : i32, i32, i32, i32
  }
  func.func @transform_2(%arg0: i32, %arg1: i32) -> (i32, i32) {
    %c0_i32 = arith.constant 0 : i32
    %c0_i32_0 = arith.constant 0 : i32
    %c0_i32_1 = arith.constant 0 : i32
    return %c0_i32, %c0_i32_0 : i32, i32
  }
  func.func @transform_3(%arg0: i32, %arg1: i32) -> (i32, i32) {
    %c0_i32 = arith.constant 0 : i32
    %c0_i32_0 = arith.constant 0 : i32
    %c0_i32_1 = arith.constant 0 : i32
    return %c0_i32, %c0_i32_0 : i32, i32
  }
  func.func @transform_4(%arg0: i32, %arg1: i32) -> (i32, i32, i32, i32) {
    %c0_i32 = arith.constant 0 : i32
    %c0_i32_0 = arith.constant 0 : i32
    %c0_i32_1 = arith.constant 0 : i32
    %c0_i32_2 = arith.constant 0 : i32
    %c0_i32_3 = arith.constant 0 : i32
    return %c0_i32, %c0_i32_0, %c0_i32_1, %c0_i32_2 : i32, i32, i32, i32
  }
  func.func @transform_5(%arg0: i32, %arg1: i32) -> (i32, i32) {
    %c0_i32 = arith.constant 0 : i32
    %c0_i32_0 = arith.constant 0 : i32
    %c0_i32_1 = arith.constant 0 : i32
    return %c0_i32, %c0_i32_0 : i32, i32
  }
  func.func @transform_6(%arg0: i32, %arg1: i32) -> (i32, i32) {
    %c0_i32 = arith.constant 0 : i32
    %c0_i32_0 = arith.constant 0 : i32
    %c0_i32_1 = arith.constant 0 : i32
    return %c0_i32, %c0_i32_0 : i32, i32
  }
  func.func @transform_7(%arg0: i32, %arg1: i32) -> (i32, i32) {
    %c0_i32 = arith.constant 0 : i32
    %c0_i32_0 = arith.constant 0 : i32
    %c0_i32_1 = arith.constant 0 : i32
    return %c0_i32, %c0_i32_0 : i32, i32
  }
  func.func @transform_8(%arg0: i32, %arg1: i32) -> (i32, i32, i32, i32) {
    %c0_i32 = arith.constant 0 : i32
    %c0_i32_0 = arith.constant 0 : i32
    %c0_i32_1 = arith.constant 0 : i32
    return %arg0, %arg1, %c0_i32, %c0_i32_0 : i32, i32, i32, i32
  }
}

</mosaic_0001>

<llo_original>
// kernel: bottleneck_forward.1
$region0: #{bottleneck_forward.1}
  #allocation0 [shape = 'u32[]', space=smem, size = 0x4, offset = 0x4, fixed_abs, tag = 'smem constant byte address 0x4 - core index']
  #allocation1 [shape = 'u32[144,128]{1,0:T(1,128)}', space=vmem, size = 0x12000, scoped, tag = 'internal scratch']
  #allocation2 [shape = 'f32[2,16,16]{2,1,0:T(8,128)}', space=vmem, size = 0x4000, scoped, tag = 'scratch operand']
  #allocation3 [shape = 'f32[10,18,4]{2,1,0:T(8,128)}', space=vmem, size = 0x1e000, scoped, tag = 'scratch operand']
  #allocation4 [shape = 'f32[128,4]{1,0:T(8,128)}', space=vmem, size = 0x10000, scoped, tag = 'scratch operand']
  #allocation5 [shape = 's32[2]{0}', space=sflag, size = 0x8, scoped, tag = 'scratch operand']
  #allocation6 [shape = 's32[]', space=sflag, size = 0x4, offset = 0, fixed_abs, tag = 'sflag constant byte address 0x0 - dummy sync flag']
  #allocation7 [shape = 's32[]', space=sflag, size = 0x4, offset = 0, fixed_abs, tag = 'sflag constant byte address 0x0 - dummy sync flag']
  %s0 = inlined_call_operand.vmem [shape: f32[2,16,16,16], index: 0, kind: input, shape index: {}, may-alias: {0,1}]
  %s1 = inlined_call_operand.vmem [shape: f32[2,16,16,16], index: 1, kind: input, shape index: {}, may-alias: {0,1}]
  %s2 = inlined_call_operand.vmem [shape: bf16[16,4], index: 2, kind: input, shape index: {}]
  %s3 = inlined_call_operand.vmem [shape: f32[1,4], index: 3, kind: input, shape index: {}]
  %s4 = inlined_call_operand.vmem [shape: bf16[3,3,4,4], index: 4, kind: input, shape index: {}]
  %s5 = inlined_call_operand.vmem [shape: f32[1,4], index: 5, kind: input, shape index: {}]
  %s6 = inlined_call_operand.vmem [shape: bf16[4,16], index: 6, kind: input, shape index: {}]
  %s7 = inlined_call_operand.vmem [shape: f32[1,16], index: 7, kind: input, shape index: {}]
  %s8 = inlined_call_operand.vmem [shape: f32[2,16,16,16], index: 8, kind: output, shape index: {}]
  %s9 = sld [smem:[#allocation0]]
  $region137: #{bottleneck_forward.1} parent=0
    _
  %s11 = ssub.s32 1, %s9
  %s12 = scalar_select 0, %s11, %s9
  loop: start=0, step=1, limit=6
  $region2: #{bottleneck_forward.1} parent=0 // loop_pre_header
    _
  $region3: #{bottleneck_forward.1} parent=0 // loop_header
    %s14 = sphi 0, %s18
    %p15 = scmp.ge.s32.totalorder %s14, 6
    %s21 = sphi 0, %s33
    %s22 = sphi 0, %s29
    %s23 = sphi 0, %s21
    %s24 = sphi 0, %s22
    %s25 = sphi 0, %s23
    %s26 = sphi 0, %s24
    %s38 = sphi 0, %s40
    %s41 = sphi 0, %s38
    %s42 = sphi 0, %s41
    %s58 = sphi 0, %s42
    %s62 = sphi 0, %s62
    %s64 = sphi 0, %s62
    %s65 = sphi 0, %s64
    %s79 = sphi 0, %s65
    %s83 = sphi 0, %s83
    %s85 = sphi 0, %s83
    %s86 = sphi 0, %s85
    %s100 = sphi 0, %s86
    %s104 = sphi 0, %s104
    %s106 = sphi 0, %s104
    %s107 = sphi 0, %s106
    %s121 = sphi 0, %s107
    %s125 = sphi 0, %s125
    %s127 = sphi 0, %s125
    %s128 = sphi 0, %s127
    %s142 = sphi 0, %s128
    %s146 = sphi 0, %s146
    %s148 = sphi 0, %s146
    %s149 = sphi 0, %s148
    %s163 = sphi 0, %s149
    %s167 = sphi 0, %s167
    %s169 = sphi 0, %s167
    %s170 = sphi 0, %s169
    %s184 = sphi 0, %s170
    %s192 = sphi 0, %s194
    %s195 = sphi 0, %s192
    %s196 = sphi 0, %s195
    %s212 = sphi 0, %s196
  $region4: #{bottleneck_forward.1} parent=0 // loop_header_branch
    %17 = sbr.rel (%p15) target = $region8
  $region5: #{bottleneck_forward.1} parent=0 // loop_body
    %s19 = ssub.s32 %s14, 1
    %s20 = ssub.s32 %s14, 2
    %s27 = sadd.s32 1, %s22
    %p28 = scmp.ge.s32.totalorder %s27, 2
    %s29 = scalar_select %p28, 0, %s27
    %s30 = sadd.s32 1, %s21
    %s31 = scalar_select %p28, %s30, %s21
    %p32 = scmp.ge.s32.totalorder %s31, 2
    %s33 = scalar_select %p32, 0, %s31
    %s34 = ssub.s32 %s21, %s33
    %s35 = ssub.s32 %s22, %s29
    %s36 = sor.u32 %s34, %s35
    %p37 = scmp.eq.s32.totalorder %s36, 0
    %s39 = sadd.s32 %s38, 1
    %s40 = scalar_select %p37, %s38, %s39
    %p43 = pneg %p37
    %p44 = scmp.eq.s32.totalorder %s14, 3
    %p45 = por %p43, %p44
    %p46 = scmp.ne.s32.totalorder %s38, %s41
    %p47 = scmp.eq.s32.totalorder %s14, 0
    %p48 = por %p46, %p47
    %p49 = scmp.ne.s32.totalorder %s38, %s41
    %p50 = scmp.eq.s32.totalorder %s19, 3
    %p51 = por %p49, %p50
    %p52 = scmp.ne.s32.totalorder %s41, %s42
    %p53 = scmp.eq.s32.totalorder %s19, 0
    %p54 = por %p52, %p53
    %p55 = scmp.ne.s32.totalorder %s41, %s42
    %p56 = scmp.eq.s32.totalorder %s20, 3
    %p57 = por %p55, %p56
    %p59 = scmp.ne.s32.totalorder %s42, %s58
    %p60 = scmp.eq.s32.totalorder %s20, 0
    %p61 = por %p59, %p60
    %s63 = sadd.s32 %s62, 1
    %p66 = scmp.eq.s32.totalorder %s14, 3
    %p67 = scmp.ne.s32.totalorder %s62, %s64
    %p68 = scmp.eq.s32.totalorder %s14, 0
    %p69 = por %p67, %p68
    %p70 = scmp.ne.s32.totalorder %s62, %s64
    %p71 = scmp.eq.s32.totalorder %s19, 3
    %p72 = por %p70, %p71
    %p73 = scmp.ne.s32.totalorder %s64, %s65
    %p74 = scmp.eq.s32.totalorder %s19, 0
    %p75 = por %p73, %p74
    %p76 = scmp.ne.s32.totalorder %s64, %s65
    %p77 = scmp.eq.s32.totalorder %s20, 3
    %p78 = por %p76, %p77
    %p80 = scmp.ne.s32.totalorder %s65, %s79
    %p81 = scmp.eq.s32.totalorder %s20, 0
    %p82 = por %p80, %p81
    %s84 = sadd.s32 %s83, 1
    %p87 = scmp.eq.s32.totalorder %s14, 3
    %p88 = scmp.ne.s32.totalorder %s83, %s85
    %p89 = scmp.eq.s32.totalorder %s14, 0
    %p90 = por %p88, %p89
    %p91 = scmp.ne.s32.totalorder %s83, %s85
    %p92 = scmp.eq.s32.totalorder %s19, 3
    %p93 = por %p91, %p92
    %p94 = scmp.ne.s32.totalorder %s85, %s86
    %p95 = scmp.eq.s32.totalorder %s19, 0
    %p96 = por %p94, %p95
    %p97 = scmp.ne.s32.totalorder %s85, %s86
    %p98 = scmp.eq.s32.totalorder %s20, 3
    %p99 = por %p97, %p98
    %p101 = scmp.ne.s32.totalorder %s86, %s100
    %p102 = scmp.eq.s32.totalorder %s20, 0
    %p103 = por %p101, %p102
    %s105 = sadd.s32 %s104, 1
    %p108 = scmp.eq.s32.totalorder %s14, 3
    %p109 = scmp.ne.s32.totalorder %s104, %s106
    %p110 = scmp.eq.s32.totalorder %s14, 0
    %p111 = por %p109, %p110
    %p112 = scmp.ne.s32.totalorder %s104, %s106
    %p113 = scmp.eq.s32.totalorder %s19, 3
    %p114 = por %p112, %p113
    %p115 = scmp.ne.s32.totalorder %s106, %s107
    %p116 = scmp.eq.s32.totalorder %s19, 0
    %p117 = por %p115, %p116
    %p118 = scmp.ne.s32.totalorder %s106, %s107
    %p119 = scmp.eq.s32.totalorder %s20, 3
    %p120 = por %p118, %p119
    %p122 = scmp.ne.s32.totalorder %s107, %s121
    %p123 = scmp.eq.s32.totalorder %s20, 0
    %p124 = por %p122, %p123
    %s126 = sadd.s32 %s125, 1
    %p129 = scmp.eq.s32.totalorder %s14, 3
    %p130 = scmp.ne.s32.totalorder %s125, %s127
    %p131 = scmp.eq.s32.totalorder %s14, 0
    %p132 = por %p130, %p131
    %p133 = scmp.ne.s32.totalorder %s125, %s127
    %p134 = scmp.eq.s32.totalorder %s19, 3
    %p135 = por %p133, %p134
    %p136 = scmp.ne.s32.totalorder %s127, %s128
    %p137 = scmp.eq.s32.totalorder %s19, 0
    %p138 = por %p136, %p137
    %p139 = scmp.ne.s32.totalorder %s127, %s128
    %p140 = scmp.eq.s32.totalorder %s20, 3
    %p141 = por %p139, %p140
    %p143 = scmp.ne.s32.totalorder %s128, %s142
    %p144 = scmp.eq.s32.totalorder %s20, 0
    %p145 = por %p143, %p144
    %s147 = sadd.s32 %s146, 1
    %p150 = scmp.eq.s32.totalorder %s14, 3
    %p151 = scmp.ne.s32.totalorder %s146, %s148
    %p152 = scmp.eq.s32.totalorder %s14, 0
    %p153 = por %p151, %p152
    %p154 = scmp.ne.s32.totalorder %s146, %s148
    %p155 = scmp.eq.s32.totalorder %s19, 3
    %p156 = por %p154, %p155
    %p157 = scmp.ne.s32.totalorder %s148, %s149
    %p158 = scmp.eq.s32.totalorder %s19, 0
    %p159 = por %p157, %p158
    %p160 = scmp.ne.s32.totalorder %s148, %s149
    %p161 = scmp.eq.s32.totalorder %s20, 3
    %p162 = por %p160, %p161
    %p164 = scmp.ne.s32.totalorder %s149, %s163
    %p165 = scmp.eq.s32.totalorder %s20, 0
    %p166 = por %p164, %p165
    %s168 = sadd.s32 %s167, 1
    %p171 = scmp.eq.s32.totalorder %s14, 3
    %p172 = scmp.ne.s32.totalorder %s167, %s169
    %p173 = scmp.eq.s32.totalorder %s14, 0
    %p174 = por %p172, %p173
    %p175 = scmp.ne.s32.totalorder %s167, %s169
    %p176 = scmp.eq.s32.totalorder %s19, 3
    %p177 = por %p175, %p176
    %p178 = scmp.ne.s32.totalorder %s169, %s170
    %p179 = scmp.eq.s32.totalorder %s19, 0
    %p180 = por %p178, %p179
    %p181 = scmp.ne.s32.totalorder %s169, %s170
    %p182 = scmp.eq.s32.totalorder %s20, 3
    %p183 = por %p181, %p182
    %p185 = scmp.ne.s32.totalorder %s170, %s184
    %p186 = scmp.eq.s32.totalorder %s20, 0
    %p187 = por %p185, %p186
    %s188 = ssub.s32 %s21, %s33
    %s189 = ssub.s32 %s22, %s29
    %s190 = sor.u32 %s188, %s189
    %p191 = scmp.eq.s32.totalorder %s190, 0
    %s193 = sadd.s32 %s192, 1
    %s194 = scalar_select %p191, %s192, %s193
    %p197 = pneg %p191
    %p198 = scmp.eq.s32.totalorder %s14, 3
    %p199 = por %p197, %p198
    %p200 = scmp.ne.s32.totalorder %s192, %s195
    %p201 = scmp.eq.s32.totalorder %s14, 0
    %p202 = por %p200, %p201
    %p203 = scmp.ne.s32.totalorder %s192, %s195
    %p204 = scmp.eq.s32.totalorder %s19, 3
    %p205 = por %p203, %p204
    %p206 = scmp.ne.s32.totalorder %s195, %s196
    %p207 = scmp.eq.s32.totalorder %s19, 0
    %p208 = por %p206, %p207
    %p209 = scmp.ne.s32.totalorder %s195, %s196
    %p210 = scmp.eq.s32.totalorder %s20, 3
    %p211 = por %p209, %p210
    %p213 = scmp.ne.s32.totalorder %s196, %s212
    %p214 = scmp.eq.s32.totalorder %s20, 0
    %p215 = por %p213, %p214
    %p216 = scmp.le.s32.totalorder 1, %s14
    %p217 = scmp.lt.s32.totalorder %s14, 5
    %p218 = pnand %p216, %p217
    %p219 = pneg %p218
    // Predicated region
    $region9: #{bottleneck_forward.1} parent=5 // pred_check
      _
    $region10: #{bottleneck_forward.1} parent=5 // pred_check_branch
      %221 = sbr.rel (%p218) target = $region12
    $region11: #{bottleneck_forward.1} parent=5 // pred_region
      %s222 = ssub.s32 %s14, 1
      // Predicated region
      $region13: #{bottleneck_forward.1} parent=11 // pred_check
        %p223 = pneg %p75
      $region14: #{bottleneck_forward.1} parent=11 // pred_check_branch
        %225 = sbr.rel (%p223) target = $region16
      $region15: #{bottleneck_forward.1} parent=11 // pred_region
        _
      $region16: #{bottleneck_forward.1} parent=11 // pred_fallthru
        _
      // Predicated region
      $region17: #{bottleneck_forward.1} parent=11 // pred_check
        %p226 = pneg %p96
      $region18: #{bottleneck_forward.1} parent=11 // pred_check_branch
        %228 = sbr.rel (%p226) target = $region20
      $region19: #{bottleneck_forward.1} parent=11 // pred_region
        _
      $region20: #{bottleneck_forward.1} parent=11 // pred_fallthru
        _
      // Predicated region
      $region21: #{bottleneck_forward.1} parent=11 // pred_check
        %p229 = pneg %p117
      $region22: #{bottleneck_forward.1} parent=11 // pred_check_branch
        %231 = sbr.rel (%p229) target = $region24
      $region23: #{bottleneck_forward.1} parent=11 // pred_region
        _
      $region24: #{bottleneck_forward.1} parent=11 // pred_fallthru
        _
      // Predicated region
      $region25: #{bottleneck_forward.1} parent=11 // pred_check
        %p232 = pneg %p138
      $region26: #{bottleneck_forward.1} parent=11 // pred_check_branch
        %234 = sbr.rel (%p232) target = $region28
      $region27: #{bottleneck_forward.1} parent=11 // pred_region
        _
      $region28: #{bottleneck_forward.1} parent=11 // pred_fallthru
        _
      // Predicated region
      $region29: #{bottleneck_forward.1} parent=11 // pred_check
        %p235 = pneg %p159
      $region30: #{bottleneck_forward.1} parent=11 // pred_check_branch
        %237 = sbr.rel (%p235) target = $region32
      $region31: #{bottleneck_forward.1} parent=11 // pred_region
        _
      $region32: #{bottleneck_forward.1} parent=11 // pred_fallthru
        _
      // Predicated region
      $region33: #{bottleneck_forward.1} parent=11 // pred_check
        %p238 = pneg %p180
      $region34: #{bottleneck_forward.1} parent=11 // pred_check_branch
        %240 = sbr.rel (%p238) target = $region36
      $region35: #{bottleneck_forward.1} parent=11 // pred_region
        _
      $region36: #{bottleneck_forward.1} parent=11 // pred_fallthru
        _
    $region12: #{bottleneck_forward.1} parent=5 // pred_fallthru
      _
    %p241 = scmp.lt.s32.totalorder %s14, 4
    // Predicated region
    $region37: #{bottleneck_forward.1} parent=5 // pred_check
      %p242 = pneg %p241
    $region38: #{bottleneck_forward.1} parent=5 // pred_check_branch
      %244 = sbr.rel (%p242) target = $region40
    $region39: #{bottleneck_forward.1} parent=5 // pred_region
      // Predicated region
      $region41: #{bottleneck_forward.1} parent=39 // pred_check
        %p245 = pneg %p48
      $region42: #{bottleneck_forward.1} parent=39 // pred_check_branch
        %247 = sbr.rel (%p245) target = $region44
      $region43: #{bottleneck_forward.1} parent=39 // pred_region
        %s248 = smul.u32 8, %s22
        %p249 = scmp.lt.s32.totalorder %s21, 1
        %s250 = scalar_select %p249, %s21, 1
        %p251 = scmp.lt.s32.totalorder %s248, 15
        %s252 = scalar_select %p251, %s248, 15
        %s253 = smul.addr %s252, 2
        %s254 = smul.addr %s250, 32
        %s255 = sadd.s32 %s253, %s254
        %s256 = smul.addr %s255, 8
        %s257 = scalar_lea.vmem %s0, %s256
        %s258 = smul.u32 8, %s22
      $region44: #{bottleneck_forward.1} parent=39 // pred_fallthru
        _
    $region40: #{bottleneck_forward.1} parent=5 // pred_fallthru
      _
    %p259 = scmp.le.s32.totalorder 1, %s14
    %p260 = scmp.lt.s32.totalorder %s14, 5
    %p261 = pnand %p259, %p260
    %p262 = pneg %p261
    // Predicated region
    $region45: #{bottleneck_forward.1} parent=5 // pred_check
      _
    $region46: #{bottleneck_forward.1} parent=5 // pred_check_branch
      %264 = sbr.rel (%p261) target = $region48
    $region47: #{bottleneck_forward.1} parent=5 // pred_region
      %s265 = ssub.s32 %s14, 1
      %s266 = smul.u32 8, %s24
      %p267 = scmp.lt.s32.totalorder %s23, 1
      %s268 = scalar_select %p267, %s23, 1
      %p269 = scmp.lt.s32.totalorder %s266, 15
      %s270 = scalar_select %p269, %s266, 15
      %s271 = smul.addr %s270, 2
      %s272 = smul.addr %s268, 32
      %s273 = sadd.s32 %s271, %s272
      %s274 = smul.addr %s273, 8
      %s275 = scalar_lea.vmem %s0, %s274
      %p276 = pneg %p54
      %p277 = pneg %p51
      %p278 = pneg %p75
      %p279 = pneg %p72
      %p280 = pneg %p96
      %p281 = pneg %p93
      %p282 = pneg %p117
      %p283 = pneg %p114
      %p284 = pneg %p138
      %p285 = pneg %p135
      %p286 = pneg %p159
      %p287 = pneg %p156
      %p288 = pneg %p180
      %p289 = pneg %p177
      %p290 = pneg %p208
      %p291 = pneg %p205
      %s292 = smul.u32 8, %s24
      %p293 = scmp.lt.s32.totalorder %s23, 1
      %s294 = scalar_select %p293, %s23, 1
      %p295 = scmp.lt.s32.totalorder %s292, 15
      %s296 = scalar_select %p295, %s292, 15
      %s297 = smul.addr %s296, 2
      %s298 = smul.addr %s294, 32
      %s299 = sadd.s32 %s297, %s298
      %s300 = smul.addr %s299, 8
      %s301 = scalar_lea.vmem %s8, %s300
      %s302 = smul.u32 8, %s24
      %p303 = scmp.lt.s32.totalorder %s23, 1
      %s304 = scalar_select %p303, %s23, 1
      %p305 = scmp.lt.s32.totalorder %s302, 15
      %s306 = scalar_select %p305, %s302, 15
      %s307 = smul.addr %s306, 2
      %s308 = smul.addr %s304, 32
      %s309 = sadd.s32 %s307, %s308
      %s310 = smul.addr %s309, 8
      %s311 = scalar_lea.vmem %s0, %s310
      %s312 = smul.u32 8, %s24
      %s313 = smul.u32 8, %s24
      %p314 = scmp.lt.s32.totalorder %s23, 1
      %s315 = scalar_select %p314, %s23, 1
      %p316 = scmp.lt.s32.totalorder %s313, 15
      %s317 = scalar_select %p316, %s313, 15
      %s318 = smul.addr %s317, 2
      %s319 = smul.addr %s315, 32
      %s320 = sadd.s32 %s318, %s319
      %s321 = smul.addr %s320, 8
      %s322 = scalar_lea.vmem %s8, %s321
      %s323 = smul.u32 8, %s24
      %s325 = smul.u32 %s24, 8
      %s326 = ssub.s32 %s325, 1
      %p327 = scmp.gt.s32.totalorder %s326, 0
      %s328 = scalar_select %p327, %s326, 0
      %s329 = sadd.s32 %s325, 8
      %p330 = scmp.lt.s32.totalorder %s329, 15
      %s331 = scalar_select %p330, %s329, 15
      %s332 = smul.u32 %s328, 16
      %s333 = smul.u32 %s23, 256
      %s334 = sadd.s32 %s332, %s333
      %s335 = scalar_lea.vmem %s1, %s334
      %p337 = scmp.lt.u32.totalorder 16, 8
      %p338 = pneg %p337
      // Predicated region
      $region49: #{bottleneck_forward.1} parent=47 // pred_check
        _
      $region50: #{bottleneck_forward.1} parent=47 // pred_check_branch
        %340 = sbr.rel (%p337) target = $region52
      $region51: #{bottleneck_forward.1} parent=47 // pred_region
        %s355 = sand.u32 16, 7
        %p356 = scmp.eq.s32.totalorder %s355, 0
        // Predicated region
        $region64: #{bottleneck_forward.1} parent=51 // pred_check
          %p357 = pneg %p356
        $region65: #{bottleneck_forward.1} parent=51 // pred_check_branch
          %359 = sbr.rel (%p357) target = $region67
        $region66: #{bottleneck_forward.1} parent=51 // pred_region
          loop: start=0, step=1, limit=1
          $region68: #{bottleneck_forward.1} parent=66 // loop_pre_header
            _
          $region69: #{bottleneck_forward.1} parent=66 // loop_header
            %s361 = sphi 0, %s365
            %p362 = scmp.ge.s32.totalorder %s361, 1
            %s366 = sphi %s335, %s335
            %s367 = sphi [#allocation2], [#allocation2]
          $region70: #{bottleneck_forward.1} parent=66 // loop_header_branch
            %364 = sbr.rel (%p362) target = $region74
          $region71: #{bottleneck_forward.1} parent=66 // loop_body
            %v368 = vld [vmem:[%s366] sm:$0xff]
            %369 = vst [vmem:[%s367] sm:$0xff] %v368
            %v370 = vld [vmem:[%s366 + $0x8] sm:$0xff]
            %371 = vst [vmem:[%s367 + $0x8] sm:$0xff] %v370
          $region72: #{bottleneck_forward.1} parent=66 // loop_footer
            %s365 = sadd.s32 1, %s361
          $region73: #{bottleneck_forward.1} parent=66 // loop_footer_branch
            %360 = sbr.rel target = $region69
          $region74: #{bottleneck_forward.1} parent=66 // loop_exit
            _
        $region67: #{bottleneck_forward.1} parent=51 // pred_fallthru
          _
        %p372 = pneg %p356
        // Predicated region
        $region75: #{bottleneck_forward.1} parent=51 // pred_check
          _
        $region76: #{bottleneck_forward.1} parent=51 // pred_check_branch
          %374 = sbr.rel (%p356) target = $region78
        $region77: #{bottleneck_forward.1} parent=51 // pred_region
          %s375 = sand.u32 16, 7
        $region78: #{bottleneck_forward.1} parent=51 // pred_fallthru
          _
      $region52: #{bottleneck_forward.1} parent=47 // pred_fallthru
        _
      // Predicated region
      $region53: #{bottleneck_forward.1} parent=47 // pred_check
        %p341 = pneg %p337
      $region54: #{bottleneck_forward.1} parent=47 // pred_check_branch
        %343 = sbr.rel (%p341) target = $region56
      $region55: #{bottleneck_forward.1} parent=47 // pred_region
        %s344 = sshllo.u32 0, 16
        loop: start=0, step=1, limit=1
        $region57: #{bottleneck_forward.1} parent=55 // loop_pre_header
          _
        $region58: #{bottleneck_forward.1} parent=55 // loop_header
          %s346 = sphi 0, %s350
          %p347 = scmp.ge.s32.totalorder %s346, 1
          %s351 = sphi %s335, %s335
          %s352 = sphi [#allocation2], [#allocation2]
        $region59: #{bottleneck_forward.1} parent=55 // loop_header_branch
          %349 = sbr.rel (%p347) target = $region63
        $region60: #{bottleneck_forward.1} parent=55 // loop_body
          %v353 = vld [vmem:[%s351] sm:%s344]
          %354 = vst [vmem:[%s352] sm:%s344] %v353
        $region61: #{bottleneck_forward.1} parent=55 // loop_footer
          %s350 = sadd.s32 1, %s346
        $region62: #{bottleneck_forward.1} parent=55 // loop_footer_branch
          %345 = sbr.rel target = $region58
        $region63: #{bottleneck_forward.1} parent=55 // loop_exit
          _
      $region56: #{bottleneck_forward.1} parent=47 // pred_fallthru
        _
      // Predicated region
      $region79: #{bottleneck_forward.1} parent=47 // pred_check
        _
      $region80: #{bottleneck_forward.1} parent=47 // pred_check_branch
        %378 = sbr.rel (0) target = $region82
      $region81: #{bottleneck_forward.1} parent=47 // pred_region
        %379 = vsyncadd [#allocation5], 256
      $region82: #{bottleneck_forward.1} parent=47 // pred_fallthru
        _
      %s380 = smul.u32 %s331, 16
      %s381 = sadd.s32 %s380, %s333
      %s382 = scalar_lea.vmem %s1, %s381
      %s383 = scalar_lea.vmem [#allocation2], 16
      %s384 = scalar_lea.sflag [#allocation5], 1
      %p386 = scmp.lt.u32.totalorder 16, 8
      %p387 = pneg %p386
      // Predicated region
      $region83: #{bottleneck_forward.1} parent=47 // pred_check
        _
      $region84: #{bottleneck_forward.1} parent=47 // pred_check_branch
        %389 = sbr.rel (%p386) target = $region86
      $region85: #{bottleneck_forward.1} parent=47 // pred_region
        %s404 = sand.u32 16, 7
        %p405 = scmp.eq.s32.totalorder %s404, 0
        // Predicated region
        $region98: #{bottleneck_forward.1} parent=85 // pred_check
          %p406 = pneg %p405
        $region99: #{bottleneck_forward.1} parent=85 // pred_check_branch
          %408 = sbr.rel (%p406) target = $region101
        $region100: #{bottleneck_forward.1} parent=85 // pred_region
          loop: start=0, step=1, limit=1
          $region102: #{bottleneck_forward.1} parent=100 // loop_pre_header
            _
          $region103: #{bottleneck_forward.1} parent=100 // loop_header
            %s410 = sphi 0, %s414
            %p411 = scmp.ge.s32.totalorder %s410, 1
            %s415 = sphi %s382, %s382
            %s416 = sphi %s383, %s383
          $region104: #{bottleneck_forward.1} parent=100 // loop_header_branch
            %413 = sbr.rel (%p411) target = $region108
          $region105: #{bottleneck_forward.1} parent=100 // loop_body
            %v417 = vld [vmem:[%s415] sm:$0xff]
            %418 = vst [vmem:[%s416] sm:$0xff] %v417
            %v419 = vld [vmem:[%s415 + $0x8] sm:$0xff]
            %420 = vst [vmem:[%s416 + $0x8] sm:$0xff] %v419
          $region106: #{bottleneck_forward.1} parent=100 // loop_footer
            %s414 = sadd.s32 1, %s410
          $region107: #{bottleneck_forward.1} parent=100 // loop_footer_branch
            %409 = sbr.rel target = $region103
          $region108: #{bottleneck_forward.1} parent=100 // loop_exit
            _
        $region101: #{bottleneck_forward.1} parent=85 // pred_fallthru
          _
        %p421 = pneg %p405
        // Predicated region
        $region109: #{bottleneck_forward.1} parent=85 // pred_check
          _
        $region110: #{bottleneck_forward.1} parent=85 // pred_check_branch
          %423 = sbr.rel (%p405) target = $region112
        $region111: #{bottleneck_forward.1} parent=85 // pred_region
          %s424 = sand.u32 16, 7
        $region112: #{bottleneck_forward.1} parent=85 // pred_fallthru
          _
      $region86: #{bottleneck_forward.1} parent=47 // pred_fallthru
        _
      // Predicated region
      $region87: #{bottleneck_forward.1} parent=47 // pred_check
        %p390 = pneg %p386
      $region88: #{bottleneck_forward.1} parent=47 // pred_check_branch
        %392 = sbr.rel (%p390) target = $region90
      $region89: #{bottleneck_forward.1} parent=47 // pred_region
        %s393 = sshllo.u32 0, 16
        loop: start=0, step=1, limit=1
        $region91: #{bottleneck_forward.1} parent=89 // loop_pre_header
          _
        $region92: #{bottleneck_forward.1} parent=89 // loop_header
          %s395 = sphi 0, %s399
          %p396 = scmp.ge.s32.totalorder %s395, 1
          %s400 = sphi %s382, %s382
          %s401 = sphi %s383, %s383
        $region93: #{bottleneck_forward.1} parent=89 // loop_header_branch
          %398 = sbr.rel (%p396) target = $region97
        $region94: #{bottleneck_forward.1} parent=89 // loop_body
          %v402 = vld [vmem:[%s400] sm:%s393]
          %403 = vst [vmem:[%s401] sm:%s393] %v402
        $region95: #{bottleneck_forward.1} parent=89 // loop_footer
          %s399 = sadd.s32 1, %s395
        $region96: #{bottleneck_forward.1} parent=89 // loop_footer_branch
          %394 = sbr.rel target = $region92
        $region97: #{bottleneck_forward.1} parent=89 // loop_exit
          _
      $region90: #{bottleneck_forward.1} parent=47 // pred_fallthru
        _
      // Predicated region
      $region113: #{bottleneck_forward.1} parent=47 // pred_check
        _
      $region114: #{bottleneck_forward.1} parent=47 // pred_check_branch
        %427 = sbr.rel (0) target = $region116
      $region115: #{bottleneck_forward.1} parent=47 // pred_region
        %428 = vsyncadd %s384, 256
      $region116: #{bottleneck_forward.1} parent=47 // pred_fallthru
        _
      %vm429 = vcmask 31744
      %430 = vst.msk [vmem:[#allocation3] sm:$0xff] %vm429, 0.0
      %431 = vst.msk [vmem:[#allocation3 + $0x8] sm:$0xff] %vm429, 0.0
      %vm432 = vcmask 25600
      %433 = vst.msk [vmem:[#allocation3 + $0x10] sm:$0x3] %vm432, 0.0
      %434 = vst.msk [vmem:[#allocation3 + $0x18] sm:$0xff] %vm429, 0.0
      %435 = vst.msk [vmem:[#allocation3 + $0x20] sm:$0xff] %vm429, 0.0
      %436 = vst.msk [vmem:[#allocation3 + $0x28] sm:$0x3] %vm432, 0.0
      %437 = vst.msk [vmem:[#allocation3 + $0x30] sm:$0xff] %vm429, 0.0
      %438 = vst.msk [vmem:[#allocation3 + $0x38] sm:$0xff] %vm429, 0.0
      %439 = vst.msk [vmem:[#allocation3 + $0x40] sm:$0x3] %vm432, 0.0
      %440 = vst.msk [vmem:[#allocation3 + $0x48] sm:$0xff] %vm429, 0.0
      %441 = vst.msk [vmem:[#allocation3 + $0x50] sm:$0xff] %vm429, 0.0
      %442 = vst.msk [vmem:[#allocation3 + $0x58] sm:$0x3] %vm432, 0.0
      %443 = vst.msk [vmem:[#allocation3 + $0x60] sm:$0xff] %vm429, 0.0
      %444 = vst.msk [vmem:[#allocation3 + $0x68] sm:$0xff] %vm429, 0.0
      %445 = vst.msk [vmem:[#allocation3 + $0x70] sm:$0x3] %vm432, 0.0
      %446 = vst.msk [vmem:[#allocation3 + $0x78] sm:$0xff] %vm429, 0.0
      %447 = vst.msk [vmem:[#allocation3 + $0x80] sm:$0xff] %vm429, 0.0
      %448 = vst.msk [vmem:[#allocation3 + $0x88] sm:$0x3] %vm432, 0.0
      %449 = vst.msk [vmem:[#allocation3 + $0x90] sm:$0xff] %vm429, 0.0
      %450 = vst.msk [vmem:[#allocation3 + $0x98] sm:$0xff] %vm429, 0.0
      %451 = vst.msk [vmem:[#allocation3 + $0xa0] sm:$0x3] %vm432, 0.0
      %452 = vst.msk [vmem:[#allocation3 + $0xa8] sm:$0xff] %vm429, 0.0
      %453 = vst.msk [vmem:[#allocation3 + $0xb0] sm:$0xff] %vm429, 0.0
      %454 = vst.msk [vmem:[#allocation3 + $0xb8] sm:$0x3] %vm432, 0.0
      %455 = vst.msk [vmem:[#allocation3 + $0xc0] sm:$0xff] %vm429, 0.0
      %456 = vst.msk [vmem:[#allocation3 + $0xc8] sm:$0xff] %vm429, 0.0
      %457 = vst.msk [vmem:[#allocation3 + $0xd0] sm:$0x3] %vm432, 0.0
      %458 = vst.msk [vmem:[#allocation3 + $0xd8] sm:$0xff] %vm429, 0.0
      %459 = vst.msk [vmem:[#allocation3 + $0xe0] sm:$0xff] %vm429, 0.0
      %460 = vst.msk [vmem:[#allocation3 + $0xe8] sm:$0x3] %vm432, 0.0
      %v461 = vld [vmem:[%s311] sm:$0xff]
      %v462 = vld [vmem:[%s311 + $0x8] sm:$0xff]
      %v463 = vld [vmem:[%s311 + $0x10] sm:$0xff]
      %v464 = vld [vmem:[%s311 + $0x18] sm:$0xff]
      %v465 = vld [vmem:[%s311 + $0x20] sm:$0xff]
      %v466 = vld [vmem:[%s311 + $0x28] sm:$0xff]
      %v467 = vld [vmem:[%s311 + $0x30] sm:$0xff]
      %v468 = vld [vmem:[%s311 + $0x38] sm:$0xff]
      %v469 = vld [vmem:[%s311 + $0x40] sm:$0xff]
      %v470 = vld [vmem:[%s311 + $0x48] sm:$0xff]
      %v471 = vld [vmem:[%s311 + $0x50] sm:$0xff]
      %v472 = vld [vmem:[%s311 + $0x58] sm:$0xff]
      %v473 = vld [vmem:[%s311 + $0x60] sm:$0xff]
      %v474 = vld [vmem:[%s311 + $0x68] sm:$0xff]
      %v475 = vld [vmem:[%s311 + $0x70] sm:$0xff]
      %v476 = vld [vmem:[%s311 + $0x78] sm:$0xff]
      %v477 = vpack.c.bf16 %v462, %v461
      %v478 = vpack.c.bf16 %v464, %v463
      %v479 = vpack.c.bf16 %v466, %v465
      %v480 = vpack.c.bf16 %v468, %v467
      %v481 = vpack.c.bf16 %v470, %v469
      %v482 = vpack.c.bf16 %v472, %v471
      %v483 = vpack.c.bf16 %v474, %v473
      %v484 = vpack.c.bf16 %v476, %v475
      %v485 = vld [vmem:[%s2] sm:$0xf]
      %v486 = vld [vmem:[%s2 + $0x4] sm:$0xf]
      %v487 = vld [vmem:[%s3] sm:$0x1]
      %v489 = vlaneseq
      %v490 = vshrl.u32 %v489, 7
      %v491 = vsub.s32 0, %v490
      %v492 = vrot.slane %v487, %v491
      %v496 = vunpack.c.l.b16 %v485
      %v497 = vunpack.c.l.b16 %v486
      %v498 = vpack.c.b16 %v497, %v496
      %vm500 = vcmask 130048
      %v502 = vsel %vm500, %v477, 0
      %v505 = vsel %vm500, %v478, 0
      %v508 = vsel %vm500, %v479, 0
      %v511 = vsel %vm500, %v480, 0
      %v514 = vsel %vm500, %v481, 0
      %v517 = vsel %vm500, %v482, 0
      %v520 = vsel %vm500, %v483, 0
      %v523 = vsel %vm500, %v484, 0
      %525 = vmatprep.subr.bf16.mxu0 0
      %526 = vmatpush1.bf16.msra.mxu0 %v498
      %527 = vmatprep.subr.bf16.mxu0 0
      %528 = vmatpush1.bf16.msra.mxu0 0
      %529 = vmatprep.subr.bf16.mxu0 0
      %530 = vmatpush1.bf16.msra.mxu0 0
      %531 = vmatprep.subr.bf16.mxu0 0
      %532 = vmatpush1.bf16.msra.mxu0 0
      %533 = vmatprep.subr.bf16.mxu0 0
      %534 = vmatpush1.bf16.msra.mxu0 0
      %535 = vmatprep.subr.bf16.mxu0 0
      %536 = vmatpush1.bf16.msra.mxu0 0
      %537 = vmatprep.subr.bf16.mxu0 0
      %538 = vmatpush1.bf16.msra.mxu0 0
      %539 = vmatprep.subr.bf16.mxu0 0
      %540 = vmatpush1.bf16.msra.mxu0 0
      %541 = vmatprep.subr.bf16.mxu0 0
      %542 = vmatpush1.bf16.msra.mxu0 0
      %543 = vmatprep.subr.bf16.mxu0 0
      %544 = vmatpush1.bf16.msra.mxu0 0
      %545 = vmatprep.subr.bf16.mxu0 0
      %546 = vmatpush1.bf16.msra.mxu0 0
      %547 = vmatprep.subr.bf16.mxu0 0
      %548 = vmatpush1.bf16.msra.mxu0 0
      %549 = vmatprep.subr.bf16.mxu0 0
      %550 = vmatpush1.bf16.msra.mxu0 0
      %551 = vmatprep.subr.bf16.mxu0 0
      %552 = vmatpush1.bf16.msra.mxu0 0
      %553 = vmatprep.subr.bf16.mxu0 0
      %554 = vmatpush1.bf16.msra.mxu0 0
      %555 = vmatprep.subr.bf16.mxu0 0
      %556 = vmatpush1.bf16.msra.mxu0 0
      %557 = vmatprep.mubr.bf16.mxu0 0
      %558 = vmatmul.mubr.bf16.gmra.mrb[0].mxu0 %v502
      %v559 = vpop.f32.mrb[0].mxu0
      %v560 = vadd.f32 %v492, %v559
      %v561 = vpop.f32.mrb[0].mxu0
      %v562 = vpop.f32.mrb[0].mxu0
      %v563 = vadd.f32 %v492, %v562
      %v564 = vpop.f32.mrb[0].mxu0
      %565 = vmatprep.mubr.bf16.mxu0 0
      %566 = vmatmul.mubr.bf16.gmra.mrb[0].mxu0 %v505
      %v567 = vpop.f32.mrb[0].mxu0
      %v568 = vadd.f32 %v492, %v567
      %v569 = vpop.f32.mrb[0].mxu0
      %v570 = vpop.f32.mrb[0].mxu0
      %v571 = vadd.f32 %v492, %v570
      %v572 = vpop.f32.mrb[0].mxu0
      %573 = vmatprep.mubr.bf16.mxu0 0
      %574 = vmatmul.mubr.bf16.gmra.mrb[0].mxu0 %v508
      %v575 = vpop.f32.mrb[0].mxu0
      %v576 = vadd.f32 %v492, %v575
      %v577 = vpop.f32.mrb[0].mxu0
      %v578 = vpop.f32.mrb[0].mxu0
      %v579 = vadd.f32 %v492, %v578
      %v580 = vpop.f32.mrb[0].mxu0
      %581 = vmatprep.mubr.bf16.mxu0 0
      %582 = vmatmul.mubr.bf16.gmra.mrb[0].mxu0 %v511
      %v583 = vpop.f32.mrb[0].mxu0
      %v584 = vadd.f32 %v492, %v583
      %v585 = vpop.f32.mrb[0].mxu0
      %v586 = vpop.f32.mrb[0].mxu0
      %v587 = vadd.f32 %v492, %v586
      %v588 = vpop.f32.mrb[0].mxu0
      %589 = vmatprep.mubr.bf16.mxu0 0
      %590 = vmatmul.mubr.bf16.gmra.mrb[0].mxu0 %v514
      %v591 = vpop.f32.mrb[0].mxu0
      %v592 = vadd.f32 %v492, %v591
      %v593 = vpop.f32.mrb[0].mxu0
      %v594 = vpop.f32.mrb[0].mxu0
      %v595 = vadd.f32 %v492, %v594
      %v596 = vpop.f32.mrb[0].mxu0
      %597 = vmatprep.mubr.bf16.mxu0 0
      %598 = vmatmul.mubr.bf16.gmra.mrb[0].mxu0 %v517
      %v599 = vpop.f32.mrb[0].mxu0
      %v600 = vadd.f32 %v492, %v599
      %v601 = vpop.f32.mrb[0].mxu0
      %v602 = vpop.f32.mrb[0].mxu0
      %v603 = vadd.f32 %v492, %v602
      %v604 = vpop.f32.mrb[0].mxu0
      %605 = vmatprep.mubr.bf16.mxu0 0
      %606 = vmatmul.mubr.bf16.gmra.mrb[0].mxu0 %v520
      %v607 = vpop.f32.mrb[0].mxu0
      %v608 = vadd.f32 %v492, %v607
      %v609 = vpop.f32.mrb[0].mxu0
      %v610 = vpop.f32.mrb[0].mxu0
      %v611 = vadd.f32 %v492, %v610
      %v612 = vpop.f32.mrb[0].mxu0
      %613 = vmatprep.mubr.bf16.mxu0 0
      %614 = vmatmul.mubr.bf16.gmra.mrb[0].mxu0 %v523
      %v615 = vpop.f32.mrb[0].mxu0
      %v616 = vadd.f32 %v492, %v615
      %v617 = vpop.f32.mrb[0].mxu0
      %v618 = vpop.f32.mrb[0].mxu0
      %v619 = vadd.f32 %v492, %v618
      %v620 = vpop.f32.mrb[0].mxu0
      %621 = vdwg.mxu0
      %v622 = vmax.f32 %v560, 0.0
      %v623 = vmax.f32 %v563, 0.0
      %v624 = vmax.f32 %v568, 0.0
      %v625 = vmax.f32 %v571, 0.0
      %v626 = vmax.f32 %v576, 0.0
      %v627 = vmax.f32 %v579, 0.0
      %v628 = vmax.f32 %v584, 0.0
      %v629 = vmax.f32 %v587, 0.0
      %v630 = vmax.f32 %v592, 0.0
      %v631 = vmax.f32 %v595, 0.0
      %v632 = vmax.f32 %v600, 0.0
      %v633 = vmax.f32 %v603, 0.0
      %v634 = vmax.f32 %v608, 0.0
      %v635 = vmax.f32 %v611, 0.0
      %v636 = vmax.f32 %v616, 0.0
      %v637 = vmax.f32 %v619, 0.0
      %s638 = scalar_lea.vmem [#allocation3], 24
      %639 = vst.msk [vmem:[%s638 + $0x1] sm:$0xff] %vm429, %v622
      %640 = vst.msk [vmem:[%s638 + $0x9] sm:$0xff] %vm429, %v623
      %641 = vst.msk [vmem:[%s638 + $0x19] sm:$0xff] %vm429, %v624
      %642 = vst.msk [vmem:[%s638 + $0x21] sm:$0xff] %vm429, %v625
      %643 = vst.msk [vmem:[%s638 + $0x31] sm:$0xff] %vm429, %v626
      %644 = vst.msk [vmem:[%s638 + $0x39] sm:$0xff] %vm429, %v627
      %645 = vst.msk [vmem:[%s638 + $0x49] sm:$0xff] %vm429, %v628
      %646 = vst.msk [vmem:[%s638 + $0x51] sm:$0xff] %vm429, %v629
      %647 = vst.msk [vmem:[%s638 + $0x61] sm:$0xff] %vm429, %v630
      %648 = vst.msk [vmem:[%s638 + $0x69] sm:$0xff] %vm429, %v631
      %649 = vst.msk [vmem:[%s638 + $0x79] sm:$0xff] %vm429, %v632
      %650 = vst.msk [vmem:[%s638 + $0x81] sm:$0xff] %vm429, %v633
      %651 = vst.msk [vmem:[%s638 + $0x91] sm:$0xff] %vm429, %v634
      %652 = vst.msk [vmem:[%s638 + $0x99] sm:$0xff] %vm429, %v635
      %653 = vst.msk [vmem:[%s638 + $0xa9] sm:$0xff] %vm429, %v636
      %654 = vst.msk [vmem:[%s638 + $0xb1] sm:$0xff] %vm429, %v637
      %s655 = smul.u32 1, 16
      %s656 = smul.u32 %s655, 1
      %s657 = sshll.u32 %s656, 4
      %658 = dma.done [#allocation5], %s657
      %s659 = sshll.u32 %s656, 4
      %660 = dma.done %s384, %s659
      %v661 = vld [vmem:[#allocation2] sm:$0xff]
      %v662 = vld [vmem:[#allocation2 + $0x8] sm:$0xff]
      %v663 = vld [vmem:[#allocation2 + $0x10] sm:$0xff]
      %v664 = vld [vmem:[#allocation2 + $0x18] sm:$0xff]
      %v665 = vpack.c.bf16 %v662, %v661
      %v666 = vpack.c.bf16 %v664, %v663
      %v667 = vld [vmem:[%s2] sm:$0xf]
      %v668 = vld [vmem:[%s2 + $0x4] sm:$0xf]
      %v669 = vld [vmem:[%s3] sm:$0x1]
      %v671 = vlaneseq
      %v672 = vshrl.u32 %v671, 7
      %v673 = vsub.s32 0, %v672
      %v674 = vrot.slane %v669, %v673
      %v678 = vunpack.c.l.b16 %v667
      %v679 = vunpack.c.l.b16 %v668
      %v680 = vpack.c.b16 %v679, %v678
      %v683 = vsel %vm500, %v665, 0
      %v686 = vsel %vm500, %v666, 0
      %688 = vmatprep.subr.bf16.mxu0 0
      %689 = vmatpush1.bf16.msra.mxu0 %v680
      %690 = vmatprep.subr.bf16.mxu0 0
      %691 = vmatpush1.bf16.msra.mxu0 0
      %692 = vmatprep.subr.bf16.mxu0 0
      %693 = vmatpush1.bf16.msra.mxu0 0
      %694 = vmatprep.subr.bf16.mxu0 0
      %695 = vmatpush1.bf16.msra.mxu0 0
      %696 = vmatprep.subr.bf16.mxu0 0
      %697 = vmatpush1.bf16.msra.mxu0 0
      %698 = vmatprep.subr.bf16.mxu0 0
      %699 = vmatpush1.bf16.msra.mxu0 0
      %700 = vmatprep.subr.bf16.mxu0 0
      %701 = vmatpush1.bf16.msra.mxu0 0
      %702 = vmatprep.subr.bf16.mxu0 0
      %703 = vmatpush1.bf16.msra.mxu0 0
      %704 = vmatprep.subr.bf16.mxu0 0
      %705 = vmatpush1.bf16.msra.mxu0 0
      %706 = vmatprep.subr.bf16.mxu0 0
      %707 = vmatpush1.bf16.msra.mxu0 0
      %708 = vmatprep.subr.bf16.mxu0 0
      %709 = vmatpush1.bf16.msra.mxu0 0
      %710 = vmatprep.subr.bf16.mxu0 0
      %711 = vmatpush1.bf16.msra.mxu0 0
      %712 = vmatprep.subr.bf16.mxu0 0
      %713 = vmatpush1.bf16.msra.mxu0 0
      %714 = vmatprep.subr.bf16.mxu0 0
      %715 = vmatpush1.bf16.msra.mxu0 0
      %716 = vmatprep.subr.bf16.mxu0 0
      %717 = vmatpush1.bf16.msra.mxu0 0
      %718 = vmatprep.subr.bf16.mxu0 0
      %719 = vmatpush1.bf16.msra.mxu0 0
      %720 = vmatprep.mubr.bf16.mxu0 0
      %721 = vmatmul.mubr.bf16.gmra.mrb[0].mxu0 %v683
      %v722 = vpop.f32.mrb[0].mxu0
      %v723 = vadd.f32 %v674, %v722
      %v724 = vpop.f32.mrb[0].mxu0
      %v725 = vpop.f32.mrb[0].mxu0
      %v726 = vadd.f32 %v674, %v725
      %v727 = vpop.f32.mrb[0].mxu0
      %728 = vmatprep.mubr.bf16.mxu0 0
      %729 = vmatmul.mubr.bf16.gmra.mrb[0].mxu0 %v686
      %v730 = vpop.f32.mrb[0].mxu0
      %v731 = vadd.f32 %v674, %v730
      %v732 = vpop.f32.mrb[0].mxu0
      %v733 = vpop.f32.mrb[0].mxu0
      %v734 = vadd.f32 %v674, %v733
      %v735 = vpop.f32.mrb[0].mxu0
      %736 = vdwg.mxu0
      %v737 = vmax.f32 %v723, 0.0
      %v738 = vmax.f32 %v726, 0.0
      %v739 = vmax.f32 %v731, 0.0
      %v740 = vmax.f32 %v734, 0.0
      %741 = vst.msk [vmem:[#allocation3 + $0x1] sm:$0xff] %vm429, %v737
      %742 = vst.msk [vmem:[#allocation3 + $0x9] sm:$0xff] %vm429, %v738
      %s743 = scalar_lea.vmem [#allocation3], 216
      %744 = vst.msk [vmem:[%s743 + $0x1] sm:$0xff] %vm429, %v739
      %745 = vst.msk [vmem:[%s743 + $0x9] sm:$0xff] %vm429, %v740
      %p746 = scmp.eq.s32.totalorder %s24, 0
      // Predicated region
      $region117: #{bottleneck_forward.1} parent=47 // pred_check
        %p747 = pneg %p746
      $region118: #{bottleneck_forward.1} parent=47 // pred_check_branch
        %749 = sbr.rel (%p747) target = $region120
      $region119: #{bottleneck_forward.1} parent=47 // pred_region
        %750 = vst.msk [vmem:[#allocation3] sm:$0xff] %vm429, 0.0
        %751 = vst.msk [vmem:[#allocation3 + $0x8] sm:$0xff] %vm429, 0.0
        %752 = vst.msk [vmem:[#allocation3 + $0x10] sm:$0x3] %vm432, 0.0
      $region120: #{bottleneck_forward.1} parent=47 // pred_fallthru
        _
      %p753 = scmp.eq.s32.totalorder %s24, 1
      // Predicated region
      $region121: #{bottleneck_forward.1} parent=47 // pred_check
        %p754 = pneg %p753
      $region122: #{bottleneck_forward.1} parent=47 // pred_check_branch
        %756 = sbr.rel (%p754) target = $region124
      $region123: #{bottleneck_forward.1} parent=47 // pred_region
        %757 = vst.msk [vmem:[%s743] sm:$0xff] %vm429, 0.0
        %758 = vst.msk [vmem:[%s743 + $0x8] sm:$0xff] %vm429, 0.0
        %759 = vst.msk [vmem:[%s743 + $0x10] sm:$0x3] %vm432, 0.0
      $region124: #{bottleneck_forward.1} parent=47 // pred_fallthru
        _
      %760 = vst.msk [vmem:[#allocation4] sm:$0xff] %vm429, 0.0
      %761 = vst.msk [vmem:[#allocation4 + $0x8] sm:$0xff] %vm429, 0.0
      %762 = vst.msk [vmem:[#allocation4 + $0x10] sm:$0xff] %vm429, 0.0
      %763 = vst.msk [vmem:[#allocation4 + $0x18] sm:$0xff] %vm429, 0.0
      %764 = vst.msk [vmem:[#allocation4 + $0x20] sm:$0xff] %vm429, 0.0
      %765 = vst.msk [vmem:[#allocation4 + $0x28] sm:$0xff] %vm429, 0.0
      %766 = vst.msk [vmem:[#allocation4 + $0x30] sm:$0xff] %vm429, 0.0
      %767 = vst.msk [vmem:[#allocation4 + $0x38] sm:$0xff] %vm429, 0.0
      %768 = vst.msk [vmem:[#allocation4 + $0x40] sm:$0xff] %vm429, 0.0
      %769 = vst.msk [vmem:[#allocation4 + $0x48] sm:$0xff] %vm429, 0.0
      %770 = vst.msk [vmem:[#allocation4 + $0x50] sm:$0xff] %vm429, 0.0
      %771 = vst.msk [vmem:[#allocation4 + $0x58] sm:$0xff] %vm429, 0.0
      %772 = vst.msk [vmem:[#allocation4 + $0x60] sm:$0xff] %vm429, 0.0
      %773 = vst.msk [vmem:[#allocation4 + $0x68] sm:$0xff] %vm429, 0.0
      %774 = vst.msk [vmem:[#allocation4 + $0x70] sm:$0xff] %vm429, 0.0
      %775 = vst.msk [vmem:[#allocation4 + $0x78] sm:$0xff] %vm429, 0.0
      %v776 = vld [vmem:[#allocation3] sm:$0xff]
      %v777 = vld [vmem:[#allocation3 + $0x8] sm:$0xff]
      %v778 = vld [vmem:[#allocation3 + $0x18] sm:$0xff]
      %v779 = vld [vmem:[#allocation3 + $0x20] sm:$0xff]
      %v780 = vld [vmem:[#allocation3 + $0x30] sm:$0xff]
      %v781 = vld [vmem:[#allocation3 + $0x38] sm:$0xff]
      %v782 = vld [vmem:[#allocation3 + $0x48] sm:$0xff]
      %v783 = vld [vmem:[#allocation3 + $0x50] sm:$0xff]
      %v784 = vld [vmem:[#allocation3 + $0x60] sm:$0xff]
      %v785 = vld [vmem:[#allocation3 + $0x68] sm:$0xff]
      %v786 = vld [vmem:[#allocation3 + $0x78] sm:$0xff]
      %v787 = vld [vmem:[#allocation3 + $0x80] sm:$0xff]
      %v788 = vld [vmem:[#allocation3 + $0x90] sm:$0xff]
      %v789 = vld [vmem:[#allocation3 + $0x98] sm:$0xff]
      %v790 = vld [vmem:[#allocation3 + $0xa8] sm:$0xff]
      %v791 = vld [vmem:[#allocation3 + $0xb0] sm:$0xff]
      %v792 = vld [vmem:[#allocation4] sm:$0xff]
      %v793 = vld [vmem:[#allocation4 + $0x8] sm:$0xff]
      %v794 = vld [vmem:[#allocation4 + $0x10] sm:$0xff]
      %v795 = vld [vmem:[#allocation4 + $0x18] sm:$0xff]
      %v796 = vld [vmem:[#allocation4 + $0x20] sm:$0xff]
      %v797 = vld [vmem:[#allocation4 + $0x28] sm:$0xff]
      %v798 = vld [vmem:[#allocation4 + $0x30] sm:$0xff]
      %v799 = vld [vmem:[#allocation4 + $0x38] sm:$0xff]
      %v800 = vld [vmem:[#allocation4 + $0x40] sm:$0xff]
      %v801 = vld [vmem:[#allocation4 + $0x48] sm:$0xff]
      %v802 = vld [vmem:[#allocation4 + $0x50] sm:$0xff]
      %v803 = vld [vmem:[#allocation4 + $0x58] sm:$0xff]
      %v804 = vld [vmem:[#allocation4 + $0x60] sm:$0xff]
      %v805 = vld [vmem:[#allocation4 + $0x68] sm:$0xff]
      %v806 = vld [vmem:[#allocation4 + $0x70] sm:$0xff]
      %v807 = vld [vmem:[#allocation4 + $0x78] sm:$0xff]
      %v808 = vpack.c.bf16 %v777, %v776
      %v809 = vpack.c.bf16 %v779, %v778
      %v810 = vpack.c.bf16 %v781, %v780
      %v811 = vpack.c.bf16 %v783, %v782
      %v812 = vpack.c.bf16 %v785, %v784
      %v813 = vpack.c.bf16 %v787, %v786
      %v814 = vpack.c.bf16 %v789, %v788
      %v815 = vpack.c.bf16 %v791, %v790
      %v816 = vld [vmem:[%s4] sm:$0x3]
      %v818 = vsel %vm429, %v808, 0
      %v821 = vsel %vm429, %v809, 0
      %v824 = vsel %vm429, %v810, 0
      %v827 = vsel %vm429, %v811, 0
      %v830 = vsel %vm429, %v812, 0
      %v833 = vsel %vm429, %v813, 0
      %v836 = vsel %vm429, %v814, 0
      %v839 = vsel %vm429, %v815, 0
      %vm841 = vcmask 1041408
      %v843 = vsel %vm841, %v816, 0
      %845 = vmatprep.subr.bf16.mxu0 0
      %846 = vmatpush1.bf16.msra.mxu0 %v843
      %847 = vmatprep.subr.bf16.mxu0 0
      %848 = vmatpush1.bf16.msra.mxu0 0
      %849 = vmatprep.subr.bf16.mxu0 0
      %850 = vmatpush1.bf16.msra.mxu0 0
      %851 = vmatprep.subr.bf16.mxu0 0
      %852 = vmatpush1.bf16.msra.mxu0 0
      %853 = vmatprep.subr.bf16.mxu0 0
      %854 = vmatpush1.bf16.msra.mxu0 0
      %855 = vmatprep.subr.bf16.mxu0 0
      %856 = vmatpush1.bf16.msra.mxu0 0
      %857 = vmatprep.subr.bf16.mxu0 0
      %858 = vmatpush1.bf16.msra.mxu0 0
      %859 = vmatprep.subr.bf16.mxu0 0
      %860 = vmatpush1.bf16.msra.mxu0 0
      %861 = vmatprep.subr.bf16.mxu0 0
      %862 = vmatpush1.bf16.msra.mxu0 0
      %863 = vmatprep.subr.bf16.mxu0 0
      %864 = vmatpush1.bf16.msra.mxu0 0
      %865 = vmatprep.subr.bf16.mxu0 0
      %866 = vmatpush1.bf16.msra.mxu0 0
      %867 = vmatprep.subr.bf16.mxu0 0
      %868 = vmatpush1.bf16.msra.mxu0 0
      %869 = vmatprep.subr.bf16.mxu0 0
      %870 = vmatpush1.bf16.msra.mxu0 0
      %871 = vmatprep.subr.bf16.mxu0 0
      %872 = vmatpush1.bf16.msra.mxu0 0
      %873 = vmatprep.subr.bf16.mxu0 0
      %874 = vmatpush1.bf16.msra.mxu0 0
      %875 = vmatprep.subr.bf16.mxu0 0
      %876 = vmatpush1.bf16.msra.mxu0 0
      %877 = vmatprep.mubr.bf16.mxu0 0
      %878 = vmatmul.mubr.bf16.gmra.mrb[0].mxu0 %v818
      %v879 = vpop.f32.mrb[0].mxu0
      %v880 = vadd.f32 0.0, %v879
      %v881 = vpop.f32.mrb[0].mxu0
      %v882 = vpop.f32.mrb[0].mxu0
      %v883 = vadd.f32 0.0, %v882
      %v884 = vpop.f32.mrb[0].mxu0
      %885 = vmatprep.mubr.bf16.mxu0 0
      %886 = vmatmul.mubr.bf16.gmra.mrb[0].mxu0 %v821
      %v887 = vpop.f32.mrb[0].mxu0
      %v888 = vadd.f32 0.0, %v887
      %v889 = vpop.f32.mrb[0].mxu0
      %v890 = vpop.f32.mrb[0].mxu0
      %v891 = vadd.f32 0.0, %v890
      %v892 = vpop.f32.mrb[0].mxu0
      %893 = vmatprep.mubr.bf16.mxu0 0
      %894 = vmatmul.mubr.bf16.gmra.mrb[0].mxu0 %v824
      %v895 = vpop.f32.mrb[0].mxu0
      %v896 = vadd.f32 0.0, %v895
      %v897 = vpop.f32.mrb[0].mxu0
      %v898 = vpop.f32.mrb[0].mxu0
      %v899 = vadd.f32 0.0, %v898
      %v900 = vpop.f32.mrb[0].mxu0
      %901 = vmatprep.mubr.bf16.mxu0 0
      %902 = vmatmul.mubr.bf16.gmra.mrb[0].mxu0 %v827
      %v903 = vpop.f32.mrb[0].mxu0
      %v904 = vadd.f32 0.0, %v903
      %v905 = vpop.f32.mrb[0].mxu0
      %v906 = vpop.f32.mrb[0].mxu0
      %v907 = vadd.f32 0.0, %v906
      %v908 = vpop.f32.mrb[0].mxu0
      %909 = vmatprep.mubr.bf16.mxu0 0
      %910 = vmatmul.mubr.bf16.gmra.mrb[0].mxu0 %v830
      %v911 = vpop.f32.mrb[0].mxu0
      %v912 = vadd.f32 0.0, %v911
      %v913 = vpop.f32.mrb[0].mxu0
      %v914 = vpop.f32.mrb[0].mxu0
      %v915 = vadd.f32 0.0, %v914
      %v916 = vpop.f32.mrb[0].mxu0
      %917 = vmatprep.mubr.bf16.mxu0 0
      %918 = vmatmul.mubr.bf16.gmra.mrb[0].mxu0 %v833
      %v919 = vpop.f32.mrb[0].mxu0
      %v920 = vadd.f32 0.0, %v919
      %v921 = vpop.f32.mrb[0].mxu0
      %v922 = vpop.f32.mrb[0].mxu0
      %v923 = vadd.f32 0.0, %v922
      %v924 = vpop.f32.mrb[0].mxu0
      %925 = vmatprep.mubr.bf16.mxu0 0
      %926 = vmatmul.mubr.bf16.gmra.mrb[0].mxu0 %v836
      %v927 = vpop.f32.mrb[0].mxu0
      %v928 = vadd.f32 0.0, %v927
      %v929 = vpop.f32.mrb[0].mxu0
      %v930 = vpop.f32.mrb[0].mxu0
      %v931 = vadd.f32 0.0, %v930
      %v932 = vpop.f32.mrb[0].mxu0
      %933 = vmatprep.mubr.bf16.mxu0 0
      %934 = vmatmul.mubr.bf16.gmra.mrb[0].mxu0 %v839
      %v935 = vpop.f32.mrb[0].mxu0
      %v936 = vadd.f32 0.0, %v935
      %v937 = vpop.f32.mrb[0].mxu0
      %v938 = vpop.f32.mrb[0].mxu0
      %v939 = vadd.f32 0.0, %v938
      %v940 = vpop.f32.mrb[0].mxu0
      %941 = vdwg.mxu0
      %v942 = vadd.f32 %v792, %v880
      %v943 = vadd.f32 %v793, %v883
      %v944 = vadd.f32 %v794, %v888
      %v945 = vadd.f32 %v795, %v891
      %v946 = vadd.f32 %v796, %v896
      %v947 = vadd.f32 %v797, %v899
      %v948 = vadd.f32 %v798, %v904
      %v949 = vadd.f32 %v799, %v907
      %v950 = vadd.f32 %v800, %v912
      %v951 = vadd.f32 %v801, %v915
      %v952 = vadd.f32 %v802, %v920
      %v953 = vadd.f32 %v803, %v923
      %v954 = vadd.f32 %v804, %v928
      %v955 = vadd.f32 %v805, %v931
      %v956 = vadd.f32 %v806, %v936
      %v957 = vadd.f32 %v807, %v939
      %958 = vst.msk [vmem:[#allocation4] sm:$0xff] %vm429, %v942
      %959 = vst.msk [vmem:[#allocation4 + $0x8] sm:$0xff] %vm429, %v943
      %960 = vst.msk [vmem:[#allocation4 + $0x10] sm:$0xff] %vm429, %v944
      %961 = vst.msk [vmem:[#allocation4 + $0x18] sm:$0xff] %vm429, %v945
      %962 = vst.msk [vmem:[#allocation4 + $0x20] sm:$0xff] %vm429, %v946
      %963 = vst.msk [vmem:[#allocation4 + $0x28] sm:$0xff] %vm429, %v947
      %964 = vst.msk [vmem:[#allocation4 + $0x30] sm:$0xff] %vm429, %v948
      %965 = vst.msk [vmem:[#allocation4 + $0x38] sm:$0xff] %vm429, %v949
      %966 = vst.msk [vmem:[#allocation4 + $0x40] sm:$0xff] %vm429, %v950
      %967 = vst.msk [vmem:[#allocation4 + $0x48] sm:$0xff] %vm429, %v951
      %968 = vst.msk [vmem:[#allocation4 + $0x50] sm:$0xff] %vm429, %v952
      %969 = vst.msk [vmem:[#allocation4 + $0x58] sm:$0xff] %vm429, %v953
      %970 = vst.msk [vmem:[#allocation4 + $0x60] sm:$0xff] %vm429, %v954
      %971 = vst.msk [vmem:[#allocation4 + $0x68] sm:$0xff] %vm429, %v955
      %972 = vst.msk [vmem:[#allocation4 + $0x70] sm:$0xff] %vm429, %v956
      %973 = vst.msk [vmem:[#allocation4 + $0x78] sm:$0xff] %vm429, %v957
      %v974 = vld [vmem:[#allocation3 + $0x1] sm:$0xff]
      %v975 = vld [vmem:[#allocation3 + $0x9] sm:$0xff]
      %v976 = vld [vmem:[#allocation3 + $0x19] sm:$0xff]
      %v977 = vld [vmem:[#allocation3 + $0x21] sm:$0xff]
      %v978 = vld [vmem:[#allocation3 + $0x31] sm:$0xff]
      %v979 = vld [vmem:[#allocation3 + $0x39] sm:$0xff]
      %v980 = vld [vmem:[#allocation3 + $0x49] sm:$0xff]
      %v981 = vld [vmem:[#allocation3 + $0x51] sm:$0xff]
      %v982 = vld [vmem:[#allocation3 + $0x61] sm:$0xff]
      %v983 = vld [vmem:[#allocation3 + $0x69] sm:$0xff]
      %v984 = vld [vmem:[#allocation3 + $0x79] sm:$0xff]
      %v985 = vld [vmem:[#allocation3 + $0x81] sm:$0xff]
      %v986 = vld [vmem:[#allocation3 + $0x91] sm:$0xff]
      %v987 = vld [vmem:[#allocation3 + $0x99] sm:$0xff]
      %v988 = vld [vmem:[#allocation3 + $0xa9] sm:$0xff]
      %v989 = vld [vmem:[#allocation3 + $0xb1] sm:$0xff]
      %v990 = vld [vmem:[#allocation4] sm:$0xff]
      %v991 = vld [vmem:[#allocation4 + $0x8] sm:$0xff]
      %v992 = vld [vmem:[#allocation4 + $0x10] sm:$0xff]
      %v993 = vld [vmem:[#allocation4 + $0x18] sm:$0xff]
      %v994 = vld [vmem:[#allocation4 + $0x20] sm:$0xff]
      %v995 = vld [vmem:[#allocation4 + $0x28] sm:$0xff]
      %v996 = vld [vmem:[#allocation4 + $0x30] sm:$0xff]
      %v997 = vld [vmem:[#allocation4 + $0x38] sm:$0xff]
      %v998 = vld [vmem:[#allocation4 + $0x40] sm:$0xff]
      %v999 = vld [vmem:[#allocation4 + $0x48] sm:$0xff]
      %v1000 = vld [vmem:[#allocation4 + $0x50] sm:$0xff]
      %v1001 = vld [vmem:[#allocation4 + $0x58] sm:$0xff]
      %v1002 = vld [vmem:[#allocation4 + $0x60] sm:$0xff]
      %v1003 = vld [vmem:[#allocation4 + $0x68] sm:$0xff]
      %v1004 = vld [vmem:[#allocation4 + $0x70] sm:$0xff]
      %v1005 = vld [vmem:[#allocation4 + $0x78] sm:$0xff]
      %v1006 = vpack.c.bf16 %v975, %v974
      %v1007 = vpack.c.bf16 %v977, %v976
      %v1008 = vpack.c.bf16 %v979, %v978
      %v1009 = vpack.c.bf16 %v981, %v980
      %v1010 = vpack.c.bf16 %v983, %v982
      %v1011 = vpack.c.bf16 %v985, %v984
      %v1012 = vpack.c.bf16 %v987, %v986
      %v1013 = vpack.c.bf16 %v989, %v988
      %s1014 = scalar_lea.vmem %s4, 2
      %v1015 = vld [vmem:[%s1014] sm:$0x3]
      %v1017 = vsel %vm429, %v1006, 0
      %v1020 = vsel %vm429, %v1007, 0
      %v1023 = vsel %vm429, %v1008, 0
      %v1026 = vsel %vm429, %v1009, 0
      %v1029 = vsel %vm429, %v1010, 0
      %v1032 = vsel %vm429, %v1011, 0
      %v1035 = vsel %vm429, %v1012, 0
      %v1038 = vsel %vm429, %v1013, 0
      %v1041 = vsel %vm841, %v1015, 0
      %1043 = vmatprep.subr.bf16.mxu0 0
      %1044 = vmatpush1.bf16.msra.mxu0 %v1041
      %1045 = vmatprep.subr.bf16.mxu0 0
      %1046 = vmatpush1.bf16.msra.mxu0 0
      %1047 = vmatprep.subr.bf16.mxu0 0
      %1048 = vmatpush1.bf16.msra.mxu0 0
      %1049 = vmatprep.subr.bf16.mxu0 0
      %1050 = vmatpush1.bf16.msra.mxu0 0
      %1051 = vmatprep.subr.bf16.mxu0 0
      %1052 = vmatpush1.bf16.msra.mxu0 0
      %1053 = vmatprep.subr.bf16.mxu0 0
      %1054 = vmatpush1.bf16.msra.mxu0 0
      %1055 = vmatprep.subr.bf16.mxu0 0
      %1056 = vmatpush1.bf16.msra.mxu0 0
      %1057 = vmatprep.subr.bf16.mxu0 0
      %1058 = vmatpush1.bf16.msra.mxu0 0
      %1059 = vmatprep.subr.bf16.mxu0 0
      %1060 = vmatpush1.bf16.msra.mxu0 0
      %1061 = vmatprep.subr.bf16.mxu0 0
      %1062 = vmatpush1.bf16.msra.mxu0 0
      %1063 = vmatprep.subr.bf16.mxu0 0
      %1064 = vmatpush1.bf16.msra.mxu0 0
      %1065 = vmatprep.subr.bf16.mxu0 0
      %1066 = vmatpush1.bf16.msra.mxu0 0
      %1067 = vmatprep.subr.bf16.mxu0 0
      %1068 = vmatpush1.bf16.msra.mxu0 0
      %1069 = vmatprep.subr.bf16.mxu0 0
      %1070 = vmatpush1.bf16.msra.mxu0 0
      %1071 = vmatprep.subr.bf16.mxu0 0
      %1072 = vmatpush1.bf16.msra.mxu0 0
      %1073 = vmatprep.subr.bf16.mxu0 0
      %1074 = vmatpush1.bf16.msra.mxu0 0
      %1075 = vmatprep.mubr.bf16.mxu0 0
      %1076 = vmatmul.mubr.bf16.gmra.mrb[0].mxu0 %v1017
      %v1077 = vpop.f32.mrb[0].mxu0
      %v1078 = vadd.f32 0.0, %v1077
      %v1079 = vpop.f32.mrb[0].mxu0
      %v1080 = vpop.f32.mrb[0].mxu0
      %v1081 = vadd.f32 0.0, %v1080
      %v1082 = vpop.f32.mrb[0].mxu0
      %1083 = vmatprep.mubr.bf16.mxu0 0
      %1084 = vmatmul.mubr.bf16.gmra.mrb[0].mxu0 %v1020
      %v1085 = vpop.f32.mrb[0].mxu0
      %v1086 = vadd.f32 0.0, %v1085
      %v1087 = vpop.f32.mrb[0].mxu0
      %v1088 = vpop.f32.mrb[0].mxu0
      %v1089 = vadd.f32 0.0, %v1088
      %v1090 = vpop.f32.mrb[0].mxu0
      %1091 = vmatprep.mubr.bf16.mxu0 0
      %1092 = vmatmul.mubr.bf16.gmra.mrb[0].mxu0 %v1023
      %v1093 = vpop.f32.mrb[0].mxu0
      %v1094 = vadd.f32 0.0, %v1093
      %v1095 = vpop.f32.mrb[0].mxu0
      %v1096 = vpop.f32.mrb[0].mxu0
      %v1097 = vadd.f32 0.0, %v1096
      %v1098 = vpop.f32.mrb[0].mxu0
      %1099 = vmatprep.mubr.bf16.mxu0 0
      %1100 = vmatmul.mubr.bf16.gmra.mrb[0].mxu0 %v1026
      %v1101 = vpop.f32.mrb[0].mxu0
      %v1102 = vadd.f32 0.0, %v1101
      %v1103 = vpop.f32.mrb[0].mxu0
      %v1104 = vpop.f32.mrb[0].mxu0
      %v1105 = vadd.f32 0.0, %v1104
      %v1106 = vpop.f32.mrb[0].mxu0
      %1107 = vmatprep.mubr.bf16.mxu0 0
      %1108 = vmatmul.mubr.bf16.gmra.mrb[0].mxu0 %v1029
      %v1109 = vpop.f32.mrb[0].mxu0
      %v1110 = vadd.f32 0.0, %v1109
      %v1111 = vpop.f32.mrb[0].mxu0
      %v1112 = vpop.f32.mrb[0].mxu0
      %v1113 = vadd.f32 0.0, %v1112
      %v1114 = vpop.f32.mrb[0].mxu0
      %1115 = vmatprep.mubr.bf16.mxu0 0
      %1116 = vmatmul.mubr.bf16.gmra.mrb[0].mxu0 %v1032
      %v1117 = vpop.f32.mrb[0].mxu0
      %v1118 = vadd.f32 0.0, %v1117
      %v1119 = vpop.f32.mrb[0].mxu0
      %v1120 = vpop.f32.mrb[0].mxu0
      %v1121 = vadd.f32 0.0, %v1120
      %v1122 = vpop.f32.mrb[0].mxu0
      %1123 = vmatprep.mubr.bf16.mxu0 0
      %1124 = vmatmul.mubr.bf16.gmra.mrb[0].mxu0 %v1035
      %v1125 = vpop.f32.mrb[0].mxu0
      %v1126 = vadd.f32 0.0, %v1125
      %v1127 = vpop.f32.mrb[0].mxu0
      %v1128 = vpop.f32.mrb[0].mxu0
      %v1129 = vadd.f32 0.0, %v1128
      %v1130 = vpop.f32.mrb[0].mxu0
      %1131 = vmatprep.mubr.bf16.mxu0 0
      %1132 = vmatmul.mubr.bf16.gmra.mrb[0].mxu0 %v1038
      %v1133 = vpop.f32.mrb[0].mxu0
      %v1134 = vadd.f32 0.0, %v1133
      %v1135 = vpop.f32.mrb[0].mxu0
      %v1136 = vpop.f32.mrb[0].mxu0
      %v1137 = vadd.f32 0.0, %v1136
      %v1138 = vpop.f32.mrb[0].mxu0
      %1139 = vdwg.mxu0
      %v1140 = vadd.f32 %v990, %v1078
      %v1141 = vadd.f32 %v991, %v1081
      %v1142 = vadd.f32 %v992, %v1086
      %v1143 = vadd.f32 %v993, %v1089
      %v1144 = vadd.f32 %v994, %v1094
      %v1145 = vadd.f32 %v995, %v1097
      %v1146 = vadd.f32 %v996, %v1102
      %v1147 = vadd.f32 %v997, %v1105
      %v1148 = vadd.f32 %v998, %v1110
      %v1149 = vadd.f32 %v999, %v1113
      %v1150 = vadd.f32 %v1000, %v1118
      %v1151 = vadd.f32 %v1001, %v1121
      %v1152 = vadd.f32 %v1002, %v1126
      %v1153 = vadd.f32 %v1003, %v1129
      %v1154 = vadd.f32 %v1004, %v1134
      %v1155 = vadd.f32 %v1005, %v1137
      %1156 = vst.msk [vmem:[#allocation4] sm:$0xff] %vm429, %v1140
      %1157 = vst.msk [vmem:[#allocation4 + $0x8] sm:$0xff] %vm429, %v1141
      %1158 = vst.msk [vmem:[#allocation4 + $0x10] sm:$0xff] %vm429, %v1142
      %1159 = vst.msk [vmem:[#allocation4 + $0x18] sm:$0xff] %vm429, %v1143
      %1160 = vst.msk [vmem:[#allocation4 + $0x20] sm:$0xff] %vm429, %v1144
      %1161 = vst.msk [vmem:[#allocation4 + $0x28] sm:$0xff] %vm429, %v1145
      %1162 = vst.msk [vmem:[#allocation4 + $0x30] sm:$0xff] %vm429, %v1146
      %1163 = vst.msk [vmem:[#allocation4 + $0x38] sm:$0xff] %vm429, %v1147
      %1164 = vst.msk [vmem:[#allocation4 + $0x40] sm:$0xff] %vm429, %v1148
      %1165 = vst.msk [vmem:[#allocation4 + $0x48] sm:$0xff] %vm429, %v1149
      %1166 = vst.msk [vmem:[#allocation4 + $0x50] sm:$0xff] %vm429, %v1150
      %1167 = vst.msk [vmem:[#allocation4 + $0x58] sm:$0xff] %vm429, %v1151
      %1168 = vst.msk [vmem:[#allocation4 + $0x60] sm:$0xff] %vm429, %v1152
      %1169 = vst.msk [vmem:[#allocation4 + $0x68] sm:$0xff] %vm429, %v1153
      %1170 = vst.msk [vmem:[#allocation4 + $0x70] sm:$0xff] %vm429, %v1154
      %1171 = vst.msk [vmem:[#allocation4 + $0x78] sm:$0xff] %vm429, %v1155
      %v1172 = vld [vmem:[#allocation3 + $0x2] sm:$0xff]
      %v1173 = vld [vmem:[#allocation3 + $0xa] sm:$0xff]
      %v1174 = vld [vmem:[#allocation3 + $0x1a] sm:$0xff]
      %v1175 = vld [vmem:[#allocation3 + $0x22] sm:$0xff]
      %v1176 = vld [vmem:[#allocation3 + $0x32] sm:$0xff]
      %v1177 = vld [vmem:[#allocation3 + $0x3a] sm:$0xff]
      %v1178 = vld [vmem:[#allocation3 + $0x4a] sm:$0xff]
      %v1179 = vld [vmem:[#allocation3 + $0x52] sm:$0xff]
      %v1180 = vld [vmem:[#allocation3 + $0x62] sm:$0xff]
      %v1181 = vld [vmem:[#allocation3 + $0x6a] sm:$0xff]
      %v1182 = vld [vmem:[#allocation3 + $0x7a] sm:$0xff]
      %v1183 = vld [vmem:[#allocation3 + $0x82] sm:$0xff]
      %v1184 = vld [vmem:[#allocation3 + $0x92] sm:$0xff]
      %v1185 = vld [vmem:[#allocation3 + $0x9a] sm:$0xff]
      %v1186 = vld [vmem:[#allocation3 + $0xaa] sm:$0xff]
      %v1187 = vld [vmem:[#allocation3 + $0xb2] sm:$0xff]
      %v1188 = vld [vmem:[#allocation4] sm:$0xff]
      %v1189 = vld [vmem:[#allocation4 + $0x8] sm:$0xff]
      %v1190 = vld [vmem:[#allocation4 + $0x10] sm:$0xff]
      %v1191 = vld [vmem:[#allocation4 + $0x18] sm:$0xff]
      %v1192 = vld [vmem:[#allocation4 + $0x20] sm:$0xff]
      %v1193 = vld [vmem:[#allocation4 + $0x28] sm:$0xff]
      %v1194 = vld [vmem:[#allocation4 + $0x30] sm:$0xff]
      %v1195 = vld [vmem:[#allocation4 + $0x38] sm:$0xff]
      %v1196 = vld [vmem:[#allocation4 + $0x40] sm:$0xff]
      %v1197 = vld [vmem:[#allocation4 + $0x48] sm:$0xff]
      %v1198 = vld [vmem:[#allocation4 + $0x50] sm:$0xff]
      %v1199 = vld [vmem:[#allocation4 + $0x58] sm:$0xff]
      %v1200 = vld [vmem:[#allocation4 + $0x60] sm:$0xff]
      %v1201 = vld [vmem:[#allocation4 + $0x68] sm:$0xff]
      %v1202 = vld [vmem:[#allocation4 + $0x70] sm:$0xff]
      %v1203 = vld [vmem:[#allocation4 + $0x78] sm:$0xff]
      %v1204 = vpack.c.bf16 %v1173, %v1172
      %v1205 = vpack.c.bf16 %v1175, %v1174
      %v1206 = vpack.c.bf16 %v1177, %v1176
      %v1207 = vpack.c.bf16 %v1179, %v1178
      %v1208 = vpack.c.bf16 %v1181, %v1180
      %v1209 = vpack.c.bf16 %v1183, %v1182
      %v1210 = vpack.c.bf16 %v1185, %v1184
      %v1211 = vpack.c.bf16 %v1187, %v1186
      %s1212 = scalar_lea.vmem %s4, 4
      %v1213 = vld [vmem:[%s1212] sm:$0x3]
      %v1215 = vsel %vm429, %v1204, 0
      %v1218 = vsel %vm429, %v1205, 0
      %v1221 = vsel %vm429, %v1206, 0
      %v1224 = vsel %vm429, %v1207, 0
      %v1227 = vsel %vm429, %v1208, 0
      %v1230 = vsel %vm429, %v1209, 0
      %v1233 = vsel %vm429, %v1210, 0
      %v1236 = vsel %vm429, %v1211, 0
      %v1239 = vsel %vm841, %v1213, 0
      %1241 = vmatprep.subr.bf16.mxu0 0
      %1242 = vmatpush1.bf16.msra.mxu0 %v1239
      %1243 = vmatprep.subr.bf16.mxu0 0
      %1244 = vmatpush1.bf16.msra.mxu0 0
      %1245 = vmatprep.subr.bf16.mxu0 0
      %1246 = vmatpush1.bf16.msra.mxu0 0
      %1247 = vmatprep.subr.bf16.mxu0 0
      %1248 = vmatpush1.bf16.msra.mxu0 0
      %1249 = vmatprep.subr.bf16.mxu0 0
      %1250 = vmatpush1.bf16.msra.mxu0 0
      %1251 = vmatprep.subr.bf16.mxu0 0
      %1252 = vmatpush1.bf16.msra.mxu0 0
      %1253 = vmatprep.subr.bf16.mxu0 0
      %1254 = vmatpush1.bf16.msra.mxu0 0
      %1255 = vmatprep.subr.bf16.mxu0 0
      %1256 = vmatpush1.bf16.msra.mxu0 0
      %1257 = vmatprep.subr.bf16.mxu0 0
      %1258 = vmatpush1.bf16.msra.mxu0 0
      %1259 = vmatprep.subr.bf16.mxu0 0
      %1260 = vmatpush1.bf16.msra.mxu0 0
      %1261 = vmatprep.subr.bf16.mxu0 0
      %1262 = vmatpush1.bf16.msra.mxu0 0
      %1263 = vmatprep.subr.bf16.mxu0 0
      %1264 = vmatpush1.bf16.msra.mxu0 0
      %1265 = vmatprep.subr.bf16.mxu0 0
      %1266 = vmatpush1.bf16.msra.mxu0 0
      %1267 = vmatprep.subr.bf16.mxu0 0
      %1268 = vmatpush1.bf16.msra.mxu0 0
      %1269 = vmatprep.subr.bf16.mxu0 0
      %1270 = vmatpush1.bf16.msra.mxu0 0
      %1271 = vmatprep.subr.bf16.mxu0 0
      %1272 = vmatpush1.bf16.msra.mxu0 0
      %1273 = vmatprep.mubr.bf16.mxu0 0
      %1274 = vmatmul.mubr.bf16.gmra.mrb[0].mxu0 %v1215
      %v1275 = vpop.f32.mrb[0].mxu0
      %v1276 = vadd.f32 0.0, %v1275
      %v1277 = vpop.f32.mrb[0].mxu0
      %v1278 = vpop.f32.mrb[0].mxu0
      %v1279 = vadd.f32 0.0, %v1278
      %v1280 = vpop.f32.mrb[0].mxu0
      %1281 = vmatprep.mubr.bf16.mxu0 0
      %1282 = vmatmul.mubr.bf16.gmra.mrb[0].mxu0 %v1218
      %v1283 = vpop.f32.mrb[0].mxu0
      %v1284 = vadd.f32 0.0, %v1283
      %v1285 = vpop.f32.mrb[0].mxu0
      %v1286 = vpop.f32.mrb[0].mxu0
      %v1287 = vadd.f32 0.0, %v1286
      %v1288 = vpop.f32.mrb[0].mxu0
      %1289 = vmatprep.mubr.bf16.mxu0 0
      %1290 = vmatmul.mubr.bf16.gmra.mrb[0].mxu0 %v1221
      %v1291 = vpop.f32.mrb[0].mxu0
      %v1292 = vadd.f32 0.0, %v1291
      %v1293 = vpop.f32.mrb[0].mxu0
      %v1294 = vpop.f32.mrb[0].mxu0
      %v1295 = vadd.f32 0.0, %v1294
      %v1296 = vpop.f32.mrb[0].mxu0
      %1297 = vmatprep.mubr.bf16.mxu0 0
      %1298 = vmatmul.mubr.bf16.gmra.mrb[0].mxu0 %v1224
      %v1299 = vpop.f32.mrb[0].mxu0
      %v1300 = vadd.f32 0.0, %v1299
      %v1301 = vpop.f32.mrb[0].mxu0
      %v1302 = vpop.f32.mrb[0].mxu0
      %v1303 = vadd.f32 0.0, %v1302
      %v1304 = vpop.f32.mrb[0].mxu0
      %1305 = vmatprep.mubr.bf16.mxu0 0
      %1306 = vmatmul.mubr.bf16.gmra.mrb[0].mxu0 %v1227
      %v1307 = vpop.f32.mrb[0].mxu0
      %v1308 = vadd.f32 0.0, %v1307
      %v1309 = vpop.f32.mrb[0].mxu0
      %v1310 = vpop.f32.mrb[0].mxu0
      %v1311 = vadd.f32 0.0, %v1310
      %v1312 = vpop.f32.mrb[0].mxu0
      %1313 = vmatprep.mubr.bf16.mxu0 0
      %1314 = vmatmul.mubr.bf16.gmra.mrb[0].mxu0 %v1230
      %v1315 = vpop.f32.mrb[0].mxu0
      %v1316 = vadd.f32 0.0, %v1315
      %v1317 = vpop.f32.mrb[0].mxu0
      %v1318 = vpop.f32.mrb[0].mxu0
      %v1319 = vadd.f32 0.0, %v1318
      %v1320 = vpop.f32.mrb[0].mxu0
      %1321 = vmatprep.mubr.bf16.mxu0 0
      %1322 = vmatmul.mubr.bf16.gmra.mrb[0].mxu0 %v1233
      %v1323 = vpop.f32.mrb[0].mxu0
      %v1324 = vadd.f32 0.0, %v1323
      %v1325 = vpop.f32.mrb[0].mxu0
      %v1326 = vpop.f32.mrb[0].mxu0
      %v1327 = vadd.f32 0.0, %v1326
      %v1328 = vpop.f32.mrb[0].mxu0
      %1329 = vmatprep.mubr.bf16.mxu0 0
      %1330 = vmatmul.mubr.bf16.gmra.mrb[0].mxu0 %v1236
      %v1331 = vpop.f32.mrb[0].mxu0
      %v1332 = vadd.f32 0.0, %v1331
      %v1333 = vpop.f32.mrb[0].mxu0
      %v1334 = vpop.f32.mrb[0].mxu0
      %v1335 = vadd.f32 0.0, %v1334
      %v1336 = vpop.f32.mrb[0].mxu0
      %1337 = vdwg.mxu0
      %v1338 = vadd.f32 %v1188, %v1276
      %v1339 = vadd.f32 %v1189, %v1279
      %v1340 = vadd.f32 %v1190, %v1284
      %v1341 = vadd.f32 %v1191, %v1287
      %v1342 = vadd.f32 %v1192, %v1292
      %v1343 = vadd.f32 %v1193, %v1295
      %v1344 = vadd.f32 %v1194, %v1300
      %v1345 = vadd.f32 %v1195, %v1303
      %v1346 = vadd.f32 %v1196, %v1308
      %v1347 = vadd.f32 %v1197, %v1311
      %v1348 = vadd.f32 %v1198, %v1316
      %v1349 = vadd.f32 %v1199, %v1319
      %v1350 = vadd.f32 %v1200, %v1324
      %v1351 = vadd.f32 %v1201, %v1327
      %v1352 = vadd.f32 %v1202, %v1332
      %v1353 = vadd.f32 %v1203, %v1335
      %1354 = vst.msk [vmem:[#allocation4] sm:$0xff] %vm429, %v1338
      %1355 = vst.msk [vmem:[#allocation4 + $0x8] sm:$0xff] %vm429, %v1339
      %1356 = vst.msk [vmem:[#allocation4 + $0x10] sm:$0xff] %vm429, %v1340
      %1357 = vst.msk [vmem:[#allocation4 + $0x18] sm:$0xff] %vm429, %v1341
      %1358 = vst.msk [vmem:[#allocation4 + $0x20] sm:$0xff] %vm429, %v1342
      %1359 = vst.msk [vmem:[#allocation4 + $0x28] sm:$0xff] %vm429, %v1343
      %1360 = vst.msk [vmem:[#allocation4 + $0x30] sm:$0xff] %vm429, %v1344
      %1361 = vst.msk [vmem:[#allocation4 + $0x38] sm:$0xff] %vm429, %v1345
      %1362 = vst.msk [vmem:[#allocation4 + $0x40] sm:$0xff] %vm429, %v1346
      %1363 = vst.msk [vmem:[#allocation4 + $0x48] sm:$0xff] %vm429, %v1347
      %1364 = vst.msk [vmem:[#allocation4 + $0x50] sm:$0xff] %vm429, %v1348
      %1365 = vst.msk [vmem:[#allocation4 + $0x58] sm:$0xff] %vm429, %v1349
      %1366 = vst.msk [vmem:[#allocation4 + $0x60] sm:$0xff] %vm429, %v1350
      %1367 = vst.msk [vmem:[#allocation4 + $0x68] sm:$0xff] %vm429, %v1351
      %1368 = vst.msk [vmem:[#allocation4 + $0x70] sm:$0xff] %vm429, %v1352
      %1369 = vst.msk [vmem:[#allocation4 + $0x78] sm:$0xff] %vm429, %v1353
      %v1370 = vld [vmem:[%s638] sm:$0xff]
      %v1371 = vld [vmem:[%s638 + $0x8] sm:$0xff]
      %v1372 = vld [vmem:[%s638 + $0x18] sm:$0xff]
      %v1373 = vld [vmem:[%s638 + $0x20] sm:$0xff]
      %v1374 = vld [vmem:[%s638 + $0x30] sm:$0xff]
      %v1375 = vld [vmem:[%s638 + $0x38] sm:$0xff]
      %v1376 = vld [vmem:[%s638 + $0x48] sm:$0xff]
      %v1377 = vld [vmem:[%s638 + $0x50] sm:$0xff]
      %v1378 = vld [vmem:[%s638 + $0x60] sm:$0xff]
      %v1379 = vld [vmem:[%s638 + $0x68] sm:$0xff]
      %v1380 = vld [vmem:[%s638 + $0x78] sm:$0xff]
      %v1381 = vld [vmem:[%s638 + $0x80] sm:$0xff]
      %v1382 = vld [vmem:[%s638 + $0x90] sm:$0xff]
      %v1383 = vld [vmem:[%s638 + $0x98] sm:$0xff]
      %v1384 = vld [vmem:[%s638 + $0xa8] sm:$0xff]
      %v1385 = vld [vmem:[%s638 + $0xb0] sm:$0xff]
      %v1386 = vld [vmem:[#allocation4] sm:$0xff]
      %v1387 = vld [vmem:[#allocation4 + $0x8] sm:$0xff]
      %v1388 = vld [vmem:[#allocation4 + $0x10] sm:$0xff]
      %v1389 = vld [vmem:[#allocation4 + $0x18] sm:$0xff]
      %v1390 = vld [vmem:[#allocation4 + $0x20] sm:$0xff]
      %v1391 = vld [vmem:[#allocation4 + $0x28] sm:$0xff]
      %v1392 = vld [vmem:[#allocation4 + $0x30] sm:$0xff]
      %v1393 = vld [vmem:[#allocation4 + $0x38] sm:$0xff]
      %v1394 = vld [vmem:[#allocation4 + $0x40] sm:$0xff]
      %v1395 = vld [vmem:[#allocation4 + $0x48] sm:$0xff]
      %v1396 = vld [vmem:[#allocation4 + $0x50] sm:$0xff]
      %v1397 = vld [vmem:[#allocation4 + $0x58] sm:$0xff]
      %v1398 = vld [vmem:[#allocation4 + $0x60] sm:$0xff]
      %v1399 = vld [vmem:[#allocation4 + $0x68] sm:$0xff]
      %v1400 = vld [vmem:[#allocation4 + $0x70] sm:$0xff]
      %v1401 = vld [vmem:[#allocation4 + $0x78] sm:$0xff]
      %v1402 = vpack.c.bf16 %v1371, %v1370
      %v1403 = vpack.c.bf16 %v1373, %v1372
      %v1404 = vpack.c.bf16 %v1375, %v1374
      %v1405 = vpack.c.bf16 %v1377, %v1376
      %v1406 = vpack.c.bf16 %v1379, %v1378
      %v1407 = vpack.c.bf16 %v1381, %v1380
      %v1408 = vpack.c.bf16 %v1383, %v1382
      %v1409 = vpack.c.bf16 %v1385, %v1384
      %s1410 = scalar_lea.vmem %s4, 6
      %v1411 = vld [vmem:[%s1410] sm:$0x3]
      %v1413 = vsel %vm429, %v1402, 0
      %v1416 = vsel %vm429, %v1403, 0
      %v1419 = vsel %vm429, %v1404, 0
      %v1422 = vsel %vm429, %v1405, 0
      %v1425 = vsel %vm429, %v1406, 0
      %v1428 = vsel %vm429, %v1407, 0
      %v1431 = vsel %vm429, %v1408, 0
      %v1434 = vsel %vm429, %v1409, 0
      %v1437 = vsel %vm841, %v1411, 0
      %1439 = vmatprep.subr.bf16.mxu0 0
      %1440 = vmatpush1.bf16.msra.mxu0 %v1437
      %1441 = vmatprep.subr.bf16.mxu0 0
      %1442 = vmatpush1.bf16.msra.mxu0 0
      %1443 = vmatprep.subr.bf16.mxu0 0
      %1444 = vmatpush1.bf16.msra.mxu0 0
      %1445 = vmatprep.subr.bf16.mxu0 0
      %1446 = vmatpush1.bf16.msra.mxu0 0
      %1447 = vmatprep.subr.bf16.mxu0 0
      %1448 = vmatpush1.bf16.msra.mxu0 0
      %1449 = vmatprep.subr.bf16.mxu0 0
      %1450 = vmatpush1.bf16.msra.mxu0 0
      %1451 = vmatprep.subr.bf16.mxu0 0
      %1452 = vmatpush1.bf16.msra.mxu0 0
      %1453 = vmatprep.subr.bf16.mxu0 0
      %1454 = vmatpush1.bf16.msra.mxu0 0
      %1455 = vmatprep.subr.bf16.mxu0 0
      %1456 = vmatpush1.bf16.msra.mxu0 0
      %1457 = vmatprep.subr.bf16.mxu0 0
      %1458 = vmatpush1.bf16.msra.mxu0 0
      %1459 = vmatprep.subr.bf16.mxu0 0
      %1460 = vmatpush1.bf16.msra.mxu0 0
      %1461 = vmatprep.subr.bf16.mxu0 0
      %1462 = vmatpush1.bf16.msra.mxu0 0
      %1463 = vmatprep.subr.bf16.mxu0 0
      %1464 = vmatpush1.bf16.msra.mxu0 0
      %1465 = vmatprep.subr.bf16.mxu0 0
      %1466 = vmatpush1.bf16.msra.mxu0 0
      %1467 = vmatprep.subr.bf16.mxu0 0
      %1468 = vmatpush1.bf16.msra.mxu0 0
      %1469 = vmatprep.subr.bf16.mxu0 0
      %1470 = vmatpush1.bf16.msra.mxu0 0
      %1471 = vmatprep.mubr.bf16.mxu0 0
      %1472 = vmatmul.mubr.bf16.gmra.mrb[0].mxu0 %v1413
      %v1473 = vpop.f32.mrb[0].mxu0
      %v1474 = vadd.f32 0.0, %v1473
      %v1475 = vpop.f32.mrb[0].mxu0
      %v1476 = vpop.f32.mrb[0].mxu0
      %v1477 = vadd.f32 0.0, %v1476
      %v1478 = vpop.f32.mrb[0].mxu0
      %1479 = vmatprep.mubr.bf16.mxu0 0
      %1480 = vmatmul.mubr.bf16.gmra.mrb[0].mxu0 %v1416
      %v1481 = vpop.f32.mrb[0].mxu0
      %v1482 = vadd.f32 0.0, %v1481
      %v1483 = vpop.f32.mrb[0].mxu0
      %v1484 = vpop.f32.mrb[0].mxu0
      %v1485 = vadd.f32 0.0, %v1484
      %v1486 = vpop.f32.mrb[0].mxu0
      %1487 = vmatprep.mubr.bf16.mxu0 0
      %1488 = vmatmul.mubr.bf16.gmra.mrb[0].mxu0 %v1419
      %v1489 = vpop.f32.mrb[0].mxu0
      %v1490 = vadd.f32 0.0, %v1489
      %v1491 = vpop.f32.mrb[0].mxu0
      %v1492 = vpop.f32.mrb[0].mxu0
      %v1493 = vadd.f32 0.0, %v1492
      %v1494 = vpop.f32.mrb[0].mxu0
      %1495 = vmatprep.mubr.bf16.mxu0 0
      %1496 = vmatmul.mubr.bf16.gmra.mrb[0].mxu0 %v1422
      %v1497 = vpop.f32.mrb[0].mxu0
      %v1498 = vadd.f32 0.0, %v1497
      %v1499 = vpop.f32.mrb[0].mxu0
      %v1500 = vpop.f32.mrb[0].mxu0
      %v1501 = vadd.f32 0.0, %v1500
      %v1502 = vpop.f32.mrb[0].mxu0
      %1503 = vmatprep.mubr.bf16.mxu0 0
      %1504 = vmatmul.mubr.bf16.gmra.mrb[0].mxu0 %v1425
      %v1505 = vpop.f32.mrb[0].mxu0
      %v1506 = vadd.f32 0.0, %v1505
      %v1507 = vpop.f32.mrb[0].mxu0
      %v1508 = vpop.f32.mrb[0].mxu0
      %v1509 = vadd.f32 0.0, %v1508
      %v1510 = vpop.f32.mrb[0].mxu0
      %1511 = vmatprep.mubr.bf16.mxu0 0
      %1512 = vmatmul.mubr.bf16.gmra.mrb[0].mxu0 %v1428
      %v1513 = vpop.f32.mrb[0].mxu0
      %v1514 = vadd.f32 0.0, %v1513
      %v1515 = vpop.f32.mrb[0].mxu0
      %v1516 = vpop.f32.mrb[0].mxu0
      %v1517 = vadd.f32 0.0, %v1516
      %v1518 = vpop.f32.mrb[0].mxu0
      %1519 = vmatprep.mubr.bf16.mxu0 0
      %1520 = vmatmul.mubr.bf16.gmra.mrb[0].mxu0 %v1431
      %v1521 = vpop.f32.mrb[0].mxu0
      %v1522 = vadd.f32 0.0, %v1521
      %v1523 = vpop.f32.mrb[0].mxu0
      %v1524 = vpop.f32.mrb[0].mxu0
      %v1525 = vadd.f32 0.0, %v1524
      %v1526 = vpop.f32.mrb[0].mxu0
      %1527 = vmatprep.mubr.bf16.mxu0 0
      %1528 = vmatmul.mubr.bf16.gmra.mrb[0].mxu0 %v1434
      %v1529 = vpop.f32.mrb[0].mxu0
      %v1530 = vadd.f32 0.0, %v1529
      %v1531 = vpop.f32.mrb[0].mxu0
      %v1532 = vpop.f32.mrb[0].mxu0
      %v1533 = vadd.f32 0.0, %v1532
      %v1534 = vpop.f32.mrb[0].mxu0
      %1535 = vdwg.mxu0
      %v1536 = vadd.f32 %v1386, %v1474
      %v1537 = vadd.f32 %v1387, %v1477
      %v1538 = vadd.f32 %v1388, %v1482
      %v1539 = vadd.f32 %v1389, %v1485
      %v1540 = vadd.f32 %v1390, %v1490
      %v1541 = vadd.f32 %v1391, %v1493
      %v1542 = vadd.f32 %v1392, %v1498
      %v1543 = vadd.f32 %v1393, %v1501
      %v1544 = vadd.f32 %v1394, %v1506
      %v1545 = vadd.f32 %v1395, %v1509
      %v1546 = vadd.f32 %v1396, %v1514
      %v1547 = vadd.f32 %v1397, %v1517
      %v1548 = vadd.f32 %v1398, %v1522
      %v1549 = vadd.f32 %v1399, %v1525
      %v1550 = vadd.f32 %v1400, %v1530
      %v1551 = vadd.f32 %v1401, %v1533
      %1552 = vst.msk [vmem:[#allocation4] sm:$0xff] %vm429, %v1536
      %1553 = vst.msk [vmem:[#allocation4 + $0x8] sm:$0xff] %vm429, %v1537
      %1554 = vst.msk [vmem:[#allocation4 + $0x10] sm:$0xff] %vm429, %v1538
      %1555 = vst.msk [vmem:[#allocation4 + $0x18] sm:$0xff] %vm429, %v1539
      %1556 = vst.msk [vmem:[#allocation4 + $0x20] sm:$0xff] %vm429, %v1540
      %1557 = vst.msk [vmem:[#allocation4 + $0x28] sm:$0xff] %vm429, %v1541
      %1558 = vst.msk [vmem:[#allocation4 + $0x30] sm:$0xff] %vm429, %v1542
      %1559 = vst.msk [vmem:[#allocation4 + $0x38] sm:$0xff] %vm429, %v1543
      %1560 = vst.msk [vmem:[#allocation4 + $0x40] sm:$0xff] %vm429, %v1544
      %1561 = vst.msk [vmem:[#allocation4 + $0x48] sm:$0xff] %vm429, %v1545
      %1562 = vst.msk [vmem:[#allocation4 + $0x50] sm:$0xff] %vm429, %v1546
      %1563 = vst.msk [vmem:[#allocation4 + $0x58] sm:$0xff] %vm429, %v1547
      %1564 = vst.msk [vmem:[#allocation4 + $0x60] sm:$0xff] %vm429, %v1548
      %1565 = vst.msk [vmem:[#allocation4 + $0x68] sm:$0xff] %vm429, %v1549
      %1566 = vst.msk [vmem:[#allocation4 + $0x70] sm:$0xff] %vm429, %v1550
      %1567 = vst.msk [vmem:[#allocation4 + $0x78] sm:$0xff] %vm429, %v1551
      %v1568 = vld [vmem:[%s638 + $0x1] sm:$0xff]
      %v1569 = vld [vmem:[%s638 + $0x9] sm:$0xff]
      %v1570 = vld [vmem:[%s638 + $0x19] sm:$0xff]
      %v1571 = vld [vmem:[%s638 + $0x21] sm:$0xff]
      %v1572 = vld [vmem:[%s638 + $0x31] sm:$0xff]
      %v1573 = vld [vmem:[%s638 + $0x39] sm:$0xff]
      %v1574 = vld [vmem:[%s638 + $0x49] sm:$0xff]
      %v1575 = vld [vmem:[%s638 + $0x51] sm:$0xff]
      %v1576 = vld [vmem:[%s638 + $0x61] sm:$0xff]
      %v1577 = vld [vmem:[%s638 + $0x69] sm:$0xff]
      %v1578 = vld [vmem:[%s638 + $0x79] sm:$0xff]
      %v1579 = vld [vmem:[%s638 + $0x81] sm:$0xff]
      %v1580 = vld [vmem:[%s638 + $0x91] sm:$0xff]
      %v1581 = vld [vmem:[%s638 + $0x99] sm:$0xff]
      %v1582 = vld [vmem:[%s638 + $0xa9] sm:$0xff]
      %v1583 = vld [vmem:[%s638 + $0xb1] sm:$0xff]
      %v1584 = vld [vmem:[#allocation4] sm:$0xff]
      %v1585 = vld [vmem:[#allocation4 + $0x8] sm:$0xff]
      %v1586 = vld [vmem:[#allocation4 + $0x10] sm:$0xff]
      %v1587 = vld [vmem:[#allocation4 + $0x18] sm:$0xff]
      %v1588 = vld [vmem:[#allocation4 + $0x20] sm:$0xff]
      %v1589 = vld [vmem:[#allocation4 + $0x28] sm:$0xff]
      %v1590 = vld [vmem:[#allocation4 + $0x30] sm:$0xff]
      %v1591 = vld [vmem:[#allocation4 + $0x38] sm:$0xff]
      %v1592 = vld [vmem:[#allocation4 + $0x40] sm:$0xff]
      %v1593 = vld [vmem:[#allocation4 + $0x48] sm:$0xff]
      %v1594 = vld [vmem:[#allocation4 + $0x50] sm:$0xff]
      %v1595 = vld [vmem:[#allocation4 + $0x58] sm:$0xff]
      %v1596 = vld [vmem:[#allocation4 + $0x60] sm:$0xff]
      %v1597 = vld [vmem:[#allocation4 + $0x68] sm:$0xff]
      %v1598 = vld [vmem:[#allocation4 + $0x70] sm:$0xff]
      %v1599 = vld [vmem:[#allocation4 + $0x78] sm:$0xff]
      %v1600 = vpack.c.bf16 %v1569, %v1568
      %v1601 = vpack.c.bf16 %v1571, %v1570
      %v1602 = vpack.c.bf16 %v1573, %v1572
      %v1603 = vpack.c.bf16 %v1575, %v1574
      %v1604 = vpack.c.bf16 %v1577, %v1576
      %v1605 = vpack.c.bf16 %v1579, %v1578
      %v1606 = vpack.c.bf16 %v1581, %v1580
      %v1607 = vpack.c.bf16 %v1583, %v1582
      %s1608 = scalar_lea.vmem %s4, 8
      %v1609 = vld [vmem:[%s1608] sm:$0x3]
      %v1611 = vsel %vm429, %v1600, 0
      %v1614 = vsel %vm429, %v1601, 0
      %v1617 = vsel %vm429, %v1602, 0
      %v1620 = vsel %vm429, %v1603, 0
      %v1623 = vsel %vm429, %v1604, 0
      %v1626 = vsel %vm429, %v1605, 0
      %v1629 = vsel %vm429, %v1606, 0
      %v1632 = vsel %vm429, %v1607, 0
      %v1635 = vsel %vm841, %v1609, 0
      %1637 = vmatprep.subr.bf16.mxu0 0
      %1638 = vmatpush1.bf16.msra.mxu0 %v1635
      %1639 = vmatprep.subr.bf16.mxu0 0
      %1640 = vmatpush1.bf16.msra.mxu0 0
      %1641 = vmatprep.subr.bf16.mxu0 0
      %1642 = vmatpush1.bf16.msra.mxu0 0
      %1643 = vmatprep.subr.bf16.mxu0 0
      %1644 = vmatpush1.bf16.msra.mxu0 0
      %1645 = vmatprep.subr.bf16.mxu0 0
      %1646 = vmatpush1.bf16.msra.mxu0 0
      %1647 = vmatprep.subr.bf16.mxu0 0
      %1648 = vmatpush1.bf16.msra.mxu0 0
      %1649 = vmatprep.subr.bf16.mxu0 0
      %1650 = vmatpush1.bf16.msra.mxu0 0
      %1651 = vmatprep.subr.bf16.mxu0 0
      %1652 = vmatpush1.bf16.msra.mxu0 0
      %1653 = vmatprep.subr.bf16.mxu0 0
      %1654 = vmatpush1.bf16.msra.mxu0 0
      %1655 = vmatprep.subr.bf16.mxu0 0
      %1656 = vmatpush1.bf16.msra.mxu0 0
      %1657 = vmatprep.subr.bf16.mxu0 0
      %1658 = vmatpush1.bf16.msra.mxu0 0
      %1659 = vmatprep.subr.bf16.mxu0 0
      %1660 = vmatpush1.bf16.msra.mxu0 0
      %1661 = vmatprep.subr.bf16.mxu0 0
      %1662 = vmatpush1.bf16.msra.mxu0 0
      %1663 = vmatprep.subr.bf16.mxu0 0
      %1664 = vmatpush1.bf16.msra.mxu0 0
      %1665 = vmatprep.subr.bf16.mxu0 0
      %1666 = vmatpush1.bf16.msra.mxu0 0
      %1667 = vmatprep.subr.bf16.mxu0 0
      %1668 = vmatpush1.bf16.msra.mxu0 0
      %1669 = vmatprep.mubr.bf16.mxu0 0
      %1670 = vmatmul.mubr.bf16.gmra.mrb[0].mxu0 %v1611
      %v1671 = vpop.f32.mrb[0].mxu0
      %v1672 = vadd.f32 0.0, %v1671
      %v1673 = vpop.f32.mrb[0].mxu0
      %v1674 = vpop.f32.mrb[0].mxu0
      %v1675 = vadd.f32 0.0, %v1674
      %v1676 = vpop.f32.mrb[0].mxu0
      %1677 = vmatprep.mubr.bf16.mxu0 0
      %1678 = vmatmul.mubr.bf16.gmra.mrb[0].mxu0 %v1614
      %v1679 = vpop.f32.mrb[0].mxu0
      %v1680 = vadd.f32 0.0, %v1679
      %v1681 = vpop.f32.mrb[0].mxu0
      %v1682 = vpop.f32.mrb[0].mxu0
      %v1683 = vadd.f32 0.0, %v1682
      %v1684 = vpop.f32.mrb[0].mxu0
      %1685 = vmatprep.mubr.bf16.mxu0 0
      %1686 = vmatmul.mubr.bf16.gmra.mrb[0].mxu0 %v1617
      %v1687 = vpop.f32.mrb[0].mxu0
      %v1688 = vadd.f32 0.0, %v1687
      %v1689 = vpop.f32.mrb[0].mxu0
      %v1690 = vpop.f32.mrb[0].mxu0
      %v1691 = vadd.f32 0.0, %v1690
      %v1692 = vpop.f32.mrb[0].mxu0
      %1693 = vmatprep.mubr.bf16.mxu0 0
      %1694 = vmatmul.mubr.bf16.gmra.mrb[0].mxu0 %v1620
      %v1695 = vpop.f32.mrb[0].mxu0
      %v1696 = vadd.f32 0.0, %v1695
      %v1697 = vpop.f32.mrb[0].mxu0
      %v1698 = vpop.f32.mrb[0].mxu0
      %v1699 = vadd.f32 0.0, %v1698
      %v1700 = vpop.f32.mrb[0].mxu0
      %1701 = vmatprep.mubr.bf16.mxu0 0
      %1702 = vmatmul.mubr.bf16.gmra.mrb[0].mxu0 %v1623
      %v1703 = vpop.f32.mrb[0].mxu0
      %v1704 = vadd.f32 0.0, %v1703
      %v1705 = vpop.f32.mrb[0].mxu0
      %v1706 = vpop.f32.mrb[0].mxu0
      %v1707 = vadd.f32 0.0, %v1706
      %v1708 = vpop.f32.mrb[0].mxu0
      %1709 = vmatprep.mubr.bf16.mxu0 0
      %1710 = vmatmul.mubr.bf16.gmra.mrb[0].mxu0 %v1626
      %v1711 = vpop.f32.mrb[0].mxu0
      %v1712 = vadd.f32 0.0, %v1711
      %v1713 = vpop.f32.mrb[0].mxu0
      %v1714 = vpop.f32.mrb[0].mxu0
      %v1715 = vadd.f32 0.0, %v1714
      %v1716 = vpop.f32.mrb[0].mxu0
      %1717 = vmatprep.mubr.bf16.mxu0 0
      %1718 = vmatmul.mubr.bf16.gmra.mrb[0].mxu0 %v1629
      %v1719 = vpop.f32.mrb[0].mxu0
      %v1720 = vadd.f32 0.0, %v1719
      %v1721 = vpop.f32.mrb[0].mxu0
      %v1722 = vpop.f32.mrb[0].mxu0
      %v1723 = vadd.f32 0.0, %v1722
      %v1724 = vpop.f32.mrb[0].mxu0
      %1725 = vmatprep.mubr.bf16.mxu0 0
      %1726 = vmatmul.mubr.bf16.gmra.mrb[0].mxu0 %v1632
      %v1727 = vpop.f32.mrb[0].mxu0
      %v1728 = vadd.f32 0.0, %v1727
      %v1729 = vpop.f32.mrb[0].mxu0
      %v1730 = vpop.f32.mrb[0].mxu0
      %v1731 = vadd.f32 0.0, %v1730
      %v1732 = vpop.f32.mrb[0].mxu0
      %1733 = vdwg.mxu0
      %v1734 = vadd.f32 %v1584, %v1672
      %v1735 = vadd.f32 %v1585, %v1675
      %v1736 = vadd.f32 %v1586, %v1680
      %v1737 = vadd.f32 %v1587, %v1683
      %v1738 = vadd.f32 %v1588, %v1688
      %v1739 = vadd.f32 %v1589, %v1691
      %v1740 = vadd.f32 %v1590, %v1696
      %v1741 = vadd.f32 %v1591, %v1699
      %v1742 = vadd.f32 %v1592, %v1704
      %v1743 = vadd.f32 %v1593, %v1707
      %v1744 = vadd.f32 %v1594, %v1712
      %v1745 = vadd.f32 %v1595, %v1715
      %v1746 = vadd.f32 %v1596, %v1720
      %v1747 = vadd.f32 %v1597, %v1723
      %v1748 = vadd.f32 %v1598, %v1728
      %v1749 = vadd.f32 %v1599, %v1731
      %1750 = vst.msk [vmem:[#allocation4] sm:$0xff] %vm429, %v1734
      %1751 = vst.msk [vmem:[#allocation4 + $0x8] sm:$0xff] %vm429, %v1735
      %1752 = vst.msk [vmem:[#allocation4 + $0x10] sm:$0xff] %vm429, %v1736
      %1753 = vst.msk [vmem:[#allocation4 + $0x18] sm:$0xff] %vm429, %v1737
      %1754 = vst.msk [vmem:[#allocation4 + $0x20] sm:$0xff] %vm429, %v1738
      %1755 = vst.msk [vmem:[#allocation4 + $0x28] sm:$0xff] %vm429, %v1739
      %1756 = vst.msk [vmem:[#allocation4 + $0x30] sm:$0xff] %vm429, %v1740
      %1757 = vst.msk [vmem:[#allocation4 + $0x38] sm:$0xff] %vm429, %v1741
      %1758 = vst.msk [vmem:[#allocation4 + $0x40] sm:$0xff] %vm429, %v1742
      %1759 = vst.msk [vmem:[#allocation4 + $0x48] sm:$0xff] %vm429, %v1743
      %1760 = vst.msk [vmem:[#allocation4 + $0x50] sm:$0xff] %vm429, %v1744
      %1761 = vst.msk [vmem:[#allocation4 + $0x58] sm:$0xff] %vm429, %v1745
      %1762 = vst.msk [vmem:[#allocation4 + $0x60] sm:$0xff] %vm429, %v1746
      %1763 = vst.msk [vmem:[#allocation4 + $0x68] sm:$0xff] %vm429, %v1747
      %1764 = vst.msk [vmem:[#allocation4 + $0x70] sm:$0xff] %vm429, %v1748
      %1765 = vst.msk [vmem:[#allocation4 + $0x78] sm:$0xff] %vm429, %v1749
      %v1766 = vld [vmem:[%s638 + $0x2] sm:$0xff]
      %v1767 = vld [vmem:[%s638 + $0xa] sm:$0xff]
      %v1768 = vld [vmem:[%s638 + $0x1a] sm:$0xff]
      %v1769 = vld [vmem:[%s638 + $0x22] sm:$0xff]
      %v1770 = vld [vmem:[%s638 + $0x32] sm:$0xff]
      %v1771 = vld [vmem:[%s638 + $0x3a] sm:$0xff]
      %v1772 = vld [vmem:[%s638 + $0x4a] sm:$0xff]
      %v1773 = vld [vmem:[%s638 + $0x52] sm:$0xff]
      %v1774 = vld [vmem:[%s638 + $0x62] sm:$0xff]
      %v1775 = vld [vmem:[%s638 + $0x6a] sm:$0xff]
      %v1776 = vld [vmem:[%s638 + $0x7a] sm:$0xff]
      %v1777 = vld [vmem:[%s638 + $0x82] sm:$0xff]
      %v1778 = vld [vmem:[%s638 + $0x92] sm:$0xff]
      %v1779 = vld [vmem:[%s638 + $0x9a] sm:$0xff]
      %v1780 = vld [vmem:[%s638 + $0xaa] sm:$0xff]
      %v1781 = vld [vmem:[%s638 + $0xb2] sm:$0xff]
      %v1782 = vld [vmem:[#allocation4] sm:$0xff]
      %v1783 = vld [vmem:[#allocation4 + $0x8] sm:$0xff]
      %v1784 = vld [vmem:[#allocation4 + $0x10] sm:$0xff]
      %v1785 = vld [vmem:[#allocation4 + $0x18] sm:$0xff]
      %v1786 = vld [vmem:[#allocation4 + $0x20] sm:$0xff]
      %v1787 = vld [vmem:[#allocation4 + $0x28] sm:$0xff]
      %v1788 = vld [vmem:[#allocation4 + $0x30] sm:$0xff]
      %v1789 = vld [vmem:[#allocation4 + $0x38] sm:$0xff]
      %v1790 = vld [vmem:[#allocation4 + $0x40] sm:$0xff]
      %v1791 = vld [vmem:[#allocation4 + $0x48] sm:$0xff]
      %v1792 = vld [vmem:[#allocation4 + $0x50] sm:$0xff]
      %v1793 = vld [vmem:[#allocation4 + $0x58] sm:$0xff]
      %v1794 = vld [vmem:[#allocation4 + $0x60] sm:$0xff]
      %v1795 = vld [vmem:[#allocation4 + $0x68] sm:$0xff]
      %v1796 = vld [vmem:[#allocation4 + $0x70] sm:$0xff]
      %v1797 = vld [vmem:[#allocation4 + $0x78] sm:$0xff]
      %v1798 = vpack.c.bf16 %v1767, %v1766
      %v1799 = vpack.c.bf16 %v1769, %v1768
      %v1800 = vpack.c.bf16 %v1771, %v1770
      %v1801 = vpack.c.bf16 %v1773, %v1772
      %v1802 = vpack.c.bf16 %v1775, %v1774
      %v1803 = vpack.c.bf16 %v1777, %v1776
      %v1804 = vpack.c.bf16 %v1779, %v1778
      %v1805 = vpack.c.bf16 %v1781, %v1780
      %s1806 = scalar_lea.vmem %s4, 10
      %v1807 = vld [vmem:[%s1806] sm:$0x3]
      %v1809 = vsel %vm429, %v1798, 0
      %v1812 = vsel %vm429, %v1799, 0
      %v1815 = vsel %vm429, %v1800, 0
      %v1818 = vsel %vm429, %v1801, 0
      %v1821 = vsel %vm429, %v1802, 0
      %v1824 = vsel %vm429, %v1803, 0
      %v1827 = vsel %vm429, %v1804, 0
      %v1830 = vsel %vm429, %v1805, 0
      %v1833 = vsel %vm841, %v1807, 0
      %1835 = vmatprep.subr.bf16.mxu0 0
      %1836 = vmatpush1.bf16.msra.mxu0 %v1833
      %1837 = vmatprep.subr.bf16.mxu0 0
      %1838 = vmatpush1.bf16.msra.mxu0 0
      %1839 = vmatprep.subr.bf16.mxu0 0
      %1840 = vmatpush1.bf16.msra.mxu0 0
      %1841 = vmatprep.subr.bf16.mxu0 0
      %1842 = vmatpush1.bf16.msra.mxu0 0
      %1843 = vmatprep.subr.bf16.mxu0 0
      %1844 = vmatpush1.bf16.msra.mxu0 0
      %1845 = vmatprep.subr.bf16.mxu0 0
      %1846 = vmatpush1.bf16.msra.mxu0 0
      %1847 = vmatprep.subr.bf16.mxu0 0
      %1848 = vmatpush1.bf16.msra.mxu0 0
      %1849 = vmatprep.subr.bf16.mxu0 0
      %1850 = vmatpush1.bf16.msra.mxu0 0
      %1851 = vmatprep.subr.bf16.mxu0 0
      %1852 = vmatpush1.bf16.msra.mxu0 0
      %1853 = vmatprep.subr.bf16.mxu0 0
      %1854 = vmatpush1.bf16.msra.mxu0 0
      %1855 = vmatprep.subr.bf16.mxu0 0
      %1856 = vmatpush1.bf16.msra.mxu0 0
      %1857 = vmatprep.subr.bf16.mxu0 0
      %1858 = vmatpush1.bf16.msra.mxu0 0
      %1859 = vmatprep.subr.bf16.mxu0 0
      %1860 = vmatpush1.bf16.msra.mxu0 0
      %1861 = vmatprep.subr.bf16.mxu0 0
      %1862 = vmatpush1.bf16.msra.mxu0 0
      %1863 = vmatprep.subr.bf16.mxu0 0
      %1864 = vmatpush1.bf16.msra.mxu0 0
      %1865 = vmatprep.subr.bf16.mxu0 0
      %1866 = vmatpush1.bf16.msra.mxu0 0
      %1867 = vmatprep.mubr.bf16.mxu0 0
      %1868 = vmatmul.mubr.bf16.gmra.mrb[0].mxu0 %v1809
      %v1869 = vpop.f32.mrb[0].mxu0
      %v1870 = vadd.f32 0.0, %v1869
      %v1871 = vpop.f32.mrb[0].mxu0
      %v1872 = vpop.f32.mrb[0].mxu0
      %v1873 = vadd.f32 0.0, %v1872
      %v1874 = vpop.f32.mrb[0].mxu0
      %1875 = vmatprep.mubr.bf16.mxu0 0
      %1876 = vmatmul.mubr.bf16.gmra.mrb[0].mxu0 %v1812
      %v1877 = vpop.f32.mrb[0].mxu0
      %v1878 = vadd.f32 0.0, %v1877
      %v1879 = vpop.f32.mrb[0].mxu0
      %v1880 = vpop.f32.mrb[0].mxu0
      %v1881 = vadd.f32 0.0, %v1880
      %v1882 = vpop.f32.mrb[0].mxu0
      %1883 = vmatprep.mubr.bf16.mxu0 0
      %1884 = vmatmul.mubr.bf16.gmra.mrb[0].mxu0 %v1815
      %v1885 = vpop.f32.mrb[0].mxu0
      %v1886 = vadd.f32 0.0, %v1885
      %v1887 = vpop.f32.mrb[0].mxu0
      %v1888 = vpop.f32.mrb[0].mxu0
      %v1889 = vadd.f32 0.0, %v1888
      %v1890 = vpop.f32.mrb[0].mxu0
      %1891 = vmatprep.mubr.bf16.mxu0 0
      %1892 = vmatmul.mubr.bf16.gmra.mrb[0].mxu0 %v1818
      %v1893 = vpop.f32.mrb[0].mxu0
      %v1894 = vadd.f32 0.0, %v1893
      %v1895 = vpop.f32.mrb[0].mxu0
      %v1896 = vpop.f32.mrb[0].mxu0
      %v1897 = vadd.f32 0.0, %v1896
      %v1898 = vpop.f32.mrb[0].mxu0
      %1899 = vmatprep.mubr.bf16.mxu0 0
      %1900 = vmatmul.mubr.bf16.gmra.mrb[0].mxu0 %v1821
      %v1901 = vpop.f32.mrb[0].mxu0
      %v1902 = vadd.f32 0.0, %v1901
      %v1903 = vpop.f32.mrb[0].mxu0
      %v1904 = vpop.f32.mrb[0].mxu0
      %v1905 = vadd.f32 0.0, %v1904
      %v1906 = vpop.f32.mrb[0].mxu0
      %1907 = vmatprep.mubr.bf16.mxu0 0
      %1908 = vmatmul.mubr.bf16.gmra.mrb[0].mxu0 %v1824
      %v1909 = vpop.f32.mrb[0].mxu0
      %v1910 = vadd.f32 0.0, %v1909
      %v1911 = vpop.f32.mrb[0].mxu0
      %v1912 = vpop.f32.mrb[0].mxu0
      %v1913 = vadd.f32 0.0, %v1912
      %v1914 = vpop.f32.mrb[0].mxu0
      %1915 = vmatprep.mubr.bf16.mxu0 0
      %1916 = vmatmul.mubr.bf16.gmra.mrb[0].mxu0 %v1827
      %v1917 = vpop.f32.mrb[0].mxu0
      %v1918 = vadd.f32 0.0, %v1917
      %v1919 = vpop.f32.mrb[0].mxu0
      %v1920 = vpop.f32.mrb[0].mxu0
      %v1921 = vadd.f32 0.0, %v1920
      %v1922 = vpop.f32.mrb[0].mxu0
      %1923 = vmatprep.mubr.bf16.mxu0 0
      %1924 = vmatmul.mubr.bf16.gmra.mrb[0].mxu0 %v1830
      %v1925 = vpop.f32.mrb[0].mxu0
      %v1926 = vadd.f32 0.0, %v1925
      %v1927 = vpop.f32.mrb[0].mxu0
      %v1928 = vpop.f32.mrb[0].mxu0
      %v1929 = vadd.f32 0.0, %v1928
      %v1930 = vpop.f32.mrb[0].mxu0
      %1931 = vdwg.mxu0
      %v1932 = vadd.f32 %v1782, %v1870
      %v1933 = vadd.f32 %v1783, %v1873
      %v1934 = vadd.f32 %v1784, %v1878
      %v1935 = vadd.f32 %v1785, %v1881
      %v1936 = vadd.f32 %v1786, %v1886
      %v1937 = vadd.f32 %v1787, %v1889
      %v1938 = vadd.f32 %v1788, %v1894
      %v1939 = vadd.f32 %v1789, %v1897
      %v1940 = vadd.f32 %v1790, %v1902
      %v1941 = vadd.f32 %v1791, %v1905
      %v1942 = vadd.f32 %v1792, %v1910
      %v1943 = vadd.f32 %v1793, %v1913
      %v1944 = vadd.f32 %v1794, %v1918
      %v1945 = vadd.f32 %v1795, %v1921
      %v1946 = vadd.f32 %v1796, %v1926
      %v1947 = vadd.f32 %v1797, %v1929
      %1948 = vst.msk [vmem:[#allocation4] sm:$0xff] %vm429, %v1932
      %1949 = vst.msk [vmem:[#allocation4 + $0x8] sm:$0xff] %vm429, %v1933
      %1950 = vst.msk [vmem:[#allocation4 + $0x10] sm:$0xff] %vm429, %v1934
      %1951 = vst.msk [vmem:[#allocation4 + $0x18] sm:$0xff] %vm429, %v1935
      %1952 = vst.msk [vmem:[#allocation4 + $0x20] sm:$0xff] %vm429, %v1936
      %1953 = vst.msk [vmem:[#allocation4 + $0x28] sm:$0xff] %vm429, %v1937
      %1954 = vst.msk [vmem:[#allocation4 + $0x30] sm:$0xff] %vm429, %v1938
      %1955 = vst.msk [vmem:[#allocation4 + $0x38] sm:$0xff] %vm429, %v1939
      %1956 = vst.msk [vmem:[#allocation4 + $0x40] sm:$0xff] %vm429, %v1940
      %1957 = vst.msk [vmem:[#allocation4 + $0x48] sm:$0xff] %vm429, %v1941
      %1958 = vst.msk [vmem:[#allocation4 + $0x50] sm:$0xff] %vm429, %v1942
      %1959 = vst.msk [vmem:[#allocation4 + $0x58] sm:$0xff] %vm429, %v1943
      %1960 = vst.msk [vmem:[#allocation4 + $0x60] sm:$0xff] %vm429, %v1944
      %1961 = vst.msk [vmem:[#allocation4 + $0x68] sm:$0xff] %vm429, %v1945
      %1962 = vst.msk [vmem:[#allocation4 + $0x70] sm:$0xff] %vm429, %v1946
      %1963 = vst.msk [vmem:[#allocation4 + $0x78] sm:$0xff] %vm429, %v1947
      %s1964 = scalar_lea.vmem [#allocation3], 48
      %v1965 = vld [vmem:[%s1964] sm:$0xff]
      %v1966 = vld [vmem:[%s1964 + $0x8] sm:$0xff]
      %v1967 = vld [vmem:[%s1964 + $0x18] sm:$0xff]
      %v1968 = vld [vmem:[%s1964 + $0x20] sm:$0xff]
      %v1969 = vld [vmem:[%s1964 + $0x30] sm:$0xff]
      %v1970 = vld [vmem:[%s1964 + $0x38] sm:$0xff]
      %v1971 = vld [vmem:[%s1964 + $0x48] sm:$0xff]
      %v1972 = vld [vmem:[%s1964 + $0x50] sm:$0xff]
      %v1973 = vld [vmem:[%s1964 + $0x60] sm:$0xff]
      %v1974 = vld [vmem:[%s1964 + $0x68] sm:$0xff]
      %v1975 = vld [vmem:[%s1964 + $0x78] sm:$0xff]
      %v1976 = vld [vmem:[%s1964 + $0x80] sm:$0xff]
      %v1977 = vld [vmem:[%s1964 + $0x90] sm:$0xff]
      %v1978 = vld [vmem:[%s1964 + $0x98] sm:$0xff]
      %v1979 = vld [vmem:[%s1964 + $0xa8] sm:$0xff]
      %v1980 = vld [vmem:[%s1964 + $0xb0] sm:$0xff]
      %v1981 = vld [vmem:[#allocation4] sm:$0xff]
      %v1982 = vld [vmem:[#allocation4 + $0x8] sm:$0xff]
      %v1983 = vld [vmem:[#allocation4 + $0x10] sm:$0xff]
      %v1984 = vld [vmem:[#allocation4 + $0x18] sm:$0xff]
      %v1985 = vld [vmem:[#allocation4 + $0x20] sm:$0xff]
      %v1986 = vld [vmem:[#allocation4 + $0x28] sm:$0xff]
      %v1987 = vld [vmem:[#allocation4 + $0x30] sm:$0xff]
      %v1988 = vld [vmem:[#allocation4 + $0x38] sm:$0xff]
      %v1989 = vld [vmem:[#allocation4 + $0x40] sm:$0xff]
      %v1990 = vld [vmem:[#allocation4 + $0x48] sm:$0xff]
      %v1991 = vld [vmem:[#allocation4 + $0x50] sm:$0xff]
      %v1992 = vld [vmem:[#allocation4 + $0x58] sm:$0xff]
      %v1993 = vld [vmem:[#allocation4 + $0x60] sm:$0xff]
      %v1994 = vld [vmem:[#allocation4 + $0x68] sm:$0xff]
      %v1995 = vld [vmem:[#allocation4 + $0x70] sm:$0xff]
      %v1996 = vld [vmem:[#allocation4 + $0x78] sm:$0xff]
      %v1997 = vpack.c.bf16 %v1966, %v1965
      %v1998 = vpack.c.bf16 %v1968, %v1967
      %v1999 = vpack.c.bf16 %v1970, %v1969
      %v2000 = vpack.c.bf16 %v1972, %v1971
      %v2001 = vpack.c.bf16 %v1974, %v1973
      %v2002 = vpack.c.bf16 %v1976, %v1975
      %v2003 = vpack.c.bf16 %v1978, %v1977
      %v2004 = vpack.c.bf16 %v1980, %v1979
      %s2005 = scalar_lea.vmem %s4, 12
      %v2006 = vld [vmem:[%s2005] sm:$0x3]
      %v2008 = vsel %vm429, %v1997, 0
      %v2011 = vsel %vm429, %v1998, 0
      %v2014 = vsel %vm429, %v1999, 0
      %v2017 = vsel %vm429, %v2000, 0
      %v2020 = vsel %vm429, %v2001, 0
      %v2023 = vsel %vm429, %v2002, 0
      %v2026 = vsel %vm429, %v2003, 0
      %v2029 = vsel %vm429, %v2004, 0
      %v2032 = vsel %vm841, %v2006, 0
      %2034 = vmatprep.subr.bf16.mxu0 0
      %2035 = vmatpush1.bf16.msra.mxu0 %v2032
      %2036 = vmatprep.subr.bf16.mxu0 0
      %2037 = vmatpush1.bf16.msra.mxu0 0
      %2038 = vmatprep.subr.bf16.mxu0 0
      %2039 = vmatpush1.bf16.msra.mxu0 0
      %2040 = vmatprep.subr.bf16.mxu0 0
      %2041 = vmatpush1.bf16.msra.mxu0 0
      %2042 = vmatprep.subr.bf16.mxu0 0
      %2043 = vmatpush1.bf16.msra.mxu0 0
      %2044 = vmatprep.subr.bf16.mxu0 0
      %2045 = vmatpush1.bf16.msra.mxu0 0
      %2046 = vmatprep.subr.bf16.mxu0 0
      %2047 = vmatpush1.bf16.msra.mxu0 0
      %2048 = vmatprep.subr.bf16.mxu0 0
      %2049 = vmatpush1.bf16.msra.mxu0 0
      %2050 = vmatprep.subr.bf16.mxu0 0
      %2051 = vmatpush1.bf16.msra.mxu0 0
      %2052 = vmatprep.subr.bf16.mxu0 0
      %2053 = vmatpush1.bf16.msra.mxu0 0
      %2054 = vmatprep.subr.bf16.mxu0 0
      %2055 = vmatpush1.bf16.msra.mxu0 0
      %2056 = vmatprep.subr.bf16.mxu0 0
      %2057 = vmatpush1.bf16.msra.mxu0 0
      %2058 = vmatprep.subr.bf16.mxu0 0
      %2059 = vmatpush1.bf16.msra.mxu0 0
      %2060 = vmatprep.subr.bf16.mxu0 0
      %2061 = vmatpush1.bf16.msra.mxu0 0
      %2062 = vmatprep.subr.bf16.mxu0 0
      %2063 = vmatpush1.bf16.msra.mxu0 0
      %2064 = vmatprep.subr.bf16.mxu0 0
      %2065 = vmatpush1.bf16.msra.mxu0 0
      %2066 = vmatprep.mubr.bf16.mxu0 0
      %2067 = vmatmul.mubr.bf16.gmra.mrb[0].mxu0 %v2008
      %v2068 = vpop.f32.mrb[0].mxu0
      %v2069 = vadd.f32 0.0, %v2068
      %v2070 = vpop.f32.mrb[0].mxu0
      %v2071 = vpop.f32.mrb[0].mxu0
      %v2072 = vadd.f32 0.0, %v2071
      %v2073 = vpop.f32.mrb[0].mxu0
      %2074 = vmatprep.mubr.bf16.mxu0 0
      %2075 = vmatmul.mubr.bf16.gmra.mrb[0].mxu0 %v2011
      %v2076 = vpop.f32.mrb[0].mxu0
      %v2077 = vadd.f32 0.0, %v2076
      %v2078 = vpop.f32.mrb[0].mxu0
      %v2079 = vpop.f32.mrb[0].mxu0
      %v2080 = vadd.f32 0.0, %v2079
      %v2081 = vpop.f32.mrb[0].mxu0
      %2082 = vmatprep.mubr.bf16.mxu0 0
      %2083 = vmatmul.mubr.bf16.gmra.mrb[0].mxu0 %v2014
      %v2084 = vpop.f32.mrb[0].mxu0
      %v2085 = vadd.f32 0.0, %v2084
      %v2086 = vpop.f32.mrb[0].mxu0
      %v2087 = vpop.f32.mrb[0].mxu0
      %v2088 = vadd.f32 0.0, %v2087
      %v2089 = vpop.f32.mrb[0].mxu0
      %2090 = vmatprep.mubr.bf16.mxu0 0
      %2091 = vmatmul.mubr.bf16.gmra.mrb[0].mxu0 %v2017
      %v2092 = vpop.f32.mrb[0].mxu0
      %v2093 = vadd.f32 0.0, %v2092
      %v2094 = vpop.f32.mrb[0].mxu0
      %v2095 = vpop.f32.mrb[0].mxu0
      %v2096 = vadd.f32 0.0, %v2095
      %v2097 = vpop.f32.mrb[0].mxu0
      %2098 = vmatprep.mubr.bf16.mxu0 0
      %2099 = vmatmul.mubr.bf16.gmra.mrb[0].mxu0 %v2020
      %v2100 = vpop.f32.mrb[0].mxu0
      %v2101 = vadd.f32 0.0, %v2100
      %v2102 = vpop.f32.mrb[0].mxu0
      %v2103 = vpop.f32.mrb[0].mxu0
      %v2104 = vadd.f32 0.0, %v2103
      %v2105 = vpop.f32.mrb[0].mxu0
      %2106 = vmatprep.mubr.bf16.mxu0 0
      %2107 = vmatmul.mubr.bf16.gmra.mrb[0].mxu0 %v2023
      %v2108 = vpop.f32.mrb[0].mxu0
      %v2109 = vadd.f32 0.0, %v2108
      %v2110 = vpop.f32.mrb[0].mxu0
      %v2111 = vpop.f32.mrb[0].mxu0
      %v2112 = vadd.f32 0.0, %v2111
      %v2113 = vpop.f32.mrb[0].mxu0
      %2114 = vmatprep.mubr.bf16.mxu0 0
      %2115 = vmatmul.mubr.bf16.gmra.mrb[0].mxu0 %v2026
      %v2116 = vpop.f32.mrb[0].mxu0
      %v2117 = vadd.f32 0.0, %v2116
      %v2118 = vpop.f32.mrb[0].mxu0
      %v2119 = vpop.f32.mrb[0].mxu0
      %v2120 = vadd.f32 0.0, %v2119
      %v2121 = vpop.f32.mrb[0].mxu0
      %2122 = vmatprep.mubr.bf16.mxu0 0
      %2123 = vmatmul.mubr.bf16.gmra.mrb[0].mxu0 %v2029
      %v2124 = vpop.f32.mrb[0].mxu0
      %v2125 = vadd.f32 0.0, %v2124
      %v2126 = vpop.f32.mrb[0].mxu0
      %v2127 = vpop.f32.mrb[0].mxu0
      %v2128 = vadd.f32 0.0, %v2127
      %v2129 = vpop.f32.mrb[0].mxu0
      %2130 = vdwg.mxu0
      %v2131 = vadd.f32 %v1981, %v2069
      %v2132 = vadd.f32 %v1982, %v2072
      %v2133 = vadd.f32 %v1983, %v2077
      %v2134 = vadd.f32 %v1984, %v2080
      %v2135 = vadd.f32 %v1985, %v2085
      %v2136 = vadd.f32 %v1986, %v2088
      %v2137 = vadd.f32 %v1987, %v2093
      %v2138 = vadd.f32 %v1988, %v2096
      %v2139 = vadd.f32 %v1989, %v2101
      %v2140 = vadd.f32 %v1990, %v2104
      %v2141 = vadd.f32 %v1991, %v2109
      %v2142 = vadd.f32 %v1992, %v2112
      %v2143 = vadd.f32 %v1993, %v2117
      %v2144 = vadd.f32 %v1994, %v2120
      %v2145 = vadd.f32 %v1995, %v2125
      %v2146 = vadd.f32 %v1996, %v2128
      %2147 = vst.msk [vmem:[#allocation4] sm:$0xff] %vm429, %v2131
      %2148 = vst.msk [vmem:[#allocation4 + $0x8] sm:$0xff] %vm429, %v2132
      %2149 = vst.msk [vmem:[#allocation4 + $0x10] sm:$0xff] %vm429, %v2133
      %2150 = vst.msk [vmem:[#allocation4 + $0x18] sm:$0xff] %vm429, %v2134
      %2151 = vst.msk [vmem:[#allocation4 + $0x20] sm:$0xff] %vm429, %v2135
      %2152 = vst.msk [vmem:[#allocation4 + $0x28] sm:$0xff] %vm429, %v2136
      %2153 = vst.msk [vmem:[#allocation4 + $0x30] sm:$0xff] %vm429, %v2137
      %2154 = vst.msk [vmem:[#allocation4 + $0x38] sm:$0xff] %vm429, %v2138
      %2155 = vst.msk [vmem:[#allocation4 + $0x40] sm:$0xff] %vm429, %v2139
      %2156 = vst.msk [vmem:[#allocation4 + $0x48] sm:$0xff] %vm429, %v2140
      %2157 = vst.msk [vmem:[#allocation4 + $0x50] sm:$0xff] %vm429, %v2141
      %2158 = vst.msk [vmem:[#allocation4 + $0x58] sm:$0xff] %vm429, %v2142
      %2159 = vst.msk [vmem:[#allocation4 + $0x60] sm:$0xff] %vm429, %v2143
      %2160 = vst.msk [vmem:[#allocation4 + $0x68] sm:$0xff] %vm429, %v2144
      %2161 = vst.msk [vmem:[#allocation4 + $0x70] sm:$0xff] %vm429, %v2145
      %2162 = vst.msk [vmem:[#allocation4 + $0x78] sm:$0xff] %vm429, %v2146
      %v2163 = vld [vmem:[%s1964 + $0x1] sm:$0xff]
      %v2164 = vld [vmem:[%s1964 + $0x9] sm:$0xff]
      %v2165 = vld [vmem:[%s1964 + $0x19] sm:$0xff]
      %v2166 = vld [vmem:[%s1964 + $0x21] sm:$0xff]
      %v2167 = vld [vmem:[%s1964 + $0x31] sm:$0xff]
      %v2168 = vld [vmem:[%s1964 + $0x39] sm:$0xff]
      %v2169 = vld [vmem:[%s1964 + $0x49] sm:$0xff]
      %v2170 = vld [vmem:[%s1964 + $0x51] sm:$0xff]
      %v2171 = vld [vmem:[%s1964 + $0x61] sm:$0xff]
      %v2172 = vld [vmem:[%s1964 + $0x69] sm:$0xff]
      %v2173 = vld [vmem:[%s1964 + $0x79] sm:$0xff]
      %v2174 = vld [vmem:[%s1964 + $0x81] sm:$0xff]
      %v2175 = vld [vmem:[%s1964 + $0x91] sm:$0xff]
      %v2176 = vld [vmem:[%s1964 + $0x99] sm:$0xff]
      %v2177 = vld [vmem:[%s1964 + $0xa9] sm:$0xff]
      %v2178 = vld [vmem:[%s1964 + $0xb1] sm:$0xff]
      %v2179 = vld [vmem:[#allocation4] sm:$0xff]
      %v2180 = vld [vmem:[#allocation4 + $0x8] sm:$0xff]
      %v2181 = vld [vmem:[#allocation4 + $0x10] sm:$0xff]
      %v2182 = vld [vmem:[#allocation4 + $0x18] sm:$0xff]
      %v2183 = vld [vmem:[#allocation4 + $0x20] sm:$0xff]
      %v2184 = vld [vmem:[#allocation4 + $0x28] sm:$0xff]
      %v2185 = vld [vmem:[#allocation4 + $0x30] sm:$0xff]
      %v2186 = vld [vmem:[#allocation4 + $0x38] sm:$0xff]
      %v2187 = vld [vmem:[#allocation4 + $0x40] sm:$0xff]
      %v2188 = vld [vmem:[#allocation4 + $0x48] sm:$0xff]
      %v2189 = vld [vmem:[#allocation4 + $0x50] sm:$0xff]
      %v2190 = vld [vmem:[#allocation4 + $0x58] sm:$0xff]
      %v2191 = vld [vmem:[#allocation4 + $0x60] sm:$0xff]
      %v2192 = vld [vmem:[#allocation4 + $0x68] sm:$0xff]
      %v2193 = vld [vmem:[#allocation4 + $0x70] sm:$0xff]
      %v2194 = vld [vmem:[#allocation4 + $0x78] sm:$0xff]
      %v2195 = vpack.c.bf16 %v2164, %v2163
      %v2196 = vpack.c.bf16 %v2166, %v2165
      %v2197 = vpack.c.bf16 %v2168, %v2167
      %v2198 = vpack.c.bf16 %v2170, %v2169
      %v2199 = vpack.c.bf16 %v2172, %v2171
      %v2200 = vpack.c.bf16 %v2174, %v2173
      %v2201 = vpack.c.bf16 %v2176, %v2175
      %v2202 = vpack.c.bf16 %v2178, %v2177
      %s2203 = scalar_lea.vmem %s4, 14
      %v2204 = vld [vmem:[%s2203] sm:$0x3]
      %v2206 = vsel %vm429, %v2195, 0
      %v2209 = vsel %vm429, %v2196, 0
      %v2212 = vsel %vm429, %v2197, 0
      %v2215 = vsel %vm429, %v2198, 0
      %v2218 = vsel %vm429, %v2199, 0
      %v2221 = vsel %vm429, %v2200, 0
      %v2224 = vsel %vm429, %v2201, 0
      %v2227 = vsel %vm429, %v2202, 0
      %v2230 = vsel %vm841, %v2204, 0
      %2232 = vmatprep.subr.bf16.mxu0 0
      %2233 = vmatpush1.bf16.msra.mxu0 %v2230
      %2234 = vmatprep.subr.bf16.mxu0 0
      %2235 = vmatpush1.bf16.msra.mxu0 0
      %2236 = vmatprep.subr.bf16.mxu0 0
      %2237 = vmatpush1.bf16.msra.mxu0 0
      %2238 = vmatprep.subr.bf16.mxu0 0
      %2239 = vmatpush1.bf16.msra.mxu0 0
      %2240 = vmatprep.subr.bf16.mxu0 0
      %2241 = vmatpush1.bf16.msra.mxu0 0
      %2242 = vmatprep.subr.bf16.mxu0 0
      %2243 = vmatpush1.bf16.msra.mxu0 0
      %2244 = vmatprep.subr.bf16.mxu0 0
      %2245 = vmatpush1.bf16.msra.mxu0 0
      %2246 = vmatprep.subr.bf16.mxu0 0
      %2247 = vmatpush1.bf16.msra.mxu0 0
      %2248 = vmatprep.subr.bf16.mxu0 0
      %2249 = vmatpush1.bf16.msra.mxu0 0
      %2250 = vmatprep.subr.bf16.mxu0 0
      %2251 = vmatpush1.bf16.msra.mxu0 0
      %2252 = vmatprep.subr.bf16.mxu0 0
      %2253 = vmatpush1.bf16.msra.mxu0 0
      %2254 = vmatprep.subr.bf16.mxu0 0
      %2255 = vmatpush1.bf16.msra.mxu0 0
      %2256 = vmatprep.subr.bf16.mxu0 0
      %2257 = vmatpush1.bf16.msra.mxu0 0
      %2258 = vmatprep.subr.bf16.mxu0 0
      %2259 = vmatpush1.bf16.msra.mxu0 0
      %2260 = vmatprep.subr.bf16.mxu0 0
      %2261 = vmatpush1.bf16.msra.mxu0 0
      %2262 = vmatprep.subr.bf16.mxu0 0
      %2263 = vmatpush1.bf16.msra.mxu0 0
      %2264 = vmatprep.mubr.bf16.mxu0 0
      %2265 = vmatmul.mubr.bf16.gmra.mrb[0].mxu0 %v2206
      %v2266 = vpop.f32.mrb[0].mxu0
      %v2267 = vadd.f32 0.0, %v2266
      %v2268 = vpop.f32.mrb[0].mxu0
      %v2269 = vpop.f32.mrb[0].mxu0
      %v2270 = vadd.f32 0.0, %v2269
      %v2271 = vpop.f32.mrb[0].mxu0
      %2272 = vmatprep.mubr.bf16.mxu0 0
      %2273 = vmatmul.mubr.bf16.gmra.mrb[0].mxu0 %v2209
      %v2274 = vpop.f32.mrb[0].mxu0
      %v2275 = vadd.f32 0.0, %v2274
      %v2276 = vpop.f32.mrb[0].mxu0
      %v2277 = vpop.f32.mrb[0].mxu0
      %v2278 = vadd.f32 0.0, %v2277
      %v2279 = vpop.f32.mrb[0].mxu0
      %2280 = vmatprep.mubr.bf16.mxu0 0
      %2281 = vmatmul.mubr.bf16.gmra.mrb[0].mxu0 %v2212
      %v2282 = vpop.f32.mrb[0].mxu0
      %v2283 = vadd.f32 0.0, %v2282
      %v2284 = vpop.f32.mrb[0].mxu0
      %v2285 = vpop.f32.mrb[0].mxu0
      %v2286 = vadd.f32 0.0, %v2285
      %v2287 = vpop.f32.mrb[0].mxu0
      %2288 = vmatprep.mubr.bf16.mxu0 0
      %2289 = vmatmul.mubr.bf16.gmra.mrb[0].mxu0 %v2215
      %v2290 = vpop.f32.mrb[0].mxu0
      %v2291 = vadd.f32 0.0, %v2290
      %v2292 = vpop.f32.mrb[0].mxu0
      %v2293 = vpop.f32.mrb[0].mxu0
      %v2294 = vadd.f32 0.0, %v2293
      %v2295 = vpop.f32.mrb[0].mxu0
      %2296 = vmatprep.mubr.bf16.mxu0 0
      %2297 = vmatmul.mubr.bf16.gmra.mrb[0].mxu0 %v2218
      %v2298 = vpop.f32.mrb[0].mxu0
      %v2299 = vadd.f32 0.0, %v2298
      %v2300 = vpop.f32.mrb[0].mxu0
      %v2301 = vpop.f32.mrb[0].mxu0
      %v2302 = vadd.f32 0.0, %v2301
      %v2303 = vpop.f32.mrb[0].mxu0
      %2304 = vmatprep.mubr.bf16.mxu0 0
      %2305 = vmatmul.mubr.bf16.gmra.mrb[0].mxu0 %v2221
      %v2306 = vpop.f32.mrb[0].mxu0
      %v2307 = vadd.f32 0.0, %v2306
      %v2308 = vpop.f32.mrb[0].mxu0
      %v2309 = vpop.f32.mrb[0].mxu0
      %v2310 = vadd.f32 0.0, %v2309
      %v2311 = vpop.f32.mrb[0].mxu0
      %2312 = vmatprep.mubr.bf16.mxu0 0
      %2313 = vmatmul.mubr.bf16.gmra.mrb[0].mxu0 %v2224
      %v2314 = vpop.f32.mrb[0].mxu0
      %v2315 = vadd.f32 0.0, %v2314
      %v2316 = vpop.f32.mrb[0].mxu0
      %v2317 = vpop.f32.mrb[0].mxu0
      %v2318 = vadd.f32 0.0, %v2317
      %v2319 = vpop.f32.mrb[0].mxu0
      %2320 = vmatprep.mubr.bf16.mxu0 0
      %2321 = vmatmul.mubr.bf16.gmra.mrb[0].mxu0 %v2227
      %v2322 = vpop.f32.mrb[0].mxu0
      %v2323 = vadd.f32 0.0, %v2322
      %v2324 = vpop.f32.mrb[0].mxu0
      %v2325 = vpop.f32.mrb[0].mxu0
      %v2326 = vadd.f32 0.0, %v2325
      %v2327 = vpop.f32.mrb[0].mxu0
      %2328 = vdwg.mxu0
      %v2329 = vadd.f32 %v2179, %v2267
      %v2330 = vadd.f32 %v2180, %v2270
      %v2331 = vadd.f32 %v2181, %v2275
      %v2332 = vadd.f32 %v2182, %v2278
      %v2333 = vadd.f32 %v2183, %v2283
      %v2334 = vadd.f32 %v2184, %v2286
      %v2335 = vadd.f32 %v2185, %v2291
      %v2336 = vadd.f32 %v2186, %v2294
      %v2337 = vadd.f32 %v2187, %v2299
      %v2338 = vadd.f32 %v2188, %v2302
      %v2339 = vadd.f32 %v2189, %v2307
      %v2340 = vadd.f32 %v2190, %v2310
      %v2341 = vadd.f32 %v2191, %v2315
      %v2342 = vadd.f32 %v2192, %v2318
      %v2343 = vadd.f32 %v2193, %v2323
      %v2344 = vadd.f32 %v2194, %v2326
      %2345 = vst.msk [vmem:[#allocation4] sm:$0xff] %vm429, %v2329
      %2346 = vst.msk [vmem:[#allocation4 + $0x8] sm:$0xff] %vm429, %v2330
      %2347 = vst.msk [vmem:[#allocation4 + $0x10] sm:$0xff] %vm429, %v2331
      %2348 = vst.msk [vmem:[#allocation4 + $0x18] sm:$0xff] %vm429, %v2332
      %2349 = vst.msk [vmem:[#allocation4 + $0x20] sm:$0xff] %vm429, %v2333
      %2350 = vst.msk [vmem:[#allocation4 + $0x28] sm:$0xff] %vm429, %v2334
      %2351 = vst.msk [vmem:[#allocation4 + $0x30] sm:$0xff] %vm429, %v2335
      %2352 = vst.msk [vmem:[#allocation4 + $0x38] sm:$0xff] %vm429, %v2336
      %2353 = vst.msk [vmem:[#allocation4 + $0x40] sm:$0xff] %vm429, %v2337
      %2354 = vst.msk [vmem:[#allocation4 + $0x48] sm:$0xff] %vm429, %v2338
      %2355 = vst.msk [vmem:[#allocation4 + $0x50] sm:$0xff] %vm429, %v2339
      %2356 = vst.msk [vmem:[#allocation4 + $0x58] sm:$0xff] %vm429, %v2340
      %2357 = vst.msk [vmem:[#allocation4 + $0x60] sm:$0xff] %vm429, %v2341
      %2358 = vst.msk [vmem:[#allocation4 + $0x68] sm:$0xff] %vm429, %v2342
      %2359 = vst.msk [vmem:[#allocation4 + $0x70] sm:$0xff] %vm429, %v2343
      %2360 = vst.msk [vmem:[#allocation4 + $0x78] sm:$0xff] %vm429, %v2344
      %v2361 = vld [vmem:[%s1964 + $0x2] sm:$0xff]
      %v2362 = vld [vmem:[%s1964 + $0xa] sm:$0xff]
      %v2363 = vld [vmem:[%s1964 + $0x1a] sm:$0xff]
      %v2364 = vld [vmem:[%s1964 + $0x22] sm:$0xff]
      %v2365 = vld [vmem:[%s1964 + $0x32] sm:$0xff]
      %v2366 = vld [vmem:[%s1964 + $0x3a] sm:$0xff]
      %v2367 = vld [vmem:[%s1964 + $0x4a] sm:$0xff]
      %v2368 = vld [vmem:[%s1964 + $0x52] sm:$0xff]
      %v2369 = vld [vmem:[%s1964 + $0x62] sm:$0xff]
      %v2370 = vld [vmem:[%s1964 + $0x6a] sm:$0xff]
      %v2371 = vld [vmem:[%s1964 + $0x7a] sm:$0xff]
      %v2372 = vld [vmem:[%s1964 + $0x82] sm:$0xff]
      %v2373 = vld [vmem:[%s1964 + $0x92] sm:$0xff]
      %v2374 = vld [vmem:[%s1964 + $0x9a] sm:$0xff]
      %v2375 = vld [vmem:[%s1964 + $0xaa] sm:$0xff]
      %v2376 = vld [vmem:[%s1964 + $0xb2] sm:$0xff]
      %v2377 = vld [vmem:[#allocation4] sm:$0xff]
      %v2378 = vld [vmem:[#allocation4 + $0x8] sm:$0xff]
      %v2379 = vld [vmem:[#allocation4 + $0x10] sm:$0xff]
      %v2380 = vld [vmem:[#allocation4 + $0x18] sm:$0xff]
      %v2381 = vld [vmem:[#allocation4 + $0x20] sm:$0xff]
      %v2382 = vld [vmem:[#allocation4 + $0x28] sm:$0xff]
      %v2383 = vld [vmem:[#allocation4 + $0x30] sm:$0xff]
      %v2384 = vld [vmem:[#allocation4 + $0x38] sm:$0xff]
      %v2385 = vld [vmem:[#allocation4 + $0x40] sm:$0xff]
      %v2386 = vld [vmem:[#allocation4 + $0x48] sm:$0xff]
      %v2387 = vld [vmem:[#allocation4 + $0x50] sm:$0xff]
      %v2388 = vld [vmem:[#allocation4 + $0x58] sm:$0xff]
      %v2389 = vld [vmem:[#allocation4 + $0x60] sm:$0xff]
      %v2390 = vld [vmem:[#allocation4 + $0x68] sm:$0xff]
      %v2391 = vld [vmem:[#allocation4 + $0x70] sm:$0xff]
      %v2392 = vld [vmem:[#allocation4 + $0x78] sm:$0xff]
      %v2393 = vpack.c.bf16 %v2362, %v2361
      %v2394 = vpack.c.bf16 %v2364, %v2363
      %v2395 = vpack.c.bf16 %v2366, %v2365
      %v2396 = vpack.c.bf16 %v2368, %v2367
      %v2397 = vpack.c.bf16 %v2370, %v2369
      %v2398 = vpack.c.bf16 %v2372, %v2371
      %v2399 = vpack.c.bf16 %v2374, %v2373
      %v2400 = vpack.c.bf16 %v2376, %v2375
      %s2401 = scalar_lea.vmem %s4, 16
      %v2402 = vld [vmem:[%s2401] sm:$0x3]
      %v2404 = vsel %vm429, %v2393, 0
      %v2407 = vsel %vm429, %v2394, 0
      %v2410 = vsel %vm429, %v2395, 0
      %v2413 = vsel %vm429, %v2396, 0
      %v2416 = vsel %vm429, %v2397, 0
      %v2419 = vsel %vm429, %v2398, 0
      %v2422 = vsel %vm429, %v2399, 0
      %v2425 = vsel %vm429, %v2400, 0
      %v2428 = vsel %vm841, %v2402, 0
      %2430 = vmatprep.subr.bf16.mxu0 0
      %2431 = vmatpush1.bf16.msra.mxu0 %v2428
      %2432 = vmatprep.subr.bf16.mxu0 0
      %2433 = vmatpush1.bf16.msra.mxu0 0
      %2434 = vmatprep.subr.bf16.mxu0 0
      %2435 = vmatpush1.bf16.msra.mxu0 0
      %2436 = vmatprep.subr.bf16.mxu0 0
      %2437 = vmatpush1.bf16.msra.mxu0 0
      %2438 = vmatprep.subr.bf16.mxu0 0
      %2439 = vmatpush1.bf16.msra.mxu0 0
      %2440 = vmatprep.subr.bf16.mxu0 0
      %2441 = vmatpush1.bf16.msra.mxu0 0
      %2442 = vmatprep.subr.bf16.mxu0 0
      %2443 = vmatpush1.bf16.msra.mxu0 0
      %2444 = vmatprep.subr.bf16.mxu0 0
      %2445 = vmatpush1.bf16.msra.mxu0 0
      %2446 = vmatprep.subr.bf16.mxu0 0
      %2447 = vmatpush1.bf16.msra.mxu0 0
      %2448 = vmatprep.subr.bf16.mxu0 0
      %2449 = vmatpush1.bf16.msra.mxu0 0
      %2450 = vmatprep.subr.bf16.mxu0 0
      %2451 = vmatpush1.bf16.msra.mxu0 0
      %2452 = vmatprep.subr.bf16.mxu0 0
      %2453 = vmatpush1.bf16.msra.mxu0 0
      %2454 = vmatprep.subr.bf16.mxu0 0
      %2455 = vmatpush1.bf16.msra.mxu0 0
      %2456 = vmatprep.subr.bf16.mxu0 0
      %2457 = vmatpush1.bf16.msra.mxu0 0
      %2458 = vmatprep.subr.bf16.mxu0 0
      %2459 = vmatpush1.bf16.msra.mxu0 0
      %2460 = vmatprep.subr.bf16.mxu0 0
      %2461 = vmatpush1.bf16.msra.mxu0 0
      %2462 = vmatprep.mubr.bf16.mxu0 0
      %2463 = vmatmul.mubr.bf16.gmra.mrb[0].mxu0 %v2404
      %v2464 = vpop.f32.mrb[0].mxu0
      %v2465 = vadd.f32 0.0, %v2464
      %v2466 = vpop.f32.mrb[0].mxu0
      %v2467 = vpop.f32.mrb[0].mxu0
      %v2468 = vadd.f32 0.0, %v2467
      %v2469 = vpop.f32.mrb[0].mxu0
      %2470 = vmatprep.mubr.bf16.mxu0 0
      %2471 = vmatmul.mubr.bf16.gmra.mrb[0].mxu0 %v2407
      %v2472 = vpop.f32.mrb[0].mxu0
      %v2473 = vadd.f32 0.0, %v2472
      %v2474 = vpop.f32.mrb[0].mxu0
      %v2475 = vpop.f32.mrb[0].mxu0
      %v2476 = vadd.f32 0.0, %v2475
      %v2477 = vpop.f32.mrb[0].mxu0
      %2478 = vmatprep.mubr.bf16.mxu0 0
      %2479 = vmatmul.mubr.bf16.gmra.mrb[0].mxu0 %v2410
      %v2480 = vpop.f32.mrb[0].mxu0
      %v2481 = vadd.f32 0.0, %v2480
      %v2482 = vpop.f32.mrb[0].mxu0
      %v2483 = vpop.f32.mrb[0].mxu0
      %v2484 = vadd.f32 0.0, %v2483
      %v2485 = vpop.f32.mrb[0].mxu0
      %2486 = vmatprep.mubr.bf16.mxu0 0
      %2487 = vmatmul.mubr.bf16.gmra.mrb[0].mxu0 %v2413
      %v2488 = vpop.f32.mrb[0].mxu0
      %v2489 = vadd.f32 0.0, %v2488
      %v2490 = vpop.f32.mrb[0].mxu0
      %v2491 = vpop.f32.mrb[0].mxu0
      %v2492 = vadd.f32 0.0, %v2491
      %v2493 = vpop.f32.mrb[0].mxu0
      %2494 = vmatprep.mubr.bf16.mxu0 0
      %2495 = vmatmul.mubr.bf16.gmra.mrb[0].mxu0 %v2416
      %v2496 = vpop.f32.mrb[0].mxu0
      %v2497 = vadd.f32 0.0, %v2496
      %v2498 = vpop.f32.mrb[0].mxu0
      %v2499 = vpop.f32.mrb[0].mxu0
      %v2500 = vadd.f32 0.0, %v2499
      %v2501 = vpop.f32.mrb[0].mxu0
      %2502 = vmatprep.mubr.bf16.mxu0 0
      %2503 = vmatmul.mubr.bf16.gmra.mrb[0].mxu0 %v2419
      %v2504 = vpop.f32.mrb[0].mxu0
      %v2505 = vadd.f32 0.0, %v2504
      %v2506 = vpop.f32.mrb[0].mxu0
      %v2507 = vpop.f32.mrb[0].mxu0
      %v2508 = vadd.f32 0.0, %v2507
      %v2509 = vpop.f32.mrb[0].mxu0
      %2510 = vmatprep.mubr.bf16.mxu0 0
      %2511 = vmatmul.mubr.bf16.gmra.mrb[0].mxu0 %v2422
      %v2512 = vpop.f32.mrb[0].mxu0
      %v2513 = vadd.f32 0.0, %v2512
      %v2514 = vpop.f32.mrb[0].mxu0
      %v2515 = vpop.f32.mrb[0].mxu0
      %v2516 = vadd.f32 0.0, %v2515
      %v2517 = vpop.f32.mrb[0].mxu0
      %2518 = vmatprep.mubr.bf16.mxu0 0
      %2519 = vmatmul.mubr.bf16.gmra.mrb[0].mxu0 %v2425
      %v2520 = vpop.f32.mrb[0].mxu0
      %v2521 = vadd.f32 0.0, %v2520
      %v2522 = vpop.f32.mrb[0].mxu0
      %v2523 = vpop.f32.mrb[0].mxu0
      %v2524 = vadd.f32 0.0, %v2523
      %v2525 = vpop.f32.mrb[0].mxu0
      %2526 = vdwg.mxu0
      %v2527 = vadd.f32 %v2377, %v2465
      %v2528 = vadd.f32 %v2378, %v2468
      %v2529 = vadd.f32 %v2379, %v2473
      %v2530 = vadd.f32 %v2380, %v2476
      %v2531 = vadd.f32 %v2381, %v2481
      %v2532 = vadd.f32 %v2382, %v2484
      %v2533 = vadd.f32 %v2383, %v2489
      %v2534 = vadd.f32 %v2384, %v2492
      %v2535 = vadd.f32 %v2385, %v2497
      %v2536 = vadd.f32 %v2386, %v2500
      %v2537 = vadd.f32 %v2387, %v2505
      %v2538 = vadd.f32 %v2388, %v2508
      %v2539 = vadd.f32 %v2389, %v2513
      %v2540 = vadd.f32 %v2390, %v2516
      %v2541 = vadd.f32 %v2391, %v2521
      %v2542 = vadd.f32 %v2392, %v2524
      %2543 = vst.msk [vmem:[#allocation4] sm:$0xff] %vm429, %v2527
      %2544 = vst.msk [vmem:[#allocation4 + $0x8] sm:$0xff] %vm429, %v2528
      %2545 = vst.msk [vmem:[#allocation4 + $0x10] sm:$0xff] %vm429, %v2529
      %2546 = vst.msk [vmem:[#allocation4 + $0x18] sm:$0xff] %vm429, %v2530
      %2547 = vst.msk [vmem:[#allocation4 + $0x20] sm:$0xff] %vm429, %v2531
      %2548 = vst.msk [vmem:[#allocation4 + $0x28] sm:$0xff] %vm429, %v2532
      %2549 = vst.msk [vmem:[#allocation4 + $0x30] sm:$0xff] %vm429, %v2533
      %2550 = vst.msk [vmem:[#allocation4 + $0x38] sm:$0xff] %vm429, %v2534
      %2551 = vst.msk [vmem:[#allocation4 + $0x40] sm:$0xff] %vm429, %v2535
      %2552 = vst.msk [vmem:[#allocation4 + $0x48] sm:$0xff] %vm429, %v2536
      %2553 = vst.msk [vmem:[#allocation4 + $0x50] sm:$0xff] %vm429, %v2537
      %2554 = vst.msk [vmem:[#allocation4 + $0x58] sm:$0xff] %vm429, %v2538
      %2555 = vst.msk [vmem:[#allocation4 + $0x60] sm:$0xff] %vm429, %v2539
      %2556 = vst.msk [vmem:[#allocation4 + $0x68] sm:$0xff] %vm429, %v2540
      %2557 = vst.msk [vmem:[#allocation4 + $0x70] sm:$0xff] %vm429, %v2541
      %2558 = vst.msk [vmem:[#allocation4 + $0x78] sm:$0xff] %vm429, %v2542
      %v2559 = vld [vmem:[#allocation4] sm:$0xff]
      %v2560 = vld [vmem:[#allocation4 + $0x8] sm:$0xff]
      %v2561 = vld [vmem:[#allocation4 + $0x10] sm:$0xff]
      %v2562 = vld [vmem:[#allocation4 + $0x18] sm:$0xff]
      %v2563 = vld [vmem:[#allocation4 + $0x20] sm:$0xff]
      %v2564 = vld [vmem:[#allocation4 + $0x28] sm:$0xff]
      %v2565 = vld [vmem:[#allocation4 + $0x30] sm:$0xff]
      %v2566 = vld [vmem:[#allocation4 + $0x38] sm:$0xff]
      %v2567 = vld [vmem:[#allocation4 + $0x40] sm:$0xff]
      %v2568 = vld [vmem:[#allocation4 + $0x48] sm:$0xff]
      %v2569 = vld [vmem:[#allocation4 + $0x50] sm:$0xff]
      %v2570 = vld [vmem:[#allocation4 + $0x58] sm:$0xff]
      %v2571 = vld [vmem:[#allocation4 + $0x60] sm:$0xff]
      %v2572 = vld [vmem:[#allocation4 + $0x68] sm:$0xff]
      %v2573 = vld [vmem:[#allocation4 + $0x70] sm:$0xff]
      %v2574 = vld [vmem:[#allocation4 + $0x78] sm:$0xff]
      %v2575 = vld [vmem:[%s5] sm:$0x1]
      %v2577 = vlaneseq
      %v2578 = vshrl.u32 %v2577, 7
      %v2579 = vsub.s32 0, %v2578
      %v2580 = vrot.slane %v2575, %v2579
      %v2582 = vadd.f32 %v2559, %v2580
      %v2583 = vadd.f32 %v2560, %v2580
      %v2584 = vadd.f32 %v2561, %v2580
      %v2585 = vadd.f32 %v2562, %v2580
      %v2586 = vadd.f32 %v2563, %v2580
      %v2587 = vadd.f32 %v2564, %v2580
      %v2588 = vadd.f32 %v2565, %v2580
      %v2589 = vadd.f32 %v2566, %v2580
      %v2590 = vadd.f32 %v2567, %v2580
      %v2591 = vadd.f32 %v2568, %v2580
      %v2592 = vadd.f32 %v2569, %v2580
      %v2593 = vadd.f32 %v2570, %v2580
      %v2594 = vadd.f32 %v2571, %v2580
      %v2595 = vadd.f32 %v2572, %v2580
      %v2596 = vadd.f32 %v2573, %v2580
      %v2597 = vadd.f32 %v2574, %v2580
      %v2598 = vmax.f32 %v2582, 0.0
      %v2599 = vmax.f32 %v2583, 0.0
      %v2600 = vmax.f32 %v2584, 0.0
      %v2601 = vmax.f32 %v2585, 0.0
      %v2602 = vmax.f32 %v2586, 0.0
      %v2603 = vmax.f32 %v2587, 0.0
      %v2604 = vmax.f32 %v2588, 0.0
      %v2605 = vmax.f32 %v2589, 0.0
      %v2606 = vmax.f32 %v2590, 0.0
      %v2607 = vmax.f32 %v2591, 0.0
      %v2608 = vmax.f32 %v2592, 0.0
      %v2609 = vmax.f32 %v2593, 0.0
      %v2610 = vmax.f32 %v2594, 0.0
      %v2611 = vmax.f32 %v2595, 0.0
      %v2612 = vmax.f32 %v2596, 0.0
      %v2613 = vmax.f32 %v2597, 0.0
      %v2614 = vpack.c.bf16 %v2599, %v2598
      %v2615 = vpack.c.bf16 %v2601, %v2600
      %v2616 = vpack.c.bf16 %v2603, %v2602
      %v2617 = vpack.c.bf16 %v2605, %v2604
      %v2618 = vpack.c.bf16 %v2607, %v2606
      %v2619 = vpack.c.bf16 %v2609, %v2608
      %v2620 = vpack.c.bf16 %v2611, %v2610
      %v2621 = vpack.c.bf16 %v2613, %v2612
      %v2622 = vld [vmem:[%s6] sm:$0x3]
      %v2623 = vld [vmem:[%s7] sm:$0x1]
      %v2625 = vlaneseq
      %v2626 = vshrl.u32 %v2625, 7
      %v2627 = vsub.s32 0, %v2626
      %v2628 = vrot.slane %v2623, %v2627
      %v2631 = vsel %vm429, %v2614, 0
      %v2634 = vsel %vm429, %v2615, 0
      %v2637 = vsel %vm429, %v2616, 0
      %v2640 = vsel %vm429, %v2617, 0
      %v2643 = vsel %vm429, %v2618, 0
      %v2646 = vsel %vm429, %v2619, 0
      %v2649 = vsel %vm429, %v2620, 0
      %v2652 = vsel %vm429, %v2621, 0
      %v2655 = vsel %vm841, %v2622, 0
      %2657 = vmatprep.subr.bf16.mxu0 0
      %2658 = vmatpush1.bf16.msra.mxu0 %v2655
      %2659 = vmatprep.subr.bf16.mxu0 0
      %2660 = vmatpush1.bf16.msra.mxu0 0
      %2661 = vmatprep.subr.bf16.mxu0 0
      %2662 = vmatpush1.bf16.msra.mxu0 0
      %2663 = vmatprep.subr.bf16.mxu0 0
      %2664 = vmatpush1.bf16.msra.mxu0 0
      %2665 = vmatprep.subr.bf16.mxu0 0
      %2666 = vmatpush1.bf16.msra.mxu0 0
      %2667 = vmatprep.subr.bf16.mxu0 0
      %2668 = vmatpush1.bf16.msra.mxu0 0
      %2669 = vmatprep.subr.bf16.mxu0 0
      %2670 = vmatpush1.bf16.msra.mxu0 0
      %2671 = vmatprep.subr.bf16.mxu0 0
      %2672 = vmatpush1.bf16.msra.mxu0 0
      %2673 = vmatprep.subr.bf16.mxu0 0
      %2674 = vmatpush1.bf16.msra.mxu0 0
      %2675 = vmatprep.subr.bf16.mxu0 0
      %2676 = vmatpush1.bf16.msra.mxu0 0
      %2677 = vmatprep.subr.bf16.mxu0 0
      %2678 = vmatpush1.bf16.msra.mxu0 0
      %2679 = vmatprep.subr.bf16.mxu0 0
      %2680 = vmatpush1.bf16.msra.mxu0 0
      %2681 = vmatprep.subr.bf16.mxu0 0
      %2682 = vmatpush1.bf16.msra.mxu0 0
      %2683 = vmatprep.subr.bf16.mxu0 0
      %2684 = vmatpush1.bf16.msra.mxu0 0
      %2685 = vmatprep.subr.bf16.mxu0 0
      %2686 = vmatpush1.bf16.msra.mxu0 0
      %2687 = vmatprep.subr.bf16.mxu0 0
      %2688 = vmatpush1.bf16.msra.mxu0 0
      %2689 = vmatprep.mubr.bf16.mxu0 0
      %2690 = vmatmul.mubr.bf16.gmra.mrb[0].mxu0 %v2631
      %v2691 = vpop.f32.mrb[0].mxu0
      %v2692 = vadd.f32 %v2628, %v2691
      %v2693 = vpop.f32.mrb[0].mxu0
      %v2694 = vpop.f32.mrb[0].mxu0
      %v2695 = vadd.f32 %v2628, %v2694
      %v2696 = vpop.f32.mrb[0].mxu0
      %2697 = vmatprep.mubr.bf16.mxu0 0
      %2698 = vmatmul.mubr.bf16.gmra.mrb[0].mxu0 %v2634
      %v2699 = vpop.f32.mrb[0].mxu0
      %v2700 = vadd.f32 %v2628, %v2699
      %v2701 = vpop.f32.mrb[0].mxu0
      %v2702 = vpop.f32.mrb[0].mxu0
      %v2703 = vadd.f32 %v2628, %v2702
      %v2704 = vpop.f32.mrb[0].mxu0
      %2705 = vmatprep.mubr.bf16.mxu0 0
      %2706 = vmatmul.mubr.bf16.gmra.mrb[0].mxu0 %v2637
      %v2707 = vpop.f32.mrb[0].mxu0
      %v2708 = vadd.f32 %v2628, %v2707
      %v2709 = vpop.f32.mrb[0].mxu0
      %v2710 = vpop.f32.mrb[0].mxu0
      %v2711 = vadd.f32 %v2628, %v2710
      %v2712 = vpop.f32.mrb[0].mxu0
      %2713 = vmatprep.mubr.bf16.mxu0 0
      %2714 = vmatmul.mubr.bf16.gmra.mrb[0].mxu0 %v2640
      %v2715 = vpop.f32.mrb[0].mxu0
      %v2716 = vadd.f32 %v2628, %v2715
      %v2717 = vpop.f32.mrb[0].mxu0
      %v2718 = vpop.f32.mrb[0].mxu0
      %v2719 = vadd.f32 %v2628, %v2718
      %v2720 = vpop.f32.mrb[0].mxu0
      %2721 = vmatprep.mubr.bf16.mxu0 0
      %2722 = vmatmul.mubr.bf16.gmra.mrb[0].mxu0 %v2643
      %v2723 = vpop.f32.mrb[0].mxu0
      %v2724 = vadd.f32 %v2628, %v2723
      %v2725 = vpop.f32.mrb[0].mxu0
      %v2726 = vpop.f32.mrb[0].mxu0
      %v2727 = vadd.f32 %v2628, %v2726
      %v2728 = vpop.f32.mrb[0].mxu0
      %2729 = vmatprep.mubr.bf16.mxu0 0
      %2730 = vmatmul.mubr.bf16.gmra.mrb[0].mxu0 %v2646
      %v2731 = vpop.f32.mrb[0].mxu0
      %v2732 = vadd.f32 %v2628, %v2731
      %v2733 = vpop.f32.mrb[0].mxu0
      %v2734 = vpop.f32.mrb[0].mxu0
      %v2735 = vadd.f32 %v2628, %v2734
      %v2736 = vpop.f32.mrb[0].mxu0
      %2737 = vmatprep.mubr.bf16.mxu0 0
      %2738 = vmatmul.mubr.bf16.gmra.mrb[0].mxu0 %v2649
      %v2739 = vpop.f32.mrb[0].mxu0
      %v2740 = vadd.f32 %v2628, %v2739
      %v2741 = vpop.f32.mrb[0].mxu0
      %v2742 = vpop.f32.mrb[0].mxu0
      %v2743 = vadd.f32 %v2628, %v2742
      %v2744 = vpop.f32.mrb[0].mxu0
      %2745 = vmatprep.mubr.bf16.mxu0 0
      %2746 = vmatmul.mubr.bf16.gmra.mrb[0].mxu0 %v2652
      %v2747 = vpop.f32.mrb[0].mxu0
      %v2748 = vadd.f32 %v2628, %v2747
      %v2749 = vpop.f32.mrb[0].mxu0
      %v2750 = vpop.f32.mrb[0].mxu0
      %v2751 = vadd.f32 %v2628, %v2750
      %v2752 = vpop.f32.mrb[0].mxu0
      %2753 = vdwg.mxu0
      %v2754 = vadd.f32 %v2692, %v461
      %v2755 = vadd.f32 %v2695, %v462
      %v2756 = vadd.f32 %v2700, %v463
      %v2757 = vadd.f32 %v2703, %v464
      %v2758 = vadd.f32 %v2708, %v465
      %v2759 = vadd.f32 %v2711, %v466
      %v2760 = vadd.f32 %v2716, %v467
      %v2761 = vadd.f32 %v2719, %v468
      %v2762 = vadd.f32 %v2724, %v469
      %v2763 = vadd.f32 %v2727, %v470
      %v2764 = vadd.f32 %v2732, %v471
      %v2765 = vadd.f32 %v2735, %v472
      %v2766 = vadd.f32 %v2740, %v473
      %v2767 = vadd.f32 %v2743, %v474
      %v2768 = vadd.f32 %v2748, %v475
      %v2769 = vadd.f32 %v2751, %v476
      %v2770 = vmax.f32 %v2754, 0.0
      %v2771 = vmax.f32 %v2755, 0.0
      %v2772 = vmax.f32 %v2756, 0.0
      %v2773 = vmax.f32 %v2757, 0.0
      %v2774 = vmax.f32 %v2758, 0.0
      %v2775 = vmax.f32 %v2759, 0.0
      %v2776 = vmax.f32 %v2760, 0.0
      %v2777 = vmax.f32 %v2761, 0.0
      %v2778 = vmax.f32 %v2762, 0.0
      %v2779 = vmax.f32 %v2763, 0.0
      %v2780 = vmax.f32 %v2764, 0.0
      %v2781 = vmax.f32 %v2765, 0.0
      %v2782 = vmax.f32 %v2766, 0.0
      %v2783 = vmax.f32 %v2767, 0.0
      %v2784 = vmax.f32 %v2768, 0.0
      %v2785 = vmax.f32 %v2769, 0.0
      %2786 = vst.msk [vmem:[%s322] sm:$0xff] %vm500, %v2770
      %2787 = vst.msk [vmem:[%s322 + $0x8] sm:$0xff] %vm500, %v2771
      %2788 = vst.msk [vmem:[%s322 + $0x10] sm:$0xff] %vm500, %v2772
      %2789 = vst.msk [vmem:[%s322 + $0x18] sm:$0xff] %vm500, %v2773
      %2790 = vst.msk [vmem:[%s322 + $0x20] sm:$0xff] %vm500, %v2774
      %2791 = vst.msk [vmem:[%s322 + $0x28] sm:$0xff] %vm500, %v2775
      %2792 = vst.msk [vmem:[%s322 + $0x30] sm:$0xff] %vm500, %v2776
      %2793 = vst.msk [vmem:[%s322 + $0x38] sm:$0xff] %vm500, %v2777
      %2794 = vst.msk [vmem:[%s322 + $0x40] sm:$0xff] %vm500, %v2778
      %2795 = vst.msk [vmem:[%s322 + $0x48] sm:$0xff] %vm500, %v2779
      %2796 = vst.msk [vmem:[%s322 + $0x50] sm:$0xff] %vm500, %v2780
      %2797 = vst.msk [vmem:[%s322 + $0x58] sm:$0xff] %vm500, %v2781
      %2798 = vst.msk [vmem:[%s322 + $0x60] sm:$0xff] %vm500, %v2782
      %2799 = vst.msk [vmem:[%s322 + $0x68] sm:$0xff] %vm500, %v2783
      %2800 = vst.msk [vmem:[%s322 + $0x70] sm:$0xff] %vm500, %v2784
      %2801 = vst.msk [vmem:[%s322 + $0x78] sm:$0xff] %vm500, %v2785
      %s2802 = smul.u32 8, %s24
      %p2803 = scmp.lt.s32.totalorder %s23, 1
      %s2804 = scalar_select %p2803, %s23, 1
      %p2805 = scmp.lt.s32.totalorder %s2802, 15
      %s2806 = scalar_select %p2805, %s2802, 15
      %s2807 = smul.addr %s2806, 2
      %s2808 = smul.addr %s2804, 32
      %s2809 = sadd.s32 %s2807, %s2808
      %s2810 = smul.addr %s2809, 8
      %s2811 = scalar_lea.vmem %s8, %s2810
      // Predicated region
      $region125: #{bottleneck_forward.1} parent=47 // pred_check
        %p2812 = pneg %p205
      $region126: #{bottleneck_forward.1} parent=47 // pred_check_branch
        %2814 = sbr.rel (%p2812) target = $region128
      $region127: #{bottleneck_forward.1} parent=47 // pred_region
        %s2815 = smul.u32 8, %s24
      $region128: #{bottleneck_forward.1} parent=47 // pred_fallthru
        _
    $region48: #{bottleneck_forward.1} parent=5 // pred_fallthru
      _
    %p2816 = scmp.le.s32.totalorder 2, %s14
    // Predicated region
    $region129: #{bottleneck_forward.1} parent=5 // pred_check
      %p2817 = pneg %p2816
    $region130: #{bottleneck_forward.1} parent=5 // pred_check_branch
      %2819 = sbr.rel (%p2817) target = $region132
    $region131: #{bottleneck_forward.1} parent=5 // pred_region
      %s2820 = ssub.s32 %s14, 2
      // Predicated region
      $region133: #{bottleneck_forward.1} parent=131 // pred_check
        %p2821 = pneg %p211
      $region134: #{bottleneck_forward.1} parent=131 // pred_check_branch
        %2823 = sbr.rel (%p2821) target = $region136
      $region135: #{bottleneck_forward.1} parent=131 // pred_region
        %s2824 = smul.u32 8, %s26
        %p2825 = scmp.lt.s32.totalorder %s25, 1
        %s2826 = scalar_select %p2825, %s25, 1
        %p2827 = scmp.lt.s32.totalorder %s2824, 15
        %s2828 = scalar_select %p2827, %s2824, 15
        %s2829 = smul.addr %s2828, 2
        %s2830 = smul.addr %s2826, 32
        %s2831 = sadd.s32 %s2829, %s2830
        %s2832 = smul.addr %s2831, 8
        %s2833 = scalar_lea.vmem %s8, %s2832
      $region136: #{bottleneck_forward.1} parent=131 // pred_fallthru
        _
    $region132: #{bottleneck_forward.1} parent=5 // pred_fallthru
      _
  $region6: #{bottleneck_forward.1} parent=0 // loop_footer
    %s18 = sadd.s32 1, %s14
  $region7: #{bottleneck_forward.1} parent=0 // loop_footer_branch
    %13 = sbr.rel target = $region3
  $region8: #{bottleneck_forward.1} parent=0 // loop_exit
    _
  %2834 = vsyncmov [#allocation5]
  %s2835 = vpop.sfrf %2834
  %p2836 = scmp.eq.s32.totalorder %s2835, 0
  %p2837 = pneg %p2836
  %2839 = shalt.err (%p2837)
  %s2840 = scalar_lea.sflag [#allocation5], 1
  %2841 = vsyncmov %s2840
  %s2842 = vpop.sfrf %2841
  %p2843 = scmp.eq.s32.totalorder %s2842, 0
  %p2844 = pneg %p2843
  %2846 = shalt.err (%p2844)

</llo_original>
